<compile_context>
chip_gen: v7x
topology: tpu7x:2x2x1
jax: 0.10.0
libtpu: 0.0.40
codegen_flags: <defaults>
</compile_context>

<pallas_src>
import functools

import jax
import jax.numpy as jnp
from jax.experimental import pallas as pl
from jax.experimental.pallas import tpu as pltpu

D_IN, D_H1, D_H2, D_OUT = 208, 1024, 512, 208
D_IN_PAD, D_OUT_PAD = 256, 256      # lane-dense (multiple of 128) feature dims
MAX_TB = 512                        # upper bound on the batch tile


def _mlp_kernel(x_ref, w1_ref, b1_ref, w2_ref, b2_ref, w3_ref, b3_ref, o_ref):
    # x tile [TB, 256] bf16; weights bf16; biases f32; output f32 (lane-dense).
    x = x_ref[...]
    h1 = jnp.dot(x, w1_ref[...], preferred_element_type=jnp.float32) + b1_ref[...]
    h1 = jnp.tanh(h1).astype(jnp.bfloat16)          # EUP tanh in f32, back to bf16
    h2 = jnp.dot(h1, w2_ref[...], preferred_element_type=jnp.float32) + b2_ref[...]
    h2 = jnp.tanh(h2).astype(jnp.bfloat16)
    o_ref[...] = (
        jnp.dot(h2, w3_ref[...], preferred_element_type=jnp.float32) + b3_ref[...]
    )


def _pick_batch_tile(batch: int, max_tile: int = MAX_TB) -> int:
    """Largest power-of-two tile <= max_tile; prefer >= 2 grid steps (v7x megacore)."""
    tb = min(max_tile, max(8, pl.next_power_of_2(batch)))
    if batch > 8 and pl.cdiv(batch, tb) < 2:
        tb = max(8, tb // 2)
    return tb


def prepare_params(params_f32):
    """Pad feature dims to 256 and cast weights to bf16 (biases stay f32)."""
    w1, b1, w2, b2, w3, b3 = params_f32
    w1p = jnp.zeros((D_IN_PAD, D_H1), jnp.float32).at[:D_IN, :].set(w1)
    w3p = jnp.zeros((D_H2, D_OUT_PAD), jnp.float32).at[:, :D_OUT].set(w3)
    b3p = jnp.zeros((1, D_OUT_PAD), jnp.float32).at[:, :D_OUT].set(b3)
    return (
        w1p.astype(jnp.bfloat16), b1,
        w2.astype(jnp.bfloat16), b2,
        w3p.astype(jnp.bfloat16), b3p,
    )


@functools.partial(jax.jit, static_argnames=("batch_tile",))
def _forward_padded(xp, kparams, *, batch_tile):
    w1, b1, w2, b2, w3, b3 = kparams
    bp = xp.shape[0]
    grid = (bp // batch_tile,)

    # Constant index_map => block is DMA'd once and stays resident in VMEM.
    resident = lambda shape: pl.BlockSpec(shape, lambda i: (0, 0))

    return pl.pallas_call(
        _mlp_kernel,
        out_shape=jax.ShapeDtypeStruct((bp, D_OUT_PAD), jnp.float32),
        grid_spec=pltpu.PrefetchScalarGridSpec(
            num_scalar_prefetch=0,
            grid=grid,
            in_specs=[
                pl.BlockSpec((batch_tile, D_IN_PAD), lambda i: (i, 0)),  # x tile
                resident((D_IN_PAD, D_H1)),   # W1 (bf16)
                resident((1, D_H1)),          # b1 (f32)
                resident((D_H1, D_H2)),       # W2 (bf16)
                resident((1, D_H2)),          # b2 (f32)
                resident((D_H2, D_OUT_PAD)),  # W3 (bf16)
                resident((1, D_OUT_PAD)),     # b3 (f32)
            ],
            out_specs=pl.BlockSpec((batch_tile, D_OUT_PAD), lambda i: (i, 0)),
        ),
        compiler_params=pltpu.CompilerParams(
            dimension_semantics=("parallel",),   # batch axis -> megacore on v7x
        ),
    )(xp, w1, b1, w2, b2, w3, b3)


def dnn_da3_forward(x, kernel_params, *, max_tile=MAX_TB):
    """x: [B, 208] float -> [B, 208] float32. kernel_params from prepare_params()."""
    B = x.shape[0]
    tb = _pick_batch_tile(B, max_tile)
    bp = pl.cdiv(B, tb) * tb
    # Pad batch to a tile multiple and features to 256; cast activations to bf16.
    xp = jnp.pad(x.astype(jnp.bfloat16), ((0, bp - B), (0, D_IN_PAD - D_IN)))
    out = _forward_padded(xp, kernel_params, batch_tile=tb)
    return out[:B, :D_OUT]


def init_params(key):
    """Deterministic init matching nn.Linear shapes (weights stored [in, out])."""
    ks = jax.random.split(key, 6)

    def linear(kw, kb, fan_in, fan_out):
        bound = 1.0 / jnp.sqrt(fan_in)
        w = jax.random.uniform(kw, (fan_in, fan_out), jnp.float32, -bound, bound)
        b = jax.random.uniform(kb, (1, fan_out), jnp.float32, -bound, bound)
        return w, b

    w1, b1 = linear(ks[0], ks[1], D_IN, D_H1)
    w2, b2 = linear(ks[2], ks[3], D_H1, D_H2)
    w3, b3 = linear(ks[4], ks[5], D_H2, D_OUT)
    return (w1, b1, w2, b2, w3, b3)


def reference_forward_f32(x, params):
    w1, b1, w2, b2, w3, b3 = params
    h1 = jnp.tanh(x @ w1 + b1)
    h2 = jnp.tanh(h1 @ w2 + b2)
    return h2 @ w3 + b3


def reference_forward_bf16(x, params):
    """Same mixed precision as the kernel: bf16 operands, f32 accumulation."""
    w1, b1, w2, b2, w3, b3 = params
    bf = jnp.bfloat16
    h1 = jnp.tanh(jnp.dot(x.astype(bf), w1.astype(bf),
                          preferred_element_type=jnp.float32) + b1)
    h2 = jnp.tanh(jnp.dot(h1.astype(bf), w2.astype(bf),
                          preferred_element_type=jnp.float32) + b2)
    return jnp.dot(h2.astype(bf), w3.astype(bf),
                   preferred_element_type=jnp.float32) + b3


if __name__ == "__main__":
    key = jax.random.PRNGKey(0)
    kx, kp = jax.random.split(key)

    B = 20  # deliberately NOT a power of two / tile multiple: exercises padding
    x = jax.random.normal(kx, (B, D_IN), dtype=jnp.float32)
    params = init_params(kp)
    kernel_params = prepare_params(params)

    out = dnn_da3_forward(x, kernel_params)
    out = jax.block_until_ready(out)
    assert out.shape == (B, D_OUT)
    assert out.dtype == jnp.float32

    # Tight check vs a reference using the same (bf16 in, f32 acc) precision.
    ref_bf16 = reference_forward_bf16(x, params)
    assert jnp.allclose(out, ref_bf16, atol=2e-3, rtol=2e-3), "mismatch vs bf16 reference"

    # Loose check vs the full-fp32 PyTorch-equivalent forward.
    ref_f32 = reference_forward_f32(x, params)
    assert jnp.allclose(out, ref_f32, atol=5e-2, rtol=5e-2), "mismatch vs fp32 reference"

    print("KERNEL_OK")
</pallas_src>

<mosaic_0001>
module attributes {stable_mosaic.version = 11 : i64} {
  func.func @_mlp_kernel(%arg0: i32, %arg1: memref<16x256xbf16, #tpu.memory_space<vmem>>, %arg2: memref<256x1024xbf16, #tpu.memory_space<vmem>>, %arg3: memref<1x1024xf32, #tpu.memory_space<vmem>>, %arg4: memref<1024x512xbf16, #tpu.memory_space<vmem>>, %arg5: memref<1x512xf32, #tpu.memory_space<vmem>>, %arg6: memref<512x256xbf16, #tpu.memory_space<vmem>>, %arg7: memref<1x256xf32, #tpu.memory_space<vmem>>, %arg8: memref<16x256xf32, #tpu.memory_space<vmem>>) attributes {dimension_semantics = [#tpu.dimension_semantics<parallel>], iteration_bounds = array<i64: 2>, scalar_prefetch = 0 : i64, scratch_operands = 0 : i64, tpu.core_type = #tpu.core_type<tc>, window_params = [{transform_indices = @transform_0, window_bounds = array<i64: 16, 256>}, {pipeline_mode = #tpu.pipeline_mode<synchronous>, transform_indices = @transform_1, window_bounds = array<i64: 256, 1024>}, {pipeline_mode = #tpu.pipeline_mode<synchronous>, transform_indices = @transform_2, window_bounds = array<i64: 1, 1024>}, {pipeline_mode = #tpu.pipeline_mode<synchronous>, transform_indices = @transform_3, window_bounds = array<i64: 1024, 512>}, {pipeline_mode = #tpu.pipeline_mode<synchronous>, transform_indices = @transform_4, window_bounds = array<i64: 1, 512>}, {pipeline_mode = #tpu.pipeline_mode<synchronous>, transform_indices = @transform_5, window_bounds = array<i64: 512, 256>}, {pipeline_mode = #tpu.pipeline_mode<synchronous>, transform_indices = @transform_6, window_bounds = array<i64: 1, 256>}, {transform_indices = @transform_7, window_bounds = array<i64: 16, 256>}]} {
    %c0 = arith.constant 0 : index
    %c0_0 = arith.constant 0 : index
    %0 = vector.load %arg1[%c0, %c0_0] : memref<16x256xbf16, #tpu.memory_space<vmem>>, vector<16x256xbf16>
    %c0_1 = arith.constant 0 : index
    %c0_2 = arith.constant 0 : index
    %1 = vector.load %arg2[%c0_1, %c0_2] : memref<256x1024xbf16, #tpu.memory_space<vmem>>, vector<256x1024xbf16>
    %cst = arith.constant dense<0.000000e+00> : vector<16x1024xf32>
    %2 = tpu.matmul %0, %1, %cst {dimension_numbers = #tpu.dot_dimension_numbers<[1], [0], [0], [1], [0, 0, 1, 1], [], []>} : vector<16x256xbf16>, vector<256x1024xbf16>, vector<16x1024xf32> -> vector<16x1024xf32>
    %c0_3 = arith.constant 0 : index
    %c0_4 = arith.constant 0 : index
    %3 = vector.load %arg3[%c0_3, %c0_4] : memref<1x1024xf32, #tpu.memory_space<vmem>>, vector<1x1024xf32>
    %4 = vector.broadcast %3 : vector<1x1024xf32> to vector<16x1024xf32>
    %5 = arith.addf %2, %4 : vector<16x1024xf32>
    %6 = math.tanh %5 : vector<16x1024xf32>
    %7 = arith.truncf %6 : vector<16x1024xf32> to vector<16x1024xbf16>
    %c0_5 = arith.constant 0 : index
    %c0_6 = arith.constant 0 : index
    %8 = vector.load %arg4[%c0_5, %c0_6] : memref<1024x512xbf16, #tpu.memory_space<vmem>>, vector<1024x512xbf16>
    %cst_7 = arith.constant dense<0.000000e+00> : vector<16x512xf32>
    %9 = tpu.matmul %7, %8, %cst_7 {dimension_numbers = #tpu.dot_dimension_numbers<[1], [0], [0], [1], [0, 0, 1, 1], [], []>} : vector<16x1024xbf16>, vector<1024x512xbf16>, vector<16x512xf32> -> vector<16x512xf32>
    %c0_8 = arith.constant 0 : index
    %c0_9 = arith.constant 0 : index
    %10 = vector.load %arg5[%c0_8, %c0_9] : memref<1x512xf32, #tpu.memory_space<vmem>>, vector<1x512xf32>
    %11 = vector.broadcast %10 : vector<1x512xf32> to vector<16x512xf32>
    %12 = arith.addf %9, %11 : vector<16x512xf32>
    %13 = math.tanh %12 : vector<16x512xf32>
    %14 = arith.truncf %13 : vector<16x512xf32> to vector<16x512xbf16>
    %c0_10 = arith.constant 0 : index
    %c0_11 = arith.constant 0 : index
    %15 = vector.load %arg6[%c0_10, %c0_11] : memref<512x256xbf16, #tpu.memory_space<vmem>>, vector<512x256xbf16>
    %cst_12 = arith.constant dense<0.000000e+00> : vector<16x256xf32>
    %16 = tpu.matmul %14, %15, %cst_12 {dimension_numbers = #tpu.dot_dimension_numbers<[1], [0], [0], [1], [0, 0, 1, 1], [], []>} : vector<16x512xbf16>, vector<512x256xbf16>, vector<16x256xf32> -> vector<16x256xf32>
    %c0_13 = arith.constant 0 : index
    %c0_14 = arith.constant 0 : index
    %17 = vector.load %arg7[%c0_13, %c0_14] : memref<1x256xf32, #tpu.memory_space<vmem>>, vector<1x256xf32>
    %18 = vector.broadcast %17 : vector<1x256xf32> to vector<16x256xf32>
    %19 = arith.addf %16, %18 : vector<16x256xf32>
    %c0_15 = arith.constant 0 : index
    %c0_16 = arith.constant 0 : index
    %20 = vector.load %arg8[%c0_15, %c0_16] : memref<16x256xf32, #tpu.memory_space<vmem>>, vector<16x256xf32>
    tpu.vector_store %arg8[%c0_15, %c0_16], %19 {strides = array<i32>} : memref<16x256xf32, #tpu.memory_space<vmem>>, vector<16x256xf32>,
    return
  }
  func.func @transform_0(%arg0: i32) -> (i32, i32) {
    %c0_i32 = arith.constant 0 : i32
    %c0_i32_0 = arith.constant 0 : i32
    return %arg0, %c0_i32 : i32, i32
  }
  func.func @transform_1(%arg0: i32) -> (i32, i32) {
    %c0_i32 = arith.constant 0 : i32
    %c0_i32_0 = arith.constant 0 : i32
    %c0_i32_1 = arith.constant 0 : i32
    return %c0_i32, %c0_i32_0 : i32, i32
  }
  func.func @transform_2(%arg0: i32) -> (i32, i32) {
    %c0_i32 = arith.constant 0 : i32
    %c0_i32_0 = arith.constant 0 : i32
    %c0_i32_1 = arith.constant 0 : i32
    return %c0_i32, %c0_i32_0 : i32, i32
  }
  func.func @transform_3(%arg0: i32) -> (i32, i32) {
    %c0_i32 = arith.constant 0 : i32
    %c0_i32_0 = arith.constant 0 : i32
    %c0_i32_1 = arith.constant 0 : i32
    return %c0_i32, %c0_i32_0 : i32, i32
  }
  func.func @transform_4(%arg0: i32) -> (i32, i32) {
    %c0_i32 = arith.constant 0 : i32
    %c0_i32_0 = arith.constant 0 : i32
    %c0_i32_1 = arith.constant 0 : i32
    return %c0_i32, %c0_i32_0 : i32, i32
  }
  func.func @transform_5(%arg0: i32) -> (i32, i32) {
    %c0_i32 = arith.constant 0 : i32
    %c0_i32_0 = arith.constant 0 : i32
    %c0_i32_1 = arith.constant 0 : i32
    return %c0_i32, %c0_i32_0 : i32, i32
  }
  func.func @transform_6(%arg0: i32) -> (i32, i32) {
    %c0_i32 = arith.constant 0 : i32
    %c0_i32_0 = arith.constant 0 : i32
    %c0_i32_1 = arith.constant 0 : i32
    return %c0_i32, %c0_i32_0 : i32, i32
  }
  func.func @transform_7(%arg0: i32) -> (i32, i32) {
    %c0_i32 = arith.constant 0 : i32
    %c0_i32_0 = arith.constant 0 : i32
    return %arg0, %c0_i32 : i32, i32
  }
}

</mosaic_0001>

<llo_original>
// kernel: _forward_padded.1
$region0: #{_forward_padded.1}
  #allocation0 [shape = 'u32[]', space=smem, size = 0x4, offset = 0x4, fixed_abs, tag = 'smem constant byte address 0x4 - core index']
  #allocation1 [shape = 'u32[144,128]{1,0:T(1,128)}', space=vmem, size = 0x12000, scoped, tag = 'internal scratch']
  %s0 = inlined_call_operand.hbm [shape: bf16[32,256], index: 0, kind: input, shape index: {}]
  %s1 = inlined_call_operand.hbm [shape: bf16[256,1024], index: 1, kind: input, shape index: {}]
  %s2 = inlined_call_operand.hbm [shape: f32[1,1024], index: 2, kind: input, shape index: {}]
  %s3 = inlined_call_operand.hbm [shape: bf16[1024,512], index: 3, kind: input, shape index: {}]
  %s4 = inlined_call_operand.vmem [shape: f32[1,512], index: 4, kind: input, shape index: {}]
  %s5 = inlined_call_operand.hbm [shape: bf16[512,256], index: 5, kind: input, shape index: {}]
  %s6 = inlined_call_operand.vmem [shape: f32[1,256], index: 6, kind: input, shape index: {}]
  %s7 = inlined_call_operand.hbm [shape: f32[32,256], index: 7, kind: output, shape index: {}]
  %s8 = sld [smem:[#allocation0]]
  $region81: #{_forward_padded.1} parent=0
    _
  %s10 = ssub.s32 1, %s8
  %s11 = scalar_select 0, %s10, %s8
  $region1: #{_forward_padded.1} parent=0
    #allocation2 [shape = 'u8[16384]{0}', space=vmem, size = 0x4000, scoped, tag = 'input window, operand 0']
    #allocation3 [shape = 's32[2]{0}', space=sflag, size = 0x8, scoped, tag = 'scoped memory for _forward_padded.1']
    #allocation4 [shape = 's32[2]{0}', space=sflag, size = 0x8, scoped, tag = 'scoped memory for _forward_padded.1']
    #allocation5 [shape = 'u8[524288]{0}', space=vmem, size = 0x80000, scoped, tag = 'input window, operand 1, single buffered']
    #allocation6 [shape = 's32[1]{0}', space=sflag, size = 0x4, scoped, tag = 'scoped memory for _forward_padded.1']
    #allocation7 [shape = 'u8[4096]{0}', space=vmem, size = 0x1000, scoped, tag = 'input window, operand 2, single buffered']
    #allocation8 [shape = 'u8[1048576]{0}', space=vmem, size = 0x100000, scoped, tag = 'input window, operand 3, single buffered']
    #allocation9 [shape = 's32[1]{0}', space=sflag, size = 0x4, scoped, tag = 'scoped memory for _forward_padded.1']
    #allocation10 [shape = 'u8[262144]{0}', space=vmem, size = 0x40000, scoped, tag = 'input window, operand 5, single buffered']
    #allocation11 [shape = 'u8[32768]{0}', space=vmem, size = 0x8000, scoped, tag = 'output window, operand 0']
    %12 = vsyncpa [#allocation3], 0
    %s13 = scalar_lea.sflag [#allocation3], 1
    %14 = vsyncpa %s13, 0
    %15 = vsyncpa [#allocation6], 0
    %16 = vsyncpa [#allocation9], 0
    %17 = vsyncpa [#allocation4], 0
    %s18 = scalar_lea.sflag [#allocation4], 1
    %19 = vsyncpa %s18, 0
    loop: start=0, step=1, limit=4
    $region2: #{_forward_padded.1} parent=1 // loop_pre_header
      _
    $region3: #{_forward_padded.1} parent=1 // loop_header
      %s21 = sphi 0, %s25
      %p22 = scmp.ge.s32.totalorder %s21, 4
      %s31 = sphi 0, %s33
      %s34 = sphi 0, %s31
      %s35 = sphi 0, %s34
      %s51 = sphi 0, %s35
      %s55 = sphi 0, %s55
      %s57 = sphi 0, %s55
      %s58 = sphi 0, %s57
      %s72 = sphi 0, %s58
      %s76 = sphi 0, %s76
      %s78 = sphi 0, %s76
      %s79 = sphi 0, %s78
      %s93 = sphi 0, %s79
      %s97 = sphi 0, %s97
      %s99 = sphi 0, %s97
      %s100 = sphi 0, %s99
      %s114 = sphi 0, %s100
      %s118 = sphi 0, %s118
      %s120 = sphi 0, %s118
      %s121 = sphi 0, %s120
      %s135 = sphi 0, %s121
      %s139 = sphi 0, %s139
      %s141 = sphi 0, %s139
      %s142 = sphi 0, %s141
      %s156 = sphi 0, %s142
      %s160 = sphi 0, %s160
      %s162 = sphi 0, %s160
      %s163 = sphi 0, %s162
      %s177 = sphi 0, %s163
      %s183 = sphi 0, %s185
      %s186 = sphi 0, %s183
      %s187 = sphi 0, %s186
      %s203 = sphi 0, %s187
    $region4: #{_forward_padded.1} parent=1 // loop_header_branch
      %24 = sbr.rel (%p22) target = $region8
    $region5: #{_forward_padded.1} parent=1 // loop_body
      %s26 = ssub.s32 %s21, 1
      %s27 = ssub.s32 %s21, 2
      %s28 = sadd.s32 %s21, 1
      %s29 = ssub.s32 %s21, %s28
      %p30 = scmp.eq.s32.totalorder %s29, 0
      %s32 = sadd.s32 %s31, 1
      %s33 = scalar_select %p30, %s31, %s32
      %p36 = pneg %p30
      %p37 = scmp.eq.s32.totalorder %s21, 1
      %p38 = por %p36, %p37
      %p39 = scmp.ne.s32.totalorder %s31, %s34
      %p40 = scmp.eq.s32.totalorder %s21, 0
      %p41 = por %p39, %p40
      %p42 = scmp.ne.s32.totalorder %s31, %s34
      %p43 = scmp.eq.s32.totalorder %s26, 1
      %p44 = por %p42, %p43
      %p45 = scmp.ne.s32.totalorder %s34, %s35
      %p46 = scmp.eq.s32.totalorder %s26, 0
      %p47 = por %p45, %p46
      %p48 = scmp.ne.s32.totalorder %s34, %s35
      %p49 = scmp.eq.s32.totalorder %s27, 1
      %p50 = por %p48, %p49
      %p52 = scmp.ne.s32.totalorder %s35, %s51
      %p53 = scmp.eq.s32.totalorder %s27, 0
      %p54 = por %p52, %p53
      %s56 = sadd.s32 %s55, 1
      %p59 = scmp.eq.s32.totalorder %s21, 1
      %p60 = scmp.ne.s32.totalorder %s55, %s57
      %p61 = scmp.eq.s32.totalorder %s21, 0
      %p62 = por %p60, %p61
      %p63 = scmp.ne.s32.totalorder %s55, %s57
      %p64 = scmp.eq.s32.totalorder %s26, 1
      %p65 = por %p63, %p64
      %p66 = scmp.ne.s32.totalorder %s57, %s58
      %p67 = scmp.eq.s32.totalorder %s26, 0
      %p68 = por %p66, %p67
      %p69 = scmp.ne.s32.totalorder %s57, %s58
      %p70 = scmp.eq.s32.totalorder %s27, 1
      %p71 = por %p69, %p70
      %p73 = scmp.ne.s32.totalorder %s58, %s72
      %p74 = scmp.eq.s32.totalorder %s27, 0
      %p75 = por %p73, %p74
      %s77 = sadd.s32 %s76, 1
      %p80 = scmp.eq.s32.totalorder %s21, 1
      %p81 = scmp.ne.s32.totalorder %s76, %s78
      %p82 = scmp.eq.s32.totalorder %s21, 0
      %p83 = por %p81, %p82
      %p84 = scmp.ne.s32.totalorder %s76, %s78
      %p85 = scmp.eq.s32.totalorder %s26, 1
      %p86 = por %p84, %p85
      %p87 = scmp.ne.s32.totalorder %s78, %s79
      %p88 = scmp.eq.s32.totalorder %s26, 0
      %p89 = por %p87, %p88
      %p90 = scmp.ne.s32.totalorder %s78, %s79
      %p91 = scmp.eq.s32.totalorder %s27, 1
      %p92 = por %p90, %p91
      %p94 = scmp.ne.s32.totalorder %s79, %s93
      %p95 = scmp.eq.s32.totalorder %s27, 0
      %p96 = por %p94, %p95
      %s98 = sadd.s32 %s97, 1
      %p101 = scmp.eq.s32.totalorder %s21, 1
      %p102 = scmp.ne.s32.totalorder %s97, %s99
      %p103 = scmp.eq.s32.totalorder %s21, 0
      %p104 = por %p102, %p103
      %p105 = scmp.ne.s32.totalorder %s97, %s99
      %p106 = scmp.eq.s32.totalorder %s26, 1
      %p107 = por %p105, %p106
      %p108 = scmp.ne.s32.totalorder %s99, %s100
      %p109 = scmp.eq.s32.totalorder %s26, 0
      %p110 = por %p108, %p109
      %p111 = scmp.ne.s32.totalorder %s99, %s100
      %p112 = scmp.eq.s32.totalorder %s27, 1
      %p113 = por %p111, %p112
      %p115 = scmp.ne.s32.totalorder %s100, %s114
      %p116 = scmp.eq.s32.totalorder %s27, 0
      %p117 = por %p115, %p116
      %s119 = sadd.s32 %s118, 1
      %p122 = scmp.eq.s32.totalorder %s21, 1
      %p123 = scmp.ne.s32.totalorder %s118, %s120
      %p124 = scmp.eq.s32.totalorder %s21, 0
      %p125 = por %p123, %p124
      %p126 = scmp.ne.s32.totalorder %s118, %s120
      %p127 = scmp.eq.s32.totalorder %s26, 1
      %p128 = por %p126, %p127
      %p129 = scmp.ne.s32.totalorder %s120, %s121
      %p130 = scmp.eq.s32.totalorder %s26, 0
      %p131 = por %p129, %p130
      %p132 = scmp.ne.s32.totalorder %s120, %s121
      %p133 = scmp.eq.s32.totalorder %s27, 1
      %p134 = por %p132, %p133
      %p136 = scmp.ne.s32.totalorder %s121, %s135
      %p137 = scmp.eq.s32.totalorder %s27, 0
      %p138 = por %p136, %p137
      %s140 = sadd.s32 %s139, 1
      %p143 = scmp.eq.s32.totalorder %s21, 1
      %p144 = scmp.ne.s32.totalorder %s139, %s141
      %p145 = scmp.eq.s32.totalorder %s21, 0
      %p146 = por %p144, %p145
      %p147 = scmp.ne.s32.totalorder %s139, %s141
      %p148 = scmp.eq.s32.totalorder %s26, 1
      %p149 = por %p147, %p148
      %p150 = scmp.ne.s32.totalorder %s141, %s142
      %p151 = scmp.eq.s32.totalorder %s26, 0
      %p152 = por %p150, %p151
      %p153 = scmp.ne.s32.totalorder %s141, %s142
      %p154 = scmp.eq.s32.totalorder %s27, 1
      %p155 = por %p153, %p154
      %p157 = scmp.ne.s32.totalorder %s142, %s156
      %p158 = scmp.eq.s32.totalorder %s27, 0
      %p159 = por %p157, %p158
      %s161 = sadd.s32 %s160, 1
      %p164 = scmp.eq.s32.totalorder %s21, 1
      %p165 = scmp.ne.s32.totalorder %s160, %s162
      %p166 = scmp.eq.s32.totalorder %s21, 0
      %p167 = por %p165, %p166
      %p168 = scmp.ne.s32.totalorder %s160, %s162
      %p169 = scmp.eq.s32.totalorder %s26, 1
      %p170 = por %p168, %p169
      %p171 = scmp.ne.s32.totalorder %s162, %s163
      %p172 = scmp.eq.s32.totalorder %s26, 0
      %p173 = por %p171, %p172
      %p174 = scmp.ne.s32.totalorder %s162, %s163
      %p175 = scmp.eq.s32.totalorder %s27, 1
      %p176 = por %p174, %p175
      %p178 = scmp.ne.s32.totalorder %s163, %s177
      %p179 = scmp.eq.s32.totalorder %s27, 0
      %p180 = por %p178, %p179
      %s181 = ssub.s32 %s21, %s28
      %p182 = scmp.eq.s32.totalorder %s181, 0
      %s184 = sadd.s32 %s183, 1
      %s185 = scalar_select %p182, %s183, %s184
      %p188 = pneg %p182
      %p189 = scmp.eq.s32.totalorder %s21, 1
      %p190 = por %p188, %p189
      %p191 = scmp.ne.s32.totalorder %s183, %s186
      %p192 = scmp.eq.s32.totalorder %s21, 0
      %p193 = por %p191, %p192
      %p194 = scmp.ne.s32.totalorder %s183, %s186
      %p195 = scmp.eq.s32.totalorder %s26, 1
      %p196 = por %p194, %p195
      %p197 = scmp.ne.s32.totalorder %s186, %s187
      %p198 = scmp.eq.s32.totalorder %s26, 0
      %p199 = por %p197, %p198
      %p200 = scmp.ne.s32.totalorder %s186, %s187
      %p201 = scmp.eq.s32.totalorder %s27, 1
      %p202 = por %p200, %p201
      %p204 = scmp.ne.s32.totalorder %s187, %s203
      %p205 = scmp.eq.s32.totalorder %s27, 0
      %p206 = por %p204, %p205
      %p207 = scmp.le.s32.totalorder 1, %s21
      %p208 = scmp.lt.s32.totalorder %s21, 3
      %p209 = pnand %p207, %p208
      %p210 = pneg %p209
      // Predicated region
      $region9: #{_forward_padded.1} parent=5 // pred_check
        _
      $region10: #{_forward_padded.1} parent=5 // pred_check_branch
        %212 = sbr.rel (%p209) target = $region12
      $region11: #{_forward_padded.1} parent=5 // pred_region
        %s213 = ssub.s32 %s21, 1
        // Predicated region
        $region13: #{_forward_padded.1} parent=11 // pred_check
          %p214 = pneg %p68
        $region14: #{_forward_padded.1} parent=11 // pred_check_branch
          %216 = sbr.rel (%p214) target = $region16
        $region15: #{_forward_padded.1} parent=11 // pred_region
          %s218 = ssub.s32 16384, 16384
          %219 = vsyncadd [#allocation6], %s218
          %s220 = sshll.u32 [#allocation5], 4
          %s221 = int_to_ptr.vmem [resolvable:$true] %s220
          %226 = dma.hbm_to_vmem [thread:$0]  %s1, 16384, %s221, [#allocation6], 512, 512, 32
        $region16: #{_forward_padded.1} parent=11 // pred_fallthru
          _
        // Predicated region
        $region17: #{_forward_padded.1} parent=11 // pred_check
          %p227 = pneg %p89
        $region18: #{_forward_padded.1} parent=11 // pred_check_branch
          %229 = sbr.rel (%p227) target = $region20
        $region19: #{_forward_padded.1} parent=11 // pred_region
          %s231 = ssub.s32 128, 128
          %232 = vsyncadd [#allocation6], %s231
          %s234 = sshll.u32 [#allocation7], 4
          %s235 = int_to_ptr.vmem [resolvable:$true] %s234
          %237 = dma.hbm_to_vmem [thread:$0]  %s2, 128, %s235, [#allocation6]
        $region20: #{_forward_padded.1} parent=11 // pred_fallthru
          _
        // Predicated region
        $region21: #{_forward_padded.1} parent=11 // pred_check
          %p238 = pneg %p110
        $region22: #{_forward_padded.1} parent=11 // pred_check_branch
          %240 = sbr.rel (%p238) target = $region24
        $region23: #{_forward_padded.1} parent=11 // pred_region
          %s242 = ssub.s32 32768, 32768
          %243 = vsyncadd [#allocation9], %s242
          %s244 = sshll.u32 [#allocation8], 4
          %s245 = int_to_ptr.vmem [resolvable:$true] %s244
          %250 = dma.hbm_to_vmem [thread:$0]  %s3, 32768, %s245, [#allocation9], 256, 256, 16
        $region24: #{_forward_padded.1} parent=11 // pred_fallthru
          _
        // Predicated region
        $region25: #{_forward_padded.1} parent=11 // pred_check
          %p251 = pneg %p131
        $region26: #{_forward_padded.1} parent=11 // pred_check_branch
          %253 = sbr.rel (%p251) target = $region28
        $region27: #{_forward_padded.1} parent=11 // pred_region
          _
        $region28: #{_forward_padded.1} parent=11 // pred_fallthru
          _
        // Predicated region
        $region29: #{_forward_padded.1} parent=11 // pred_check
          %p254 = pneg %p152
        $region30: #{_forward_padded.1} parent=11 // pred_check_branch
          %256 = sbr.rel (%p254) target = $region32
        $region31: #{_forward_padded.1} parent=11 // pred_region
          %s258 = ssub.s32 8192, 8192
          %259 = vsyncadd [#allocation9], %s258
          %s260 = sshll.u32 [#allocation10], 4
          %s261 = int_to_ptr.vmem [resolvable:$true] %s260
          %266 = dma.hbm_to_vmem [thread:$0]  %s5, 8192, %s261, [#allocation9], 128, 128, 8
        $region32: #{_forward_padded.1} parent=11 // pred_fallthru
          _
        // Predicated region
        $region33: #{_forward_padded.1} parent=11 // pred_check
          %p267 = pneg %p173
        $region34: #{_forward_padded.1} parent=11 // pred_check_branch
          %269 = sbr.rel (%p267) target = $region36
        $region35: #{_forward_padded.1} parent=11 // pred_region
          _
        $region36: #{_forward_padded.1} parent=11 // pred_fallthru
          _
      $region12: #{_forward_padded.1} parent=5 // pred_fallthru
        _
      %p270 = scmp.lt.s32.totalorder %s21, 2
      // Predicated region
      $region37: #{_forward_padded.1} parent=5 // pred_check
        %p271 = pneg %p270
      $region38: #{_forward_padded.1} parent=5 // pred_check_branch
        %273 = sbr.rel (%p271) target = $region40
      $region39: #{_forward_padded.1} parent=5 // pred_region
        // Predicated region
        $region41: #{_forward_padded.1} parent=39 // pred_check
          %p274 = pneg %p41
        $region42: #{_forward_padded.1} parent=39 // pred_check_branch
          %276 = sbr.rel (%p274) target = $region44
        $region43: #{_forward_padded.1} parent=39 // pred_region
          %s277 = sand.u32 %s31, 1
          %s278 = scalar_lea.sflag [#allocation3], %s277
          %s279 = sand.u32 %s31, 1
          %s280 = smul.addr %s279, 16
          %s281 = scalar_lea.vmem [#allocation2], %s280
          %s282 = smul.u32 2, %s21
          %s284 = ssub.s32 256, 256
          %285 = vsyncadd %s278, %s284
          %s286 = smul.addr %s282, 2
          %s287 = smul.addr %s286, 64
          %s288 = scalar_lea.hbm %s0, %s287
          %s289 = sshll.u32 %s281, 4
          %s290 = int_to_ptr.vmem [resolvable:$true] %s289
          %295 = dma.hbm_to_vmem [thread:$0]  %s288, 256, %s290, %s278, 128, 128, 8
        $region44: #{_forward_padded.1} parent=39 // pred_fallthru
          _
      $region40: #{_forward_padded.1} parent=5 // pred_fallthru
        _
      %p296 = scmp.le.s32.totalorder 1, %s21
      %p297 = scmp.lt.s32.totalorder %s21, 3
      %p298 = pnand %p296, %p297
      %p299 = pneg %p298
      // Predicated region
      $region45: #{_forward_padded.1} parent=5 // pred_check
        _
      $region46: #{_forward_padded.1} parent=5 // pred_check_branch
        %301 = sbr.rel (%p298) target = $region48
      $region47: #{_forward_padded.1} parent=5 // pred_region
        %s302 = ssub.s32 %s21, 1
        %s303 = sand.u32 %s34, 1
        %s304 = scalar_lea.sflag [#allocation3], %s303
        %s305 = sand.u32 %s34, 1
        %s306 = smul.addr %s305, 16
        %s307 = scalar_lea.vmem [#allocation2], %s306
        // Predicated region
        $region49: #{_forward_padded.1} parent=47 // pred_check
          %p308 = pneg %p47
        $region50: #{_forward_padded.1} parent=47 // pred_check_branch
          %310 = sbr.rel (%p308) target = $region52
        $region51: #{_forward_padded.1} parent=47 // pred_region
          %311 = dma.done %s304, 256
        $region52: #{_forward_padded.1} parent=47 // pred_fallthru
          _
        // Predicated region
        $region53: #{_forward_padded.1} parent=47 // pred_check
          %p312 = pneg %p68
        $region54: #{_forward_padded.1} parent=47 // pred_check_branch
          %314 = sbr.rel (%p312) target = $region56
        $region55: #{_forward_padded.1} parent=47 // pred_region
          %315 = dma.done [#allocation6], 16384
        $region56: #{_forward_padded.1} parent=47 // pred_fallthru
          _
        // Predicated region
        $region57: #{_forward_padded.1} parent=47 // pred_check
          %p316 = pneg %p89
        $region58: #{_forward_padded.1} parent=47 // pred_check_branch
          %318 = sbr.rel (%p316) target = $region60
        $region59: #{_forward_padded.1} parent=47 // pred_region
          %319 = dma.done [#allocation6], 128
        $region60: #{_forward_padded.1} parent=47 // pred_fallthru
          _
        // Predicated region
        $region61: #{_forward_padded.1} parent=47 // pred_check
          %p320 = pneg %p110
        $region62: #{_forward_padded.1} parent=47 // pred_check_branch
          %322 = sbr.rel (%p320) target = $region64
        $region63: #{_forward_padded.1} parent=47 // pred_region
          %323 = dma.done [#allocation9], 32768
        $region64: #{_forward_padded.1} parent=47 // pred_fallthru
          _
        // Predicated region
        $region65: #{_forward_padded.1} parent=47 // pred_check
          %p324 = pneg %p152
        $region66: #{_forward_padded.1} parent=47 // pred_check_branch
          %326 = sbr.rel (%p324) target = $region68
        $region67: #{_forward_padded.1} parent=47 // pred_region
          %327 = dma.done [#allocation9], 8192
        $region68: #{_forward_padded.1} parent=47 // pred_fallthru
          _
        %s328 = sand.u32 %s34, 1
        %s329 = scalar_lea.sflag [#allocation3], %s328
        %s330 = sand.u32 %s34, 1
        %s331 = smul.addr %s330, 16
        %s332 = scalar_lea.vmem [#allocation2], %s331
        %p333 = pneg %p47
        %p334 = pneg %p44
        %p335 = pneg %p68
        %p336 = pneg %p65
        %p337 = pneg %p89
        %p338 = pneg %p86
        %p339 = pneg %p110
        %p340 = pneg %p107
        %p341 = pneg %p131
        %p342 = pneg %p128
        %p343 = pneg %p152
        %p344 = pneg %p149
        %p345 = pneg %p173
        %p346 = pneg %p170
        %p347 = pneg %p199
        %p348 = pneg %p196
        %s349 = sand.u32 %s186, 1
        %s350 = scalar_lea.sflag [#allocation4], %s349
        %s351 = sand.u32 %s186, 1
        %s352 = smul.addr %s351, 32
        %s353 = scalar_lea.vmem [#allocation11], %s352
        %s354 = smul.u32 2, %s26
        %s355 = smul.u32 2, %s26
        %v356 = vld [vmem:[%s307] sm:$0xff]
        %v357 = vld [vmem:[%s307 + $0x8] sm:$0xff]
        %v358 = vld [vmem:[#allocation5] sm:$0xff]
        %v359 = vld [vmem:[#allocation5 + $0x8] sm:$0xff]
        %v360 = vld [vmem:[#allocation5 + $0x10] sm:$0xff]
        %v361 = vld [vmem:[#allocation5 + $0x18] sm:$0xff]
        %v362 = vld [vmem:[#allocation5 + $0x20] sm:$0xff]
        %v363 = vld [vmem:[#allocation5 + $0x28] sm:$0xff]
        %v364 = vld [vmem:[#allocation5 + $0x30] sm:$0xff]
        %v365 = vld [vmem:[#allocation5 + $0x38] sm:$0xff]
        %v366 = vld [vmem:[#allocation5 + $0x40] sm:$0xff]
        %v367 = vld [vmem:[#allocation5 + $0x48] sm:$0xff]
        %v368 = vld [vmem:[#allocation5 + $0x50] sm:$0xff]
        %v369 = vld [vmem:[#allocation5 + $0x58] sm:$0xff]
        %v370 = vld [vmem:[#allocation5 + $0x60] sm:$0xff]
        %v371 = vld [vmem:[#allocation5 + $0x68] sm:$0xff]
        %v372 = vld [vmem:[#allocation5 + $0x70] sm:$0xff]
        %v373 = vld [vmem:[#allocation5 + $0x78] sm:$0xff]
        %v374 = vld [vmem:[#allocation5 + $0x80] sm:$0xff]
        %v375 = vld [vmem:[#allocation5 + $0x88] sm:$0xff]
        %v376 = vld [vmem:[#allocation5 + $0x90] sm:$0xff]
        %v377 = vld [vmem:[#allocation5 + $0x98] sm:$0xff]
        %v378 = vld [vmem:[#allocation5 + $0xa0] sm:$0xff]
        %v379 = vld [vmem:[#allocation5 + $0xa8] sm:$0xff]
        %v380 = vld [vmem:[#allocation5 + $0xb0] sm:$0xff]
        %v381 = vld [vmem:[#allocation5 + $0xb8] sm:$0xff]
        %v382 = vld [vmem:[#allocation5 + $0xc0] sm:$0xff]
        %v383 = vld [vmem:[#allocation5 + $0xc8] sm:$0xff]
        %v384 = vld [vmem:[#allocation5 + $0xd0] sm:$0xff]
        %v385 = vld [vmem:[#allocation5 + $0xd8] sm:$0xff]
        %v386 = vld [vmem:[#allocation5 + $0xe0] sm:$0xff]
        %v387 = vld [vmem:[#allocation5 + $0xe8] sm:$0xff]
        %v388 = vld [vmem:[#allocation5 + $0xf0] sm:$0xff]
        %v389 = vld [vmem:[#allocation5 + $0xf8] sm:$0xff]
        %v390 = vld [vmem:[#allocation5 + $0x100] sm:$0xff]
        %v391 = vld [vmem:[#allocation5 + $0x108] sm:$0xff]
        %v392 = vld [vmem:[#allocation5 + $0x110] sm:$0xff]
        %v393 = vld [vmem:[#allocation5 + $0x118] sm:$0xff]
        %v394 = vld [vmem:[#allocation5 + $0x120] sm:$0xff]
        %v395 = vld [vmem:[#allocation5 + $0x128] sm:$0xff]
        %v396 = vld [vmem:[#allocation5 + $0x130] sm:$0xff]
        %v397 = vld [vmem:[#allocation5 + $0x138] sm:$0xff]
        %v398 = vld [vmem:[#allocation5 + $0x140] sm:$0xff]
        %v399 = vld [vmem:[#allocation5 + $0x148] sm:$0xff]
        %v400 = vld [vmem:[#allocation5 + $0x150] sm:$0xff]
        %v401 = vld [vmem:[#allocation5 + $0x158] sm:$0xff]
        %v402 = vld [vmem:[#allocation5 + $0x160] sm:$0xff]
        %v403 = vld [vmem:[#allocation5 + $0x168] sm:$0xff]
        %v404 = vld [vmem:[#allocation5 + $0x170] sm:$0xff]
        %v405 = vld [vmem:[#allocation5 + $0x178] sm:$0xff]
        %v406 = vld [vmem:[#allocation5 + $0x180] sm:$0xff]
        %v407 = vld [vmem:[#allocation5 + $0x188] sm:$0xff]
        %v408 = vld [vmem:[#allocation5 + $0x190] sm:$0xff]
        %v409 = vld [vmem:[#allocation5 + $0x198] sm:$0xff]
        %v410 = vld [vmem:[#allocation5 + $0x1a0] sm:$0xff]
        %v411 = vld [vmem:[#allocation5 + $0x1a8] sm:$0xff]
        %v412 = vld [vmem:[#allocation5 + $0x1b0] sm:$0xff]
        %v413 = vld [vmem:[#allocation5 + $0x1b8] sm:$0xff]
        %v414 = vld [vmem:[#allocation5 + $0x1c0] sm:$0xff]
        %v415 = vld [vmem:[#allocation5 + $0x1c8] sm:$0xff]
        %v416 = vld [vmem:[#allocation5 + $0x1d0] sm:$0xff]
        %v417 = vld [vmem:[#allocation5 + $0x1d8] sm:$0xff]
        %v418 = vld [vmem:[#allocation5 + $0x1e0] sm:$0xff]
        %v419 = vld [vmem:[#allocation5 + $0x1e8] sm:$0xff]
        %v420 = vld [vmem:[#allocation5 + $0x1f0] sm:$0xff]
        %v421 = vld [vmem:[#allocation5 + $0x1f8] sm:$0xff]
        %v422 = vld [vmem:[#allocation5 + $0x200] sm:$0xff]
        %v423 = vld [vmem:[#allocation5 + $0x208] sm:$0xff]
        %v424 = vld [vmem:[#allocation5 + $0x210] sm:$0xff]
        %v425 = vld [vmem:[#allocation5 + $0x218] sm:$0xff]
        %v426 = vld [vmem:[#allocation5 + $0x220] sm:$0xff]
        %v427 = vld [vmem:[#allocation5 + $0x228] sm:$0xff]
        %v428 = vld [vmem:[#allocation5 + $0x230] sm:$0xff]
        %v429 = vld [vmem:[#allocation5 + $0x238] sm:$0xff]
        %v430 = vld [vmem:[#allocation5 + $0x240] sm:$0xff]
        %v431 = vld [vmem:[#allocation5 + $0x248] sm:$0xff]
        %v432 = vld [vmem:[#allocation5 + $0x250] sm:$0xff]
        %v433 = vld [vmem:[#allocation5 + $0x258] sm:$0xff]
        %v434 = vld [vmem:[#allocation5 + $0x260] sm:$0xff]
        %v435 = vld [vmem:[#allocation5 + $0x268] sm:$0xff]
        %v436 = vld [vmem:[#allocation5 + $0x270] sm:$0xff]
        %v437 = vld [vmem:[#allocation5 + $0x278] sm:$0xff]
        %v438 = vld [vmem:[#allocation5 + $0x280] sm:$0xff]
        %v439 = vld [vmem:[#allocation5 + $0x288] sm:$0xff]
        %v440 = vld [vmem:[#allocation5 + $0x290] sm:$0xff]
        %v441 = vld [vmem:[#allocation5 + $0x298] sm:$0xff]
        %v442 = vld [vmem:[#allocation5 + $0x2a0] sm:$0xff]
        %v443 = vld [vmem:[#allocation5 + $0x2a8] sm:$0xff]
        %v444 = vld [vmem:[#allocation5 + $0x2b0] sm:$0xff]
        %v445 = vld [vmem:[#allocation5 + $0x2b8] sm:$0xff]
        %v446 = vld [vmem:[#allocation5 + $0x2c0] sm:$0xff]
        %v447 = vld [vmem:[#allocation5 + $0x2c8] sm:$0xff]
        %v448 = vld [vmem:[#allocation5 + $0x2d0] sm:$0xff]
        %v449 = vld [vmem:[#allocation5 + $0x2d8] sm:$0xff]
        %v450 = vld [vmem:[#allocation5 + $0x2e0] sm:$0xff]
        %v451 = vld [vmem:[#allocation5 + $0x2e8] sm:$0xff]
        %v452 = vld [vmem:[#allocation5 + $0x2f0] sm:$0xff]
        %v453 = vld [vmem:[#allocation5 + $0x2f8] sm:$0xff]
        %v454 = vld [vmem:[#allocation5 + $0x300] sm:$0xff]
        %v455 = vld [vmem:[#allocation5 + $0x308] sm:$0xff]
        %v456 = vld [vmem:[#allocation5 + $0x310] sm:$0xff]
        %v457 = vld [vmem:[#allocation5 + $0x318] sm:$0xff]
        %v458 = vld [vmem:[#allocation5 + $0x320] sm:$0xff]
        %v459 = vld [vmem:[#allocation5 + $0x328] sm:$0xff]
        %v460 = vld [vmem:[#allocation5 + $0x330] sm:$0xff]
        %v461 = vld [vmem:[#allocation5 + $0x338] sm:$0xff]
        %v462 = vld [vmem:[#allocation5 + $0x340] sm:$0xff]
        %v463 = vld [vmem:[#allocation5 + $0x348] sm:$0xff]
        %v464 = vld [vmem:[#allocation5 + $0x350] sm:$0xff]
        %v465 = vld [vmem:[#allocation5 + $0x358] sm:$0xff]
        %v466 = vld [vmem:[#allocation5 + $0x360] sm:$0xff]
        %v467 = vld [vmem:[#allocation5 + $0x368] sm:$0xff]
        %v468 = vld [vmem:[#allocation5 + $0x370] sm:$0xff]
        %v469 = vld [vmem:[#allocation5 + $0x378] sm:$0xff]
        %v470 = vld [vmem:[#allocation5 + $0x380] sm:$0xff]
        %v471 = vld [vmem:[#allocation5 + $0x388] sm:$0xff]
        %v472 = vld [vmem:[#allocation5 + $0x390] sm:$0xff]
        %v473 = vld [vmem:[#allocation5 + $0x398] sm:$0xff]
        %v474 = vld [vmem:[#allocation5 + $0x3a0] sm:$0xff]
        %v475 = vld [vmem:[#allocation5 + $0x3a8] sm:$0xff]
        %v476 = vld [vmem:[#allocation5 + $0x3b0] sm:$0xff]
        %v477 = vld [vmem:[#allocation5 + $0x3b8] sm:$0xff]
        %v478 = vld [vmem:[#allocation5 + $0x3c0] sm:$0xff]
        %v479 = vld [vmem:[#allocation5 + $0x3c8] sm:$0xff]
        %v480 = vld [vmem:[#allocation5 + $0x3d0] sm:$0xff]
        %v481 = vld [vmem:[#allocation5 + $0x3d8] sm:$0xff]
        %v482 = vld [vmem:[#allocation5 + $0x3e0] sm:$0xff]
        %v483 = vld [vmem:[#allocation5 + $0x3e8] sm:$0xff]
        %v484 = vld [vmem:[#allocation5 + $0x3f0] sm:$0xff]
        %v485 = vld [vmem:[#allocation5 + $0x3f8] sm:$0xff]
        %v486 = vld [vmem:[#allocation7] sm:$0xff]
        %v488 = vlaneseq
        %v489 = vshrl.u32 %v488, 7
        %v490 = vsub.s32 0, %v489
        %v491 = vrot.slane %v486, %v490
        %v492 = vlaneseq
        %v493 = vshrl.u32 %v492, 7
        %v494 = vsub.s32 1, %v493
        %v495 = vrot.slane %v486, %v494
        %v496 = vlaneseq
        %v497 = vshrl.u32 %v496, 7
        %v498 = vsub.s32 2, %v497
        %v499 = vrot.slane %v486, %v498
        %v500 = vlaneseq
        %v501 = vshrl.u32 %v500, 7
        %v502 = vsub.s32 3, %v501
        %v503 = vrot.slane %v486, %v502
        %v504 = vlaneseq
        %v505 = vshrl.u32 %v504, 7
        %v506 = vsub.s32 4, %v505
        %v507 = vrot.slane %v486, %v506
        %v508 = vlaneseq
        %v509 = vshrl.u32 %v508, 7
        %v510 = vsub.s32 5, %v509
        %v511 = vrot.slane %v486, %v510
        %v512 = vlaneseq
        %v513 = vshrl.u32 %v512, 7
        %v514 = vsub.s32 6, %v513
        %v515 = vrot.slane %v486, %v514
        %v516 = vlaneseq
        %v517 = vshrl.u32 %v516, 7
        %v518 = vsub.s32 7, %v517
        %v519 = vrot.slane %v486, %v518
        %v530 = vunpack.c.l.b16 %v356
        %v531 = vunpack.c.h.b16 %v356
        %v532 = vunpack.c.l.b16 %v357
        %v533 = vunpack.c.h.b16 %v357
        %v534 = vpack.c.b16 %v532, %v530
        %v535 = vpack.c.b16 %v533, %v531
        %v666 = vunpack.c.l.b16 %v358
        %v667 = vunpack.c.h.b16 %v358
        %v668 = vunpack.c.l.b16 %v359
        %v669 = vunpack.c.h.b16 %v359
        %v670 = vunpack.c.l.b16 %v360
        %v671 = vunpack.c.h.b16 %v360
        %v672 = vunpack.c.l.b16 %v361
        %v673 = vunpack.c.h.b16 %v361
        %v674 = vunpack.c.l.b16 %v362
        %v675 = vunpack.c.h.b16 %v362
        %v676 = vunpack.c.l.b16 %v363
        %v677 = vunpack.c.h.b16 %v363
        %v678 = vunpack.c.l.b16 %v364
        %v679 = vunpack.c.h.b16 %v364
        %v680 = vunpack.c.l.b16 %v365
        %v681 = vunpack.c.h.b16 %v365
        %v682 = vunpack.c.l.b16 %v366
        %v683 = vunpack.c.h.b16 %v366
        %v684 = vunpack.c.l.b16 %v367
        %v685 = vunpack.c.h.b16 %v367
        %v686 = vunpack.c.l.b16 %v368
        %v687 = vunpack.c.h.b16 %v368
        %v688 = vunpack.c.l.b16 %v369
        %v689 = vunpack.c.h.b16 %v369
        %v690 = vunpack.c.l.b16 %v370
        %v691 = vunpack.c.h.b16 %v370
        %v692 = vunpack.c.l.b16 %v371
        %v693 = vunpack.c.h.b16 %v371
        %v694 = vunpack.c.l.b16 %v372
        %v695 = vunpack.c.h.b16 %v372
        %v696 = vunpack.c.l.b16 %v373
        %v697 = vunpack.c.h.b16 %v373
        %v698 = vunpack.c.l.b16 %v374
        %v699 = vunpack.c.h.b16 %v374
        %v700 = vunpack.c.l.b16 %v375
        %v701 = vunpack.c.h.b16 %v375
        %v702 = vunpack.c.l.b16 %v376
        %v703 = vunpack.c.h.b16 %v376
        %v704 = vunpack.c.l.b16 %v377
        %v705 = vunpack.c.h.b16 %v377
        %v706 = vunpack.c.l.b16 %v378
        %v707 = vunpack.c.h.b16 %v378
        %v708 = vunpack.c.l.b16 %v379
        %v709 = vunpack.c.h.b16 %v379
        %v710 = vunpack.c.l.b16 %v380
        %v711 = vunpack.c.h.b16 %v380
        %v712 = vunpack.c.l.b16 %v381
        %v713 = vunpack.c.h.b16 %v381
        %v714 = vunpack.c.l.b16 %v382
        %v715 = vunpack.c.h.b16 %v382
        %v716 = vunpack.c.l.b16 %v383
        %v717 = vunpack.c.h.b16 %v383
        %v718 = vunpack.c.l.b16 %v384
        %v719 = vunpack.c.h.b16 %v384
        %v720 = vunpack.c.l.b16 %v385
        %v721 = vunpack.c.h.b16 %v385
        %v722 = vunpack.c.l.b16 %v386
        %v723 = vunpack.c.h.b16 %v386
        %v724 = vunpack.c.l.b16 %v387
        %v725 = vunpack.c.h.b16 %v387
        %v726 = vunpack.c.l.b16 %v388
        %v727 = vunpack.c.h.b16 %v388
        %v728 = vunpack.c.l.b16 %v389
        %v729 = vunpack.c.h.b16 %v389
        %v730 = vunpack.c.l.b16 %v390
        %v731 = vunpack.c.h.b16 %v390
        %v732 = vunpack.c.l.b16 %v391
        %v733 = vunpack.c.h.b16 %v391
        %v734 = vunpack.c.l.b16 %v392
        %v735 = vunpack.c.h.b16 %v392
        %v736 = vunpack.c.l.b16 %v393
        %v737 = vunpack.c.h.b16 %v393
        %v738 = vunpack.c.l.b16 %v394
        %v739 = vunpack.c.h.b16 %v394
        %v740 = vunpack.c.l.b16 %v395
        %v741 = vunpack.c.h.b16 %v395
        %v742 = vunpack.c.l.b16 %v396
        %v743 = vunpack.c.h.b16 %v396
        %v744 = vunpack.c.l.b16 %v397
        %v745 = vunpack.c.h.b16 %v397
        %v746 = vunpack.c.l.b16 %v398
        %v747 = vunpack.c.h.b16 %v398
        %v748 = vunpack.c.l.b16 %v399
        %v749 = vunpack.c.h.b16 %v399
        %v750 = vunpack.c.l.b16 %v400
        %v751 = vunpack.c.h.b16 %v400
        %v752 = vunpack.c.l.b16 %v401
        %v753 = vunpack.c.h.b16 %v401
        %v754 = vunpack.c.l.b16 %v402
        %v755 = vunpack.c.h.b16 %v402
        %v756 = vunpack.c.l.b16 %v403
        %v757 = vunpack.c.h.b16 %v403
        %v758 = vunpack.c.l.b16 %v404
        %v759 = vunpack.c.h.b16 %v404
        %v760 = vunpack.c.l.b16 %v405
        %v761 = vunpack.c.h.b16 %v405
        %v762 = vunpack.c.l.b16 %v406
        %v763 = vunpack.c.h.b16 %v406
        %v764 = vunpack.c.l.b16 %v407
        %v765 = vunpack.c.h.b16 %v407
        %v766 = vunpack.c.l.b16 %v408
        %v767 = vunpack.c.h.b16 %v408
        %v768 = vunpack.c.l.b16 %v409
        %v769 = vunpack.c.h.b16 %v409
        %v770 = vunpack.c.l.b16 %v410
        %v771 = vunpack.c.h.b16 %v410
        %v772 = vunpack.c.l.b16 %v411
        %v773 = vunpack.c.h.b16 %v411
        %v774 = vunpack.c.l.b16 %v412
        %v775 = vunpack.c.h.b16 %v412
        %v776 = vunpack.c.l.b16 %v413
        %v777 = vunpack.c.h.b16 %v413
        %v778 = vunpack.c.l.b16 %v414
        %v779 = vunpack.c.h.b16 %v414
        %v780 = vunpack.c.l.b16 %v415
        %v781 = vunpack.c.h.b16 %v415
        %v782 = vunpack.c.l.b16 %v416
        %v783 = vunpack.c.h.b16 %v416
        %v784 = vunpack.c.l.b16 %v417
        %v785 = vunpack.c.h.b16 %v417
        %v786 = vunpack.c.l.b16 %v418
        %v787 = vunpack.c.h.b16 %v418
        %v788 = vunpack.c.l.b16 %v419
        %v789 = vunpack.c.h.b16 %v419
        %v790 = vunpack.c.l.b16 %v420
        %v791 = vunpack.c.h.b16 %v420
        %v792 = vunpack.c.l.b16 %v421
        %v793 = vunpack.c.h.b16 %v421
        %v794 = vunpack.c.l.b16 %v422
        %v795 = vunpack.c.h.b16 %v422
        %v796 = vunpack.c.l.b16 %v423
        %v797 = vunpack.c.h.b16 %v423
        %v798 = vunpack.c.l.b16 %v424
        %v799 = vunpack.c.h.b16 %v424
        %v800 = vunpack.c.l.b16 %v425
        %v801 = vunpack.c.h.b16 %v425
        %v802 = vunpack.c.l.b16 %v426
        %v803 = vunpack.c.h.b16 %v426
        %v804 = vunpack.c.l.b16 %v427
        %v805 = vunpack.c.h.b16 %v427
        %v806 = vunpack.c.l.b16 %v428
        %v807 = vunpack.c.h.b16 %v428
        %v808 = vunpack.c.l.b16 %v429
        %v809 = vunpack.c.h.b16 %v429
        %v810 = vunpack.c.l.b16 %v430
        %v811 = vunpack.c.h.b16 %v430
        %v812 = vunpack.c.l.b16 %v431
        %v813 = vunpack.c.h.b16 %v431
        %v814 = vunpack.c.l.b16 %v432
        %v815 = vunpack.c.h.b16 %v432
        %v816 = vunpack.c.l.b16 %v433
        %v817 = vunpack.c.h.b16 %v433
        %v818 = vunpack.c.l.b16 %v434
        %v819 = vunpack.c.h.b16 %v434
        %v820 = vunpack.c.l.b16 %v435
        %v821 = vunpack.c.h.b16 %v435
        %v822 = vunpack.c.l.b16 %v436
        %v823 = vunpack.c.h.b16 %v436
        %v824 = vunpack.c.l.b16 %v437
        %v825 = vunpack.c.h.b16 %v437
        %v826 = vunpack.c.l.b16 %v438
        %v827 = vunpack.c.h.b16 %v438
        %v828 = vunpack.c.l.b16 %v439
        %v829 = vunpack.c.h.b16 %v439
        %v830 = vunpack.c.l.b16 %v440
        %v831 = vunpack.c.h.b16 %v440
        %v832 = vunpack.c.l.b16 %v441
        %v833 = vunpack.c.h.b16 %v441
        %v834 = vunpack.c.l.b16 %v442
        %v835 = vunpack.c.h.b16 %v442
        %v836 = vunpack.c.l.b16 %v443
        %v837 = vunpack.c.h.b16 %v443
        %v838 = vunpack.c.l.b16 %v444
        %v839 = vunpack.c.h.b16 %v444
        %v840 = vunpack.c.l.b16 %v445
        %v841 = vunpack.c.h.b16 %v445
        %v842 = vunpack.c.l.b16 %v446
        %v843 = vunpack.c.h.b16 %v446
        %v844 = vunpack.c.l.b16 %v447
        %v845 = vunpack.c.h.b16 %v447
        %v846 = vunpack.c.l.b16 %v448
        %v847 = vunpack.c.h.b16 %v448
        %v848 = vunpack.c.l.b16 %v449
        %v849 = vunpack.c.h.b16 %v449
        %v850 = vunpack.c.l.b16 %v450
        %v851 = vunpack.c.h.b16 %v450
        %v852 = vunpack.c.l.b16 %v451
        %v853 = vunpack.c.h.b16 %v451
        %v854 = vunpack.c.l.b16 %v452
        %v855 = vunpack.c.h.b16 %v452
        %v856 = vunpack.c.l.b16 %v453
        %v857 = vunpack.c.h.b16 %v453
        %v858 = vunpack.c.l.b16 %v454
        %v859 = vunpack.c.h.b16 %v454
        %v860 = vunpack.c.l.b16 %v455
        %v861 = vunpack.c.h.b16 %v455
        %v862 = vunpack.c.l.b16 %v456
        %v863 = vunpack.c.h.b16 %v456
        %v864 = vunpack.c.l.b16 %v457
        %v865 = vunpack.c.h.b16 %v457
        %v866 = vunpack.c.l.b16 %v458
        %v867 = vunpack.c.h.b16 %v458
        %v868 = vunpack.c.l.b16 %v459
        %v869 = vunpack.c.h.b16 %v459
        %v870 = vunpack.c.l.b16 %v460
        %v871 = vunpack.c.h.b16 %v460
        %v872 = vunpack.c.l.b16 %v461
        %v873 = vunpack.c.h.b16 %v461
        %v874 = vunpack.c.l.b16 %v462
        %v875 = vunpack.c.h.b16 %v462
        %v876 = vunpack.c.l.b16 %v463
        %v877 = vunpack.c.h.b16 %v463
        %v878 = vunpack.c.l.b16 %v464
        %v879 = vunpack.c.h.b16 %v464
        %v880 = vunpack.c.l.b16 %v465
        %v881 = vunpack.c.h.b16 %v465
        %v882 = vunpack.c.l.b16 %v466
        %v883 = vunpack.c.h.b16 %v466
        %v884 = vunpack.c.l.b16 %v467
        %v885 = vunpack.c.h.b16 %v467
        %v886 = vunpack.c.l.b16 %v468
        %v887 = vunpack.c.h.b16 %v468
        %v888 = vunpack.c.l.b16 %v469
        %v889 = vunpack.c.h.b16 %v469
        %v890 = vunpack.c.l.b16 %v470
        %v891 = vunpack.c.h.b16 %v470
        %v892 = vunpack.c.l.b16 %v471
        %v893 = vunpack.c.h.b16 %v471
        %v894 = vunpack.c.l.b16 %v472
        %v895 = vunpack.c.h.b16 %v472
        %v896 = vunpack.c.l.b16 %v473
        %v897 = vunpack.c.h.b16 %v473
        %v898 = vunpack.c.l.b16 %v474
        %v899 = vunpack.c.h.b16 %v474
        %v900 = vunpack.c.l.b16 %v475
        %v901 = vunpack.c.h.b16 %v475
        %v902 = vunpack.c.l.b16 %v476
        %v903 = vunpack.c.h.b16 %v476
        %v904 = vunpack.c.l.b16 %v477
        %v905 = vunpack.c.h.b16 %v477
        %v906 = vunpack.c.l.b16 %v478
        %v907 = vunpack.c.h.b16 %v478
        %v908 = vunpack.c.l.b16 %v479
        %v909 = vunpack.c.h.b16 %v479
        %v910 = vunpack.c.l.b16 %v480
        %v911 = vunpack.c.h.b16 %v480
        %v912 = vunpack.c.l.b16 %v481
        %v913 = vunpack.c.h.b16 %v481
        %v914 = vunpack.c.l.b16 %v482
        %v915 = vunpack.c.h.b16 %v482
        %v916 = vunpack.c.l.b16 %v483
        %v917 = vunpack.c.h.b16 %v483
        %v918 = vunpack.c.l.b16 %v484
        %v919 = vunpack.c.h.b16 %v484
        %v920 = vunpack.c.l.b16 %v485
        %v921 = vunpack.c.h.b16 %v485
        %v922 = vpack.c.b16 %v674, %v666
        %v923 = vpack.c.b16 %v675, %v667
        %v924 = vpack.c.b16 %v676, %v668
        %v925 = vpack.c.b16 %v677, %v669
        %v926 = vpack.c.b16 %v678, %v670
        %v927 = vpack.c.b16 %v679, %v671
        %v928 = vpack.c.b16 %v680, %v672
        %v929 = vpack.c.b16 %v681, %v673
        %v930 = vpack.c.b16 %v690, %v682
        %v931 = vpack.c.b16 %v691, %v683
        %v932 = vpack.c.b16 %v692, %v684
        %v933 = vpack.c.b16 %v693, %v685
        %v934 = vpack.c.b16 %v694, %v686
        %v935 = vpack.c.b16 %v695, %v687
        %v936 = vpack.c.b16 %v696, %v688
        %v937 = vpack.c.b16 %v697, %v689
        %v938 = vpack.c.b16 %v706, %v698
        %v939 = vpack.c.b16 %v707, %v699
        %v940 = vpack.c.b16 %v708, %v700
        %v941 = vpack.c.b16 %v709, %v701
        %v942 = vpack.c.b16 %v710, %v702
        %v943 = vpack.c.b16 %v711, %v703
        %v944 = vpack.c.b16 %v712, %v704
        %v945 = vpack.c.b16 %v713, %v705
        %v946 = vpack.c.b16 %v722, %v714
        %v947 = vpack.c.b16 %v723, %v715
        %v948 = vpack.c.b16 %v724, %v716
        %v949 = vpack.c.b16 %v725, %v717
        %v950 = vpack.c.b16 %v726, %v718
        %v951 = vpack.c.b16 %v727, %v719
        %v952 = vpack.c.b16 %v728, %v720
        %v953 = vpack.c.b16 %v729, %v721
        %v954 = vpack.c.b16 %v738, %v730
        %v955 = vpack.c.b16 %v739, %v731
        %v956 = vpack.c.b16 %v740, %v732
        %v957 = vpack.c.b16 %v741, %v733
        %v958 = vpack.c.b16 %v742, %v734
        %v959 = vpack.c.b16 %v743, %v735
        %v960 = vpack.c.b16 %v744, %v736
        %v961 = vpack.c.b16 %v745, %v737
        %v962 = vpack.c.b16 %v754, %v746
        %v963 = vpack.c.b16 %v755, %v747
        %v964 = vpack.c.b16 %v756, %v748
        %v965 = vpack.c.b16 %v757, %v749
        %v966 = vpack.c.b16 %v758, %v750
        %v967 = vpack.c.b16 %v759, %v751
        %v968 = vpack.c.b16 %v760, %v752
        %v969 = vpack.c.b16 %v761, %v753
        %v970 = vpack.c.b16 %v770, %v762
        %v971 = vpack.c.b16 %v771, %v763
        %v972 = vpack.c.b16 %v772, %v764
        %v973 = vpack.c.b16 %v773, %v765
        %v974 = vpack.c.b16 %v774, %v766
        %v975 = vpack.c.b16 %v775, %v767
        %v976 = vpack.c.b16 %v776, %v768
        %v977 = vpack.c.b16 %v777, %v769
        %v978 = vpack.c.b16 %v786, %v778
        %v979 = vpack.c.b16 %v787, %v779
        %v980 = vpack.c.b16 %v788, %v780
        %v981 = vpack.c.b16 %v789, %v781
        %v982 = vpack.c.b16 %v790, %v782
        %v983 = vpack.c.b16 %v791, %v783
        %v984 = vpack.c.b16 %v792, %v784
        %v985 = vpack.c.b16 %v793, %v785
        %v986 = vpack.c.b16 %v802, %v794
        %v987 = vpack.c.b16 %v803, %v795
        %v988 = vpack.c.b16 %v804, %v796
        %v989 = vpack.c.b16 %v805, %v797
        %v990 = vpack.c.b16 %v806, %v798
        %v991 = vpack.c.b16 %v807, %v799
        %v992 = vpack.c.b16 %v808, %v800
        %v993 = vpack.c.b16 %v809, %v801
        %v994 = vpack.c.b16 %v818, %v810
        %v995 = vpack.c.b16 %v819, %v811
        %v996 = vpack.c.b16 %v820, %v812
        %v997 = vpack.c.b16 %v821, %v813
        %v998 = vpack.c.b16 %v822, %v814
        %v999 = vpack.c.b16 %v823, %v815
        %v1000 = vpack.c.b16 %v824, %v816
        %v1001 = vpack.c.b16 %v825, %v817
        %v1002 = vpack.c.b16 %v834, %v826
        %v1003 = vpack.c.b16 %v835, %v827
        %v1004 = vpack.c.b16 %v836, %v828
        %v1005 = vpack.c.b16 %v837, %v829
        %v1006 = vpack.c.b16 %v838, %v830
        %v1007 = vpack.c.b16 %v839, %v831
        %v1008 = vpack.c.b16 %v840, %v832
        %v1009 = vpack.c.b16 %v841, %v833
        %v1010 = vpack.c.b16 %v850, %v842
        %v1011 = vpack.c.b16 %v851, %v843
        %v1012 = vpack.c.b16 %v852, %v844
        %v1013 = vpack.c.b16 %v853, %v845
        %v1014 = vpack.c.b16 %v854, %v846
        %v1015 = vpack.c.b16 %v855, %v847
        %v1016 = vpack.c.b16 %v856, %v848
        %v1017 = vpack.c.b16 %v857, %v849
        %v1018 = vpack.c.b16 %v866, %v858
        %v1019 = vpack.c.b16 %v867, %v859
        %v1020 = vpack.c.b16 %v868, %v860
        %v1021 = vpack.c.b16 %v869, %v861
        %v1022 = vpack.c.b16 %v870, %v862
        %v1023 = vpack.c.b16 %v871, %v863
        %v1024 = vpack.c.b16 %v872, %v864
        %v1025 = vpack.c.b16 %v873, %v865
        %v1026 = vpack.c.b16 %v882, %v874
        %v1027 = vpack.c.b16 %v883, %v875
        %v1028 = vpack.c.b16 %v884, %v876
        %v1029 = vpack.c.b16 %v885, %v877
        %v1030 = vpack.c.b16 %v886, %v878
        %v1031 = vpack.c.b16 %v887, %v879
        %v1032 = vpack.c.b16 %v888, %v880
        %v1033 = vpack.c.b16 %v889, %v881
        %v1034 = vpack.c.b16 %v898, %v890
        %v1035 = vpack.c.b16 %v899, %v891
        %v1036 = vpack.c.b16 %v900, %v892
        %v1037 = vpack.c.b16 %v901, %v893
        %v1038 = vpack.c.b16 %v902, %v894
        %v1039 = vpack.c.b16 %v903, %v895
        %v1040 = vpack.c.b16 %v904, %v896
        %v1041 = vpack.c.b16 %v905, %v897
        %v1042 = vpack.c.b16 %v914, %v906
        %v1043 = vpack.c.b16 %v915, %v907
        %v1044 = vpack.c.b16 %v916, %v908
        %v1045 = vpack.c.b16 %v917, %v909
        %v1046 = vpack.c.b16 %v918, %v910
        %v1047 = vpack.c.b16 %v919, %v911
        %v1048 = vpack.c.b16 %v920, %v912
        %v1049 = vpack.c.b16 %v921, %v913
        %1178 = vmatprep.subr.bf16.mxu0 %v923
        %1179 = vmatpush1.bf16.msra.mxu0 %v922
        %1180 = vmatprep.subr.bf16.mxu0 %v931
        %1181 = vmatpush1.bf16.msra.mxu0 %v930
        %1182 = vmatprep.subr.bf16.mxu0 %v939
        %1183 = vmatpush1.bf16.msra.mxu0 %v938
        %1184 = vmatprep.subr.bf16.mxu0 %v947
        %1185 = vmatpush1.bf16.msra.mxu0 %v946
        %1186 = vmatprep.subr.bf16.mxu0 %v955
        %1187 = vmatpush1.bf16.msra.mxu0 %v954
        %1188 = vmatprep.subr.bf16.mxu0 %v963
        %1189 = vmatpush1.bf16.msra.mxu0 %v962
        %1190 = vmatprep.subr.bf16.mxu0 %v971
        %1191 = vmatpush1.bf16.msra.mxu0 %v970
        %1192 = vmatprep.subr.bf16.mxu0 %v979
        %1193 = vmatpush1.bf16.msra.mxu0 %v978
        %1194 = vmatprep.subr.bf16.mxu0 %v987
        %1195 = vmatpush1.bf16.msra.mxu0 %v986
        %1196 = vmatprep.subr.bf16.mxu0 %v995
        %1197 = vmatpush1.bf16.msra.mxu0 %v994
        %1198 = vmatprep.subr.bf16.mxu0 %v1003
        %1199 = vmatpush1.bf16.msra.mxu0 %v1002
        %1200 = vmatprep.subr.bf16.mxu0 %v1011
        %1201 = vmatpush1.bf16.msra.mxu0 %v1010
        %1202 = vmatprep.subr.bf16.mxu0 %v1019
        %1203 = vmatpush1.bf16.msra.mxu0 %v1018
        %1204 = vmatprep.subr.bf16.mxu0 %v1027
        %1205 = vmatpush1.bf16.msra.mxu0 %v1026
        %1206 = vmatprep.subr.bf16.mxu0 %v1035
        %1207 = vmatpush1.bf16.msra.mxu0 %v1034
        %1208 = vmatprep.subr.bf16.mxu0 %v1043
        %1209 = vmatpush1.bf16.msra.mxu0 %v1042
        %1210 = vmatprep.mubr.bf16.mxu0 %v535
        %1211 = vmatmul.mubr.bf16.gmra.mrb[0].mxu0 %v534
        %v1212 = vpop.f32.mrb[0].mxu0
        %v1213 = vadd.f32 %v491, %v1212
        %v1214 = vpop.f32.mrb[0].mxu0
        %v1215 = vadd.f32 %v495, %v1214
        %v1216 = vpop.f32.mrb[0].mxu0
        %v1217 = vadd.f32 %v491, %v1216
        %v1218 = vpop.f32.mrb[0].mxu0
        %v1219 = vadd.f32 %v495, %v1218
        %1220 = vdwg.mxu0
        %1221 = vmatprep.subr.bf16.mxu0 %v925
        %1222 = vmatpush1.bf16.msra.mxu0 %v924
        %1223 = vmatprep.subr.bf16.mxu0 %v933
        %1224 = vmatpush1.bf16.msra.mxu0 %v932
        %1225 = vmatprep.subr.bf16.mxu0 %v941
        %1226 = vmatpush1.bf16.msra.mxu0 %v940
        %1227 = vmatprep.subr.bf16.mxu0 %v949
        %1228 = vmatpush1.bf16.msra.mxu0 %v948
        %1229 = vmatprep.subr.bf16.mxu0 %v957
        %1230 = vmatpush1.bf16.msra.mxu0 %v956
        %1231 = vmatprep.subr.bf16.mxu0 %v965
        %1232 = vmatpush1.bf16.msra.mxu0 %v964
        %1233 = vmatprep.subr.bf16.mxu0 %v973
        %1234 = vmatpush1.bf16.msra.mxu0 %v972
        %1235 = vmatprep.subr.bf16.mxu0 %v981
        %1236 = vmatpush1.bf16.msra.mxu0 %v980
        %1237 = vmatprep.subr.bf16.mxu0 %v989
        %1238 = vmatpush1.bf16.msra.mxu0 %v988
        %1239 = vmatprep.subr.bf16.mxu0 %v997
        %1240 = vmatpush1.bf16.msra.mxu0 %v996
        %1241 = vmatprep.subr.bf16.mxu0 %v1005
        %1242 = vmatpush1.bf16.msra.mxu0 %v1004
        %1243 = vmatprep.subr.bf16.mxu0 %v1013
        %1244 = vmatpush1.bf16.msra.mxu0 %v1012
        %1245 = vmatprep.subr.bf16.mxu0 %v1021
        %1246 = vmatpush1.bf16.msra.mxu0 %v1020
        %1247 = vmatprep.subr.bf16.mxu0 %v1029
        %1248 = vmatpush1.bf16.msra.mxu0 %v1028
        %1249 = vmatprep.subr.bf16.mxu0 %v1037
        %1250 = vmatpush1.bf16.msra.mxu0 %v1036
        %1251 = vmatprep.subr.bf16.mxu0 %v1045
        %1252 = vmatpush1.bf16.msra.mxu0 %v1044
        %1253 = vmatprep.mubr.bf16.mxu0 %v535
        %1254 = vmatmul.mubr.bf16.gmra.mrb[0].mxu0 %v534
        %v1255 = vpop.f32.mrb[0].mxu0
        %v1256 = vadd.f32 %v499, %v1255
        %v1257 = vpop.f32.mrb[0].mxu0
        %v1258 = vadd.f32 %v503, %v1257
        %v1259 = vpop.f32.mrb[0].mxu0
        %v1260 = vadd.f32 %v499, %v1259
        %v1261 = vpop.f32.mrb[0].mxu0
        %v1262 = vadd.f32 %v503, %v1261
        %1263 = vdwg.mxu0
        %1264 = vmatprep.subr.bf16.mxu0 %v927
        %1265 = vmatpush1.bf16.msra.mxu0 %v926
        %1266 = vmatprep.subr.bf16.mxu0 %v935
        %1267 = vmatpush1.bf16.msra.mxu0 %v934
        %1268 = vmatprep.subr.bf16.mxu0 %v943
        %1269 = vmatpush1.bf16.msra.mxu0 %v942
        %1270 = vmatprep.subr.bf16.mxu0 %v951
        %1271 = vmatpush1.bf16.msra.mxu0 %v950
        %1272 = vmatprep.subr.bf16.mxu0 %v959
        %1273 = vmatpush1.bf16.msra.mxu0 %v958
        %1274 = vmatprep.subr.bf16.mxu0 %v967
        %1275 = vmatpush1.bf16.msra.mxu0 %v966
        %1276 = vmatprep.subr.bf16.mxu0 %v975
        %1277 = vmatpush1.bf16.msra.mxu0 %v974
        %1278 = vmatprep.subr.bf16.mxu0 %v983
        %1279 = vmatpush1.bf16.msra.mxu0 %v982
        %1280 = vmatprep.subr.bf16.mxu0 %v991
        %1281 = vmatpush1.bf16.msra.mxu0 %v990
        %1282 = vmatprep.subr.bf16.mxu0 %v999
        %1283 = vmatpush1.bf16.msra.mxu0 %v998
        %1284 = vmatprep.subr.bf16.mxu0 %v1007
        %1285 = vmatpush1.bf16.msra.mxu0 %v1006
        %1286 = vmatprep.subr.bf16.mxu0 %v1015
        %1287 = vmatpush1.bf16.msra.mxu0 %v1014
        %1288 = vmatprep.subr.bf16.mxu0 %v1023
        %1289 = vmatpush1.bf16.msra.mxu0 %v1022
        %1290 = vmatprep.subr.bf16.mxu0 %v1031
        %1291 = vmatpush1.bf16.msra.mxu0 %v1030
        %1292 = vmatprep.subr.bf16.mxu0 %v1039
        %1293 = vmatpush1.bf16.msra.mxu0 %v1038
        %1294 = vmatprep.subr.bf16.mxu0 %v1047
        %1295 = vmatpush1.bf16.msra.mxu0 %v1046
        %1296 = vmatprep.mubr.bf16.mxu0 %v535
        %1297 = vmatmul.mubr.bf16.gmra.mrb[0].mxu0 %v534
        %v1298 = vpop.f32.mrb[0].mxu0
        %v1299 = vadd.f32 %v507, %v1298
        %v1300 = vpop.f32.mrb[0].mxu0
        %v1301 = vadd.f32 %v511, %v1300
        %v1302 = vpop.f32.mrb[0].mxu0
        %v1303 = vadd.f32 %v507, %v1302
        %v1304 = vpop.f32.mrb[0].mxu0
        %v1305 = vadd.f32 %v511, %v1304
        %1306 = vdwg.mxu0
        %1307 = vmatprep.subr.bf16.mxu0 %v929
        %1308 = vmatpush1.bf16.msra.mxu0 %v928
        %1309 = vmatprep.subr.bf16.mxu0 %v937
        %1310 = vmatpush1.bf16.msra.mxu0 %v936
        %1311 = vmatprep.subr.bf16.mxu0 %v945
        %1312 = vmatpush1.bf16.msra.mxu0 %v944
        %1313 = vmatprep.subr.bf16.mxu0 %v953
        %1314 = vmatpush1.bf16.msra.mxu0 %v952
        %1315 = vmatprep.subr.bf16.mxu0 %v961
        %1316 = vmatpush1.bf16.msra.mxu0 %v960
        %1317 = vmatprep.subr.bf16.mxu0 %v969
        %1318 = vmatpush1.bf16.msra.mxu0 %v968
        %1319 = vmatprep.subr.bf16.mxu0 %v977
        %1320 = vmatpush1.bf16.msra.mxu0 %v976
        %1321 = vmatprep.subr.bf16.mxu0 %v985
        %1322 = vmatpush1.bf16.msra.mxu0 %v984
        %1323 = vmatprep.subr.bf16.mxu0 %v993
        %1324 = vmatpush1.bf16.msra.mxu0 %v992
        %1325 = vmatprep.subr.bf16.mxu0 %v1001
        %1326 = vmatpush1.bf16.msra.mxu0 %v1000
        %1327 = vmatprep.subr.bf16.mxu0 %v1009
        %1328 = vmatpush1.bf16.msra.mxu0 %v1008
        %1329 = vmatprep.subr.bf16.mxu0 %v1017
        %1330 = vmatpush1.bf16.msra.mxu0 %v1016
        %1331 = vmatprep.subr.bf16.mxu0 %v1025
        %1332 = vmatpush1.bf16.msra.mxu0 %v1024
        %1333 = vmatprep.subr.bf16.mxu0 %v1033
        %1334 = vmatpush1.bf16.msra.mxu0 %v1032
        %1335 = vmatprep.subr.bf16.mxu0 %v1041
        %1336 = vmatpush1.bf16.msra.mxu0 %v1040
        %1337 = vmatprep.subr.bf16.mxu0 %v1049
        %1338 = vmatpush1.bf16.msra.mxu0 %v1048
        %1339 = vmatprep.mubr.bf16.mxu0 %v535
        %1340 = vmatmul.mubr.bf16.gmra.mrb[0].mxu0 %v534
        %v1341 = vpop.f32.mrb[0].mxu0
        %v1342 = vadd.f32 %v515, %v1341
        %v1343 = vpop.f32.mrb[0].mxu0
        %v1344 = vadd.f32 %v519, %v1343
        %v1345 = vpop.f32.mrb[0].mxu0
        %v1346 = vadd.f32 %v515, %v1345
        %v1347 = vpop.f32.mrb[0].mxu0
        %v1348 = vadd.f32 %v519, %v1347
        %1349 = vdwg.mxu0
        %v1350 = vtanh.pop %v1213
        %v1351 = vtanh.pop %v1215
        %v1352 = vtanh.pop %v1256
        %v1353 = vtanh.pop %v1258
        %v1354 = vtanh.pop %v1299
        %v1355 = vtanh.pop %v1301
        %v1356 = vtanh.pop %v1342
        %v1357 = vtanh.pop %v1344
        %v1358 = vtanh.pop %v1217
        %v1359 = vtanh.pop %v1219
        %v1360 = vtanh.pop %v1260
        %v1361 = vtanh.pop %v1262
        %v1362 = vtanh.pop %v1303
        %v1363 = vtanh.pop %v1305
        %v1364 = vtanh.pop %v1346
        %v1365 = vtanh.pop %v1348
        %v1366 = vpack.c.bf16 %v1358, %v1350
        %v1367 = vpack.c.bf16 %v1359, %v1351
        %v1368 = vpack.c.bf16 %v1360, %v1352
        %v1369 = vpack.c.bf16 %v1361, %v1353
        %v1370 = vpack.c.bf16 %v1362, %v1354
        %v1371 = vpack.c.bf16 %v1363, %v1355
        %v1372 = vpack.c.bf16 %v1364, %v1356
        %v1373 = vpack.c.bf16 %v1365, %v1357
        %v1374 = vld [vmem:[#allocation8] sm:$0xff]
        %v1375 = vld [vmem:[#allocation8 + $0x8] sm:$0xff]
        %v1376 = vld [vmem:[#allocation8 + $0x10] sm:$0xff]
        %v1377 = vld [vmem:[#allocation8 + $0x18] sm:$0xff]
        %v1378 = vld [vmem:[#allocation8 + $0x20] sm:$0xff]
        %v1379 = vld [vmem:[#allocation8 + $0x28] sm:$0xff]
        %v1380 = vld [vmem:[#allocation8 + $0x30] sm:$0xff]
        %v1381 = vld [vmem:[#allocation8 + $0x38] sm:$0xff]
        %v1382 = vld [vmem:[#allocation8 + $0x40] sm:$0xff]
        %v1383 = vld [vmem:[#allocation8 + $0x48] sm:$0xff]
        %v1384 = vld [vmem:[#allocation8 + $0x50] sm:$0xff]
        %v1385 = vld [vmem:[#allocation8 + $0x58] sm:$0xff]
        %v1386 = vld [vmem:[#allocation8 + $0x60] sm:$0xff]
        %v1387 = vld [vmem:[#allocation8 + $0x68] sm:$0xff]
        %v1388 = vld [vmem:[#allocation8 + $0x70] sm:$0xff]
        %v1389 = vld [vmem:[#allocation8 + $0x78] sm:$0xff]
        %v1390 = vld [vmem:[#allocation8 + $0x80] sm:$0xff]
        %v1391 = vld [vmem:[#allocation8 + $0x88] sm:$0xff]
        %v1392 = vld [vmem:[#allocation8 + $0x90] sm:$0xff]
        %v1393 = vld [vmem:[#allocation8 + $0x98] sm:$0xff]
        %v1394 = vld [vmem:[#allocation8 + $0xa0] sm:$0xff]
        %v1395 = vld [vmem:[#allocation8 + $0xa8] sm:$0xff]
        %v1396 = vld [vmem:[#allocation8 + $0xb0] sm:$0xff]
        %v1397 = vld [vmem:[#allocation8 + $0xb8] sm:$0xff]
        %v1398 = vld [vmem:[#allocation8 + $0xc0] sm:$0xff]
        %v1399 = vld [vmem:[#allocation8 + $0xc8] sm:$0xff]
        %v1400 = vld [vmem:[#allocation8 + $0xd0] sm:$0xff]
        %v1401 = vld [vmem:[#allocation8 + $0xd8] sm:$0xff]
        %v1402 = vld [vmem:[#allocation8 + $0xe0] sm:$0xff]
        %v1403 = vld [vmem:[#allocation8 + $0xe8] sm:$0xff]
        %v1404 = vld [vmem:[#allocation8 + $0xf0] sm:$0xff]
        %v1405 = vld [vmem:[#allocation8 + $0xf8] sm:$0xff]
        %v1406 = vld [vmem:[#allocation8 + $0x100] sm:$0xff]
        %v1407 = vld [vmem:[#allocation8 + $0x108] sm:$0xff]
        %v1408 = vld [vmem:[#allocation8 + $0x110] sm:$0xff]
        %v1409 = vld [vmem:[#allocation8 + $0x118] sm:$0xff]
        %v1410 = vld [vmem:[#allocation8 + $0x120] sm:$0xff]
        %v1411 = vld [vmem:[#allocation8 + $0x128] sm:$0xff]
        %v1412 = vld [vmem:[#allocation8 + $0x130] sm:$0xff]
        %v1413 = vld [vmem:[#allocation8 + $0x138] sm:$0xff]
        %v1414 = vld [vmem:[#allocation8 + $0x140] sm:$0xff]
        %v1415 = vld [vmem:[#allocation8 + $0x148] sm:$0xff]
        %v1416 = vld [vmem:[#allocation8 + $0x150] sm:$0xff]
        %v1417 = vld [vmem:[#allocation8 + $0x158] sm:$0xff]
        %v1418 = vld [vmem:[#allocation8 + $0x160] sm:$0xff]
        %v1419 = vld [vmem:[#allocation8 + $0x168] sm:$0xff]
        %v1420 = vld [vmem:[#allocation8 + $0x170] sm:$0xff]
        %v1421 = vld [vmem:[#allocation8 + $0x178] sm:$0xff]
        %v1422 = vld [vmem:[#allocation8 + $0x180] sm:$0xff]
        %v1423 = vld [vmem:[#allocation8 + $0x188] sm:$0xff]
        %v1424 = vld [vmem:[#allocation8 + $0x190] sm:$0xff]
        %v1425 = vld [vmem:[#allocation8 + $0x198] sm:$0xff]
        %v1426 = vld [vmem:[#allocation8 + $0x1a0] sm:$0xff]
        %v1427 = vld [vmem:[#allocation8 + $0x1a8] sm:$0xff]
        %v1428 = vld [vmem:[#allocation8 + $0x1b0] sm:$0xff]
        %v1429 = vld [vmem:[#allocation8 + $0x1b8] sm:$0xff]
        %v1430 = vld [vmem:[#allocation8 + $0x1c0] sm:$0xff]
        %v1431 = vld [vmem:[#allocation8 + $0x1c8] sm:$0xff]
        %v1432 = vld [vmem:[#allocation8 + $0x1d0] sm:$0xff]
        %v1433 = vld [vmem:[#allocation8 + $0x1d8] sm:$0xff]
        %v1434 = vld [vmem:[#allocation8 + $0x1e0] sm:$0xff]
        %v1435 = vld [vmem:[#allocation8 + $0x1e8] sm:$0xff]
        %v1436 = vld [vmem:[#allocation8 + $0x1f0] sm:$0xff]
        %v1437 = vld [vmem:[#allocation8 + $0x1f8] sm:$0xff]
        %v1438 = vld [vmem:[#allocation8 + $0x200] sm:$0xff]
        %v1439 = vld [vmem:[#allocation8 + $0x208] sm:$0xff]
        %v1440 = vld [vmem:[#allocation8 + $0x210] sm:$0xff]
        %v1441 = vld [vmem:[#allocation8 + $0x218] sm:$0xff]
        %v1442 = vld [vmem:[#allocation8 + $0x220] sm:$0xff]
        %v1443 = vld [vmem:[#allocation8 + $0x228] sm:$0xff]
        %v1444 = vld [vmem:[#allocation8 + $0x230] sm:$0xff]
        %v1445 = vld [vmem:[#allocation8 + $0x238] sm:$0xff]
        %v1446 = vld [vmem:[#allocation8 + $0x240] sm:$0xff]
        %v1447 = vld [vmem:[#allocation8 + $0x248] sm:$0xff]
        %v1448 = vld [vmem:[#allocation8 + $0x250] sm:$0xff]
        %v1449 = vld [vmem:[#allocation8 + $0x258] sm:$0xff]
        %v1450 = vld [vmem:[#allocation8 + $0x260] sm:$0xff]
        %v1451 = vld [vmem:[#allocation8 + $0x268] sm:$0xff]
        %v1452 = vld [vmem:[#allocation8 + $0x270] sm:$0xff]
        %v1453 = vld [vmem:[#allocation8 + $0x278] sm:$0xff]
        %v1454 = vld [vmem:[#allocation8 + $0x280] sm:$0xff]
        %v1455 = vld [vmem:[#allocation8 + $0x288] sm:$0xff]
        %v1456 = vld [vmem:[#allocation8 + $0x290] sm:$0xff]
        %v1457 = vld [vmem:[#allocation8 + $0x298] sm:$0xff]
        %v1458 = vld [vmem:[#allocation8 + $0x2a0] sm:$0xff]
        %v1459 = vld [vmem:[#allocation8 + $0x2a8] sm:$0xff]
        %v1460 = vld [vmem:[#allocation8 + $0x2b0] sm:$0xff]
        %v1461 = vld [vmem:[#allocation8 + $0x2b8] sm:$0xff]
        %v1462 = vld [vmem:[#allocation8 + $0x2c0] sm:$0xff]
        %v1463 = vld [vmem:[#allocation8 + $0x2c8] sm:$0xff]
        %v1464 = vld [vmem:[#allocation8 + $0x2d0] sm:$0xff]
        %v1465 = vld [vmem:[#allocation8 + $0x2d8] sm:$0xff]
        %v1466 = vld [vmem:[#allocation8 + $0x2e0] sm:$0xff]
        %v1467 = vld [vmem:[#allocation8 + $0x2e8] sm:$0xff]
        %v1468 = vld [vmem:[#allocation8 + $0x2f0] sm:$0xff]
        %v1469 = vld [vmem:[#allocation8 + $0x2f8] sm:$0xff]
        %v1470 = vld [vmem:[#allocation8 + $0x300] sm:$0xff]
        %v1471 = vld [vmem:[#allocation8 + $0x308] sm:$0xff]
        %v1472 = vld [vmem:[#allocation8 + $0x310] sm:$0xff]
        %v1473 = vld [vmem:[#allocation8 + $0x318] sm:$0xff]
        %v1474 = vld [vmem:[#allocation8 + $0x320] sm:$0xff]
        %v1475 = vld [vmem:[#allocation8 + $0x328] sm:$0xff]
        %v1476 = vld [vmem:[#allocation8 + $0x330] sm:$0xff]
        %v1477 = vld [vmem:[#allocation8 + $0x338] sm:$0xff]
        %v1478 = vld [vmem:[#allocation8 + $0x340] sm:$0xff]
        %v1479 = vld [vmem:[#allocation8 + $0x348] sm:$0xff]
        %v1480 = vld [vmem:[#allocation8 + $0x350] sm:$0xff]
        %v1481 = vld [vmem:[#allocation8 + $0x358] sm:$0xff]
        %v1482 = vld [vmem:[#allocation8 + $0x360] sm:$0xff]
        %v1483 = vld [vmem:[#allocation8 + $0x368] sm:$0xff]
        %v1484 = vld [vmem:[#allocation8 + $0x370] sm:$0xff]
        %v1485 = vld [vmem:[#allocation8 + $0x378] sm:$0xff]
        %v1486 = vld [vmem:[#allocation8 + $0x380] sm:$0xff]
        %v1487 = vld [vmem:[#allocation8 + $0x388] sm:$0xff]
        %v1488 = vld [vmem:[#allocation8 + $0x390] sm:$0xff]
        %v1489 = vld [vmem:[#allocation8 + $0x398] sm:$0xff]
        %v1490 = vld [vmem:[#allocation8 + $0x3a0] sm:$0xff]
        %v1491 = vld [vmem:[#allocation8 + $0x3a8] sm:$0xff]
        %v1492 = vld [vmem:[#allocation8 + $0x3b0] sm:$0xff]
        %v1493 = vld [vmem:[#allocation8 + $0x3b8] sm:$0xff]
        %v1494 = vld [vmem:[#allocation8 + $0x3c0] sm:$0xff]
        %v1495 = vld [vmem:[#allocation8 + $0x3c8] sm:$0xff]
        %v1496 = vld [vmem:[#allocation8 + $0x3d0] sm:$0xff]
        %v1497 = vld [vmem:[#allocation8 + $0x3d8] sm:$0xff]
        %v1498 = vld [vmem:[#allocation8 + $0x3e0] sm:$0xff]
        %v1499 = vld [vmem:[#allocation8 + $0x3e8] sm:$0xff]
        %v1500 = vld [vmem:[#allocation8 + $0x3f0] sm:$0xff]
        %v1501 = vld [vmem:[#allocation8 + $0x3f8] sm:$0xff]
        %v1502 = vld [vmem:[#allocation8 + $0x400] sm:$0xff]
        %v1503 = vld [vmem:[#allocation8 + $0x408] sm:$0xff]
        %v1504 = vld [vmem:[#allocation8 + $0x410] sm:$0xff]
        %v1505 = vld [vmem:[#allocation8 + $0x418] sm:$0xff]
        %v1506 = vld [vmem:[#allocation8 + $0x420] sm:$0xff]
        %v1507 = vld [vmem:[#allocation8 + $0x428] sm:$0xff]
        %v1508 = vld [vmem:[#allocation8 + $0x430] sm:$0xff]
        %v1509 = vld [vmem:[#allocation8 + $0x438] sm:$0xff]
        %v1510 = vld [vmem:[#allocation8 + $0x440] sm:$0xff]
        %v1511 = vld [vmem:[#allocation8 + $0x448] sm:$0xff]
        %v1512 = vld [vmem:[#allocation8 + $0x450] sm:$0xff]
        %v1513 = vld [vmem:[#allocation8 + $0x458] sm:$0xff]
        %v1514 = vld [vmem:[#allocation8 + $0x460] sm:$0xff]
        %v1515 = vld [vmem:[#allocation8 + $0x468] sm:$0xff]
        %v1516 = vld [vmem:[#allocation8 + $0x470] sm:$0xff]
        %v1517 = vld [vmem:[#allocation8 + $0x478] sm:$0xff]
        %v1518 = vld [vmem:[#allocation8 + $0x480] sm:$0xff]
        %v1519 = vld [vmem:[#allocation8 + $0x488] sm:$0xff]
        %v1520 = vld [vmem:[#allocation8 + $0x490] sm:$0xff]
        %v1521 = vld [vmem:[#allocation8 + $0x498] sm:$0xff]
        %v1522 = vld [vmem:[#allocation8 + $0x4a0] sm:$0xff]
        %v1523 = vld [vmem:[#allocation8 + $0x4a8] sm:$0xff]
        %v1524 = vld [vmem:[#allocation8 + $0x4b0] sm:$0xff]
        %v1525 = vld [vmem:[#allocation8 + $0x4b8] sm:$0xff]
        %v1526 = vld [vmem:[#allocation8 + $0x4c0] sm:$0xff]
        %v1527 = vld [vmem:[#allocation8 + $0x4c8] sm:$0xff]
        %v1528 = vld [vmem:[#allocation8 + $0x4d0] sm:$0xff]
        %v1529 = vld [vmem:[#allocation8 + $0x4d8] sm:$0xff]
        %v1530 = vld [vmem:[#allocation8 + $0x4e0] sm:$0xff]
        %v1531 = vld [vmem:[#allocation8 + $0x4e8] sm:$0xff]
        %v1532 = vld [vmem:[#allocation8 + $0x4f0] sm:$0xff]
        %v1533 = vld [vmem:[#allocation8 + $0x4f8] sm:$0xff]
        %v1534 = vld [vmem:[#allocation8 + $0x500] sm:$0xff]
        %v1535 = vld [vmem:[#allocation8 + $0x508] sm:$0xff]
        %v1536 = vld [vmem:[#allocation8 + $0x510] sm:$0xff]
        %v1537 = vld [vmem:[#allocation8 + $0x518] sm:$0xff]
        %v1538 = vld [vmem:[#allocation8 + $0x520] sm:$0xff]
        %v1539 = vld [vmem:[#allocation8 + $0x528] sm:$0xff]
        %v1540 = vld [vmem:[#allocation8 + $0x530] sm:$0xff]
        %v1541 = vld [vmem:[#allocation8 + $0x538] sm:$0xff]
        %v1542 = vld [vmem:[#allocation8 + $0x540] sm:$0xff]
        %v1543 = vld [vmem:[#allocation8 + $0x548] sm:$0xff]
        %v1544 = vld [vmem:[#allocation8 + $0x550] sm:$0xff]
        %v1545 = vld [vmem:[#allocation8 + $0x558] sm:$0xff]
        %v1546 = vld [vmem:[#allocation8 + $0x560] sm:$0xff]
        %v1547 = vld [vmem:[#allocation8 + $0x568] sm:$0xff]
        %v1548 = vld [vmem:[#allocation8 + $0x570] sm:$0xff]
        %v1549 = vld [vmem:[#allocation8 + $0x578] sm:$0xff]
        %v1550 = vld [vmem:[#allocation8 + $0x580] sm:$0xff]
        %v1551 = vld [vmem:[#allocation8 + $0x588] sm:$0xff]
        %v1552 = vld [vmem:[#allocation8 + $0x590] sm:$0xff]
        %v1553 = vld [vmem:[#allocation8 + $0x598] sm:$0xff]
        %v1554 = vld [vmem:[#allocation8 + $0x5a0] sm:$0xff]
        %v1555 = vld [vmem:[#allocation8 + $0x5a8] sm:$0xff]
        %v1556 = vld [vmem:[#allocation8 + $0x5b0] sm:$0xff]
        %v1557 = vld [vmem:[#allocation8 + $0x5b8] sm:$0xff]
        %v1558 = vld [vmem:[#allocation8 + $0x5c0] sm:$0xff]
        %v1559 = vld [vmem:[#allocation8 + $0x5c8] sm:$0xff]
        %v1560 = vld [vmem:[#allocation8 + $0x5d0] sm:$0xff]
        %v1561 = vld [vmem:[#allocation8 + $0x5d8] sm:$0xff]
        %v1562 = vld [vmem:[#allocation8 + $0x5e0] sm:$0xff]
        %v1563 = vld [vmem:[#allocation8 + $0x5e8] sm:$0xff]
        %v1564 = vld [vmem:[#allocation8 + $0x5f0] sm:$0xff]
        %v1565 = vld [vmem:[#allocation8 + $0x5f8] sm:$0xff]
        %v1566 = vld [vmem:[#allocation8 + $0x600] sm:$0xff]
        %v1567 = vld [vmem:[#allocation8 + $0x608] sm:$0xff]
        %v1568 = vld [vmem:[#allocation8 + $0x610] sm:$0xff]
        %v1569 = vld [vmem:[#allocation8 + $0x618] sm:$0xff]
        %v1570 = vld [vmem:[#allocation8 + $0x620] sm:$0xff]
        %v1571 = vld [vmem:[#allocation8 + $0x628] sm:$0xff]
        %v1572 = vld [vmem:[#allocation8 + $0x630] sm:$0xff]
        %v1573 = vld [vmem:[#allocation8 + $0x638] sm:$0xff]
        %v1574 = vld [vmem:[#allocation8 + $0x640] sm:$0xff]
        %v1575 = vld [vmem:[#allocation8 + $0x648] sm:$0xff]
        %v1576 = vld [vmem:[#allocation8 + $0x650] sm:$0xff]
        %v1577 = vld [vmem:[#allocation8 + $0x658] sm:$0xff]
        %v1578 = vld [vmem:[#allocation8 + $0x660] sm:$0xff]
        %v1579 = vld [vmem:[#allocation8 + $0x668] sm:$0xff]
        %v1580 = vld [vmem:[#allocation8 + $0x670] sm:$0xff]
        %v1581 = vld [vmem:[#allocation8 + $0x678] sm:$0xff]
        %v1582 = vld [vmem:[#allocation8 + $0x680] sm:$0xff]
        %v1583 = vld [vmem:[#allocation8 + $0x688] sm:$0xff]
        %v1584 = vld [vmem:[#allocation8 + $0x690] sm:$0xff]
        %v1585 = vld [vmem:[#allocation8 + $0x698] sm:$0xff]
        %v1586 = vld [vmem:[#allocation8 + $0x6a0] sm:$0xff]
        %v1587 = vld [vmem:[#allocation8 + $0x6a8] sm:$0xff]
        %v1588 = vld [vmem:[#allocation8 + $0x6b0] sm:$0xff]
        %v1589 = vld [vmem:[#allocation8 + $0x6b8] sm:$0xff]
        %v1590 = vld [vmem:[#allocation8 + $0x6c0] sm:$0xff]
        %v1591 = vld [vmem:[#allocation8 + $0x6c8] sm:$0xff]
        %v1592 = vld [vmem:[#allocation8 + $0x6d0] sm:$0xff]
        %v1593 = vld [vmem:[#allocation8 + $0x6d8] sm:$0xff]
        %v1594 = vld [vmem:[#allocation8 + $0x6e0] sm:$0xff]
        %v1595 = vld [vmem:[#allocation8 + $0x6e8] sm:$0xff]
        %v1596 = vld [vmem:[#allocation8 + $0x6f0] sm:$0xff]
        %v1597 = vld [vmem:[#allocation8 + $0x6f8] sm:$0xff]
        %v1598 = vld [vmem:[#allocation8 + $0x700] sm:$0xff]
        %v1599 = vld [vmem:[#allocation8 + $0x708] sm:$0xff]
        %v1600 = vld [vmem:[#allocation8 + $0x710] sm:$0xff]
        %v1601 = vld [vmem:[#allocation8 + $0x718] sm:$0xff]
        %v1602 = vld [vmem:[#allocation8 + $0x720] sm:$0xff]
        %v1603 = vld [vmem:[#allocation8 + $0x728] sm:$0xff]
        %v1604 = vld [vmem:[#allocation8 + $0x730] sm:$0xff]
        %v1605 = vld [vmem:[#allocation8 + $0x738] sm:$0xff]
        %v1606 = vld [vmem:[#allocation8 + $0x740] sm:$0xff]
        %v1607 = vld [vmem:[#allocation8 + $0x748] sm:$0xff]
        %v1608 = vld [vmem:[#allocation8 + $0x750] sm:$0xff]
        %v1609 = vld [vmem:[#allocation8 + $0x758] sm:$0xff]
        %v1610 = vld [vmem:[#allocation8 + $0x760] sm:$0xff]
        %v1611 = vld [vmem:[#allocation8 + $0x768] sm:$0xff]
        %v1612 = vld [vmem:[#allocation8 + $0x770] sm:$0xff]
        %v1613 = vld [vmem:[#allocation8 + $0x778] sm:$0xff]
        %v1614 = vld [vmem:[#allocation8 + $0x780] sm:$0xff]
        %v1615 = vld [vmem:[#allocation8 + $0x788] sm:$0xff]
        %v1616 = vld [vmem:[#allocation8 + $0x790] sm:$0xff]
        %v1617 = vld [vmem:[#allocation8 + $0x798] sm:$0xff]
        %v1618 = vld [vmem:[#allocation8 + $0x7a0] sm:$0xff]
        %v1619 = vld [vmem:[#allocation8 + $0x7a8] sm:$0xff]
        %v1620 = vld [vmem:[#allocation8 + $0x7b0] sm:$0xff]
        %v1621 = vld [vmem:[#allocation8 + $0x7b8] sm:$0xff]
        %v1622 = vld [vmem:[#allocation8 + $0x7c0] sm:$0xff]
        %v1623 = vld [vmem:[#allocation8 + $0x7c8] sm:$0xff]
        %v1624 = vld [vmem:[#allocation8 + $0x7d0] sm:$0xff]
        %v1625 = vld [vmem:[#allocation8 + $0x7d8] sm:$0xff]
        %v1626 = vld [vmem:[#allocation8 + $0x7e0] sm:$0xff]
        %v1627 = vld [vmem:[#allocation8 + $0x7e8] sm:$0xff]
        %v1628 = vld [vmem:[#allocation8 + $0x7f0] sm:$0xff]
        %v1629 = vld [vmem:[#allocation8 + $0x7f8] sm:$0xff]
        %v1630 = vld [vmem:[%s4] sm:$0xf]
        %v1632 = vlaneseq
        %v1633 = vshrl.u32 %v1632, 7
        %v1634 = vsub.s32 0, %v1633
        %v1635 = vrot.slane %v1630, %v1634
        %v1636 = vlaneseq
        %v1637 = vshrl.u32 %v1636, 7
        %v1638 = vsub.s32 1, %v1637
        %v1639 = vrot.slane %v1630, %v1638
        %v1640 = vlaneseq
        %v1641 = vshrl.u32 %v1640, 7
        %v1642 = vsub.s32 2, %v1641
        %v1643 = vrot.slane %v1630, %v1642
        %v1644 = vlaneseq
        %v1645 = vshrl.u32 %v1644, 7
        %v1646 = vsub.s32 3, %v1645
        %v1647 = vrot.slane %v1630, %v1646
        %v1908 = vunpack.c.l.b16 %v1374
        %v1909 = vunpack.c.h.b16 %v1374
        %v1910 = vunpack.c.l.b16 %v1375
        %v1911 = vunpack.c.h.b16 %v1375
        %v1912 = vunpack.c.l.b16 %v1376
        %v1913 = vunpack.c.h.b16 %v1376
        %v1914 = vunpack.c.l.b16 %v1377
        %v1915 = vunpack.c.h.b16 %v1377
        %v1916 = vunpack.c.l.b16 %v1378
        %v1917 = vunpack.c.h.b16 %v1378
        %v1918 = vunpack.c.l.b16 %v1379
        %v1919 = vunpack.c.h.b16 %v1379
        %v1920 = vunpack.c.l.b16 %v1380
        %v1921 = vunpack.c.h.b16 %v1380
        %v1922 = vunpack.c.l.b16 %v1381
        %v1923 = vunpack.c.h.b16 %v1381
        %v1924 = vunpack.c.l.b16 %v1382
        %v1925 = vunpack.c.h.b16 %v1382
        %v1926 = vunpack.c.l.b16 %v1383
        %v1927 = vunpack.c.h.b16 %v1383
        %v1928 = vunpack.c.l.b16 %v1384
        %v1929 = vunpack.c.h.b16 %v1384
        %v1930 = vunpack.c.l.b16 %v1385
        %v1931 = vunpack.c.h.b16 %v1385
        %v1932 = vunpack.c.l.b16 %v1386
        %v1933 = vunpack.c.h.b16 %v1386
        %v1934 = vunpack.c.l.b16 %v1387
        %v1935 = vunpack.c.h.b16 %v1387
        %v1936 = vunpack.c.l.b16 %v1388
        %v1937 = vunpack.c.h.b16 %v1388
        %v1938 = vunpack.c.l.b16 %v1389
        %v1939 = vunpack.c.h.b16 %v1389
        %v1940 = vunpack.c.l.b16 %v1390
        %v1941 = vunpack.c.h.b16 %v1390
        %v1942 = vunpack.c.l.b16 %v1391
        %v1943 = vunpack.c.h.b16 %v1391
        %v1944 = vunpack.c.l.b16 %v1392
        %v1945 = vunpack.c.h.b16 %v1392
        %v1946 = vunpack.c.l.b16 %v1393
        %v1947 = vunpack.c.h.b16 %v1393
        %v1948 = vunpack.c.l.b16 %v1394
        %v1949 = vunpack.c.h.b16 %v1394
        %v1950 = vunpack.c.l.b16 %v1395
        %v1951 = vunpack.c.h.b16 %v1395
        %v1952 = vunpack.c.l.b16 %v1396
        %v1953 = vunpack.c.h.b16 %v1396
        %v1954 = vunpack.c.l.b16 %v1397
        %v1955 = vunpack.c.h.b16 %v1397
        %v1956 = vunpack.c.l.b16 %v1398
        %v1957 = vunpack.c.h.b16 %v1398
        %v1958 = vunpack.c.l.b16 %v1399
        %v1959 = vunpack.c.h.b16 %v1399
        %v1960 = vunpack.c.l.b16 %v1400
        %v1961 = vunpack.c.h.b16 %v1400
        %v1962 = vunpack.c.l.b16 %v1401
        %v1963 = vunpack.c.h.b16 %v1401
        %v1964 = vunpack.c.l.b16 %v1402
        %v1965 = vunpack.c.h.b16 %v1402
        %v1966 = vunpack.c.l.b16 %v1403
        %v1967 = vunpack.c.h.b16 %v1403
        %v1968 = vunpack.c.l.b16 %v1404
        %v1969 = vunpack.c.h.b16 %v1404
        %v1970 = vunpack.c.l.b16 %v1405
        %v1971 = vunpack.c.h.b16 %v1405
        %v1972 = vunpack.c.l.b16 %v1406
        %v1973 = vunpack.c.h.b16 %v1406
        %v1974 = vunpack.c.l.b16 %v1407
        %v1975 = vunpack.c.h.b16 %v1407
        %v1976 = vunpack.c.l.b16 %v1408
        %v1977 = vunpack.c.h.b16 %v1408
        %v1978 = vunpack.c.l.b16 %v1409
        %v1979 = vunpack.c.h.b16 %v1409
        %v1980 = vunpack.c.l.b16 %v1410
        %v1981 = vunpack.c.h.b16 %v1410
        %v1982 = vunpack.c.l.b16 %v1411
        %v1983 = vunpack.c.h.b16 %v1411
        %v1984 = vunpack.c.l.b16 %v1412
        %v1985 = vunpack.c.h.b16 %v1412
        %v1986 = vunpack.c.l.b16 %v1413
        %v1987 = vunpack.c.h.b16 %v1413
        %v1988 = vunpack.c.l.b16 %v1414
        %v1989 = vunpack.c.h.b16 %v1414
        %v1990 = vunpack.c.l.b16 %v1415
        %v1991 = vunpack.c.h.b16 %v1415
        %v1992 = vunpack.c.l.b16 %v1416
        %v1993 = vunpack.c.h.b16 %v1416
        %v1994 = vunpack.c.l.b16 %v1417
        %v1995 = vunpack.c.h.b16 %v1417
        %v1996 = vunpack.c.l.b16 %v1418
        %v1997 = vunpack.c.h.b16 %v1418
        %v1998 = vunpack.c.l.b16 %v1419
        %v1999 = vunpack.c.h.b16 %v1419
        %v2000 = vunpack.c.l.b16 %v1420
        %v2001 = vunpack.c.h.b16 %v1420
        %v2002 = vunpack.c.l.b16 %v1421
        %v2003 = vunpack.c.h.b16 %v1421
        %v2004 = vunpack.c.l.b16 %v1422
        %v2005 = vunpack.c.h.b16 %v1422
        %v2006 = vunpack.c.l.b16 %v1423
        %v2007 = vunpack.c.h.b16 %v1423
        %v2008 = vunpack.c.l.b16 %v1424
        %v2009 = vunpack.c.h.b16 %v1424
        %v2010 = vunpack.c.l.b16 %v1425
        %v2011 = vunpack.c.h.b16 %v1425
        %v2012 = vunpack.c.l.b16 %v1426
        %v2013 = vunpack.c.h.b16 %v1426
        %v2014 = vunpack.c.l.b16 %v1427
        %v2015 = vunpack.c.h.b16 %v1427
        %v2016 = vunpack.c.l.b16 %v1428
        %v2017 = vunpack.c.h.b16 %v1428
        %v2018 = vunpack.c.l.b16 %v1429
        %v2019 = vunpack.c.h.b16 %v1429
        %v2020 = vunpack.c.l.b16 %v1430
        %v2021 = vunpack.c.h.b16 %v1430
        %v2022 = vunpack.c.l.b16 %v1431
        %v2023 = vunpack.c.h.b16 %v1431
        %v2024 = vunpack.c.l.b16 %v1432
        %v2025 = vunpack.c.h.b16 %v1432
        %v2026 = vunpack.c.l.b16 %v1433
        %v2027 = vunpack.c.h.b16 %v1433
        %v2028 = vunpack.c.l.b16 %v1434
        %v2029 = vunpack.c.h.b16 %v1434
        %v2030 = vunpack.c.l.b16 %v1435
        %v2031 = vunpack.c.h.b16 %v1435
        %v2032 = vunpack.c.l.b16 %v1436
        %v2033 = vunpack.c.h.b16 %v1436
        %v2034 = vunpack.c.l.b16 %v1437
        %v2035 = vunpack.c.h.b16 %v1437
        %v2036 = vunpack.c.l.b16 %v1438
        %v2037 = vunpack.c.h.b16 %v1438
        %v2038 = vunpack.c.l.b16 %v1439
        %v2039 = vunpack.c.h.b16 %v1439
        %v2040 = vunpack.c.l.b16 %v1440
        %v2041 = vunpack.c.h.b16 %v1440
        %v2042 = vunpack.c.l.b16 %v1441
        %v2043 = vunpack.c.h.b16 %v1441
        %v2044 = vunpack.c.l.b16 %v1442
        %v2045 = vunpack.c.h.b16 %v1442
        %v2046 = vunpack.c.l.b16 %v1443
        %v2047 = vunpack.c.h.b16 %v1443
        %v2048 = vunpack.c.l.b16 %v1444
        %v2049 = vunpack.c.h.b16 %v1444
        %v2050 = vunpack.c.l.b16 %v1445
        %v2051 = vunpack.c.h.b16 %v1445
        %v2052 = vunpack.c.l.b16 %v1446
        %v2053 = vunpack.c.h.b16 %v1446
        %v2054 = vunpack.c.l.b16 %v1447
        %v2055 = vunpack.c.h.b16 %v1447
        %v2056 = vunpack.c.l.b16 %v1448
        %v2057 = vunpack.c.h.b16 %v1448
        %v2058 = vunpack.c.l.b16 %v1449
        %v2059 = vunpack.c.h.b16 %v1449
        %v2060 = vunpack.c.l.b16 %v1450
        %v2061 = vunpack.c.h.b16 %v1450
        %v2062 = vunpack.c.l.b16 %v1451
        %v2063 = vunpack.c.h.b16 %v1451
        %v2064 = vunpack.c.l.b16 %v1452
        %v2065 = vunpack.c.h.b16 %v1452
        %v2066 = vunpack.c.l.b16 %v1453
        %v2067 = vunpack.c.h.b16 %v1453
        %v2068 = vunpack.c.l.b16 %v1454
        %v2069 = vunpack.c.h.b16 %v1454
        %v2070 = vunpack.c.l.b16 %v1455
        %v2071 = vunpack.c.h.b16 %v1455
        %v2072 = vunpack.c.l.b16 %v1456
        %v2073 = vunpack.c.h.b16 %v1456
        %v2074 = vunpack.c.l.b16 %v1457
        %v2075 = vunpack.c.h.b16 %v1457
        %v2076 = vunpack.c.l.b16 %v1458
        %v2077 = vunpack.c.h.b16 %v1458
        %v2078 = vunpack.c.l.b16 %v1459
        %v2079 = vunpack.c.h.b16 %v1459
        %v2080 = vunpack.c.l.b16 %v1460
        %v2081 = vunpack.c.h.b16 %v1460
        %v2082 = vunpack.c.l.b16 %v1461
        %v2083 = vunpack.c.h.b16 %v1461
        %v2084 = vunpack.c.l.b16 %v1462
        %v2085 = vunpack.c.h.b16 %v1462
        %v2086 = vunpack.c.l.b16 %v1463
        %v2087 = vunpack.c.h.b16 %v1463
        %v2088 = vunpack.c.l.b16 %v1464
        %v2089 = vunpack.c.h.b16 %v1464
        %v2090 = vunpack.c.l.b16 %v1465
        %v2091 = vunpack.c.h.b16 %v1465
        %v2092 = vunpack.c.l.b16 %v1466
        %v2093 = vunpack.c.h.b16 %v1466
        %v2094 = vunpack.c.l.b16 %v1467
        %v2095 = vunpack.c.h.b16 %v1467
        %v2096 = vunpack.c.l.b16 %v1468
        %v2097 = vunpack.c.h.b16 %v1468
        %v2098 = vunpack.c.l.b16 %v1469
        %v2099 = vunpack.c.h.b16 %v1469
        %v2100 = vunpack.c.l.b16 %v1470
        %v2101 = vunpack.c.h.b16 %v1470
        %v2102 = vunpack.c.l.b16 %v1471
        %v2103 = vunpack.c.h.b16 %v1471
        %v2104 = vunpack.c.l.b16 %v1472
        %v2105 = vunpack.c.h.b16 %v1472
        %v2106 = vunpack.c.l.b16 %v1473
        %v2107 = vunpack.c.h.b16 %v1473
        %v2108 = vunpack.c.l.b16 %v1474
        %v2109 = vunpack.c.h.b16 %v1474
        %v2110 = vunpack.c.l.b16 %v1475
        %v2111 = vunpack.c.h.b16 %v1475
        %v2112 = vunpack.c.l.b16 %v1476
        %v2113 = vunpack.c.h.b16 %v1476
        %v2114 = vunpack.c.l.b16 %v1477
        %v2115 = vunpack.c.h.b16 %v1477
        %v2116 = vunpack.c.l.b16 %v1478
        %v2117 = vunpack.c.h.b16 %v1478
        %v2118 = vunpack.c.l.b16 %v1479
        %v2119 = vunpack.c.h.b16 %v1479
        %v2120 = vunpack.c.l.b16 %v1480
        %v2121 = vunpack.c.h.b16 %v1480
        %v2122 = vunpack.c.l.b16 %v1481
        %v2123 = vunpack.c.h.b16 %v1481
        %v2124 = vunpack.c.l.b16 %v1482
        %v2125 = vunpack.c.h.b16 %v1482
        %v2126 = vunpack.c.l.b16 %v1483
        %v2127 = vunpack.c.h.b16 %v1483
        %v2128 = vunpack.c.l.b16 %v1484
        %v2129 = vunpack.c.h.b16 %v1484
        %v2130 = vunpack.c.l.b16 %v1485
        %v2131 = vunpack.c.h.b16 %v1485
        %v2132 = vunpack.c.l.b16 %v1486
        %v2133 = vunpack.c.h.b16 %v1486
        %v2134 = vunpack.c.l.b16 %v1487
        %v2135 = vunpack.c.h.b16 %v1487
        %v2136 = vunpack.c.l.b16 %v1488
        %v2137 = vunpack.c.h.b16 %v1488
        %v2138 = vunpack.c.l.b16 %v1489
        %v2139 = vunpack.c.h.b16 %v1489
        %v2140 = vunpack.c.l.b16 %v1490
        %v2141 = vunpack.c.h.b16 %v1490
        %v2142 = vunpack.c.l.b16 %v1491
        %v2143 = vunpack.c.h.b16 %v1491
        %v2144 = vunpack.c.l.b16 %v1492
        %v2145 = vunpack.c.h.b16 %v1492
        %v2146 = vunpack.c.l.b16 %v1493
        %v2147 = vunpack.c.h.b16 %v1493
        %v2148 = vunpack.c.l.b16 %v1494
        %v2149 = vunpack.c.h.b16 %v1494
        %v2150 = vunpack.c.l.b16 %v1495
        %v2151 = vunpack.c.h.b16 %v1495
        %v2152 = vunpack.c.l.b16 %v1496
        %v2153 = vunpack.c.h.b16 %v1496
        %v2154 = vunpack.c.l.b16 %v1497
        %v2155 = vunpack.c.h.b16 %v1497
        %v2156 = vunpack.c.l.b16 %v1498
        %v2157 = vunpack.c.h.b16 %v1498
        %v2158 = vunpack.c.l.b16 %v1499
        %v2159 = vunpack.c.h.b16 %v1499
        %v2160 = vunpack.c.l.b16 %v1500
        %v2161 = vunpack.c.h.b16 %v1500
        %v2162 = vunpack.c.l.b16 %v1501
        %v2163 = vunpack.c.h.b16 %v1501
        %v2164 = vunpack.c.l.b16 %v1502
        %v2165 = vunpack.c.h.b16 %v1502
        %v2166 = vunpack.c.l.b16 %v1503
        %v2167 = vunpack.c.h.b16 %v1503
        %v2168 = vunpack.c.l.b16 %v1504
        %v2169 = vunpack.c.h.b16 %v1504
        %v2170 = vunpack.c.l.b16 %v1505
        %v2171 = vunpack.c.h.b16 %v1505
        %v2172 = vunpack.c.l.b16 %v1506
        %v2173 = vunpack.c.h.b16 %v1506
        %v2174 = vunpack.c.l.b16 %v1507
        %v2175 = vunpack.c.h.b16 %v1507
        %v2176 = vunpack.c.l.b16 %v1508
        %v2177 = vunpack.c.h.b16 %v1508
        %v2178 = vunpack.c.l.b16 %v1509
        %v2179 = vunpack.c.h.b16 %v1509
        %v2180 = vunpack.c.l.b16 %v1510
        %v2181 = vunpack.c.h.b16 %v1510
        %v2182 = vunpack.c.l.b16 %v1511
        %v2183 = vunpack.c.h.b16 %v1511
        %v2184 = vunpack.c.l.b16 %v1512
        %v2185 = vunpack.c.h.b16 %v1512
        %v2186 = vunpack.c.l.b16 %v1513
        %v2187 = vunpack.c.h.b16 %v1513
        %v2188 = vunpack.c.l.b16 %v1514
        %v2189 = vunpack.c.h.b16 %v1514
        %v2190 = vunpack.c.l.b16 %v1515
        %v2191 = vunpack.c.h.b16 %v1515
        %v2192 = vunpack.c.l.b16 %v1516
        %v2193 = vunpack.c.h.b16 %v1516
        %v2194 = vunpack.c.l.b16 %v1517
        %v2195 = vunpack.c.h.b16 %v1517
        %v2196 = vunpack.c.l.b16 %v1518
        %v2197 = vunpack.c.h.b16 %v1518
        %v2198 = vunpack.c.l.b16 %v1519
        %v2199 = vunpack.c.h.b16 %v1519
        %v2200 = vunpack.c.l.b16 %v1520
        %v2201 = vunpack.c.h.b16 %v1520
        %v2202 = vunpack.c.l.b16 %v1521
        %v2203 = vunpack.c.h.b16 %v1521
        %v2204 = vunpack.c.l.b16 %v1522
        %v2205 = vunpack.c.h.b16 %v1522
        %v2206 = vunpack.c.l.b16 %v1523
        %v2207 = vunpack.c.h.b16 %v1523
        %v2208 = vunpack.c.l.b16 %v1524
        %v2209 = vunpack.c.h.b16 %v1524
        %v2210 = vunpack.c.l.b16 %v1525
        %v2211 = vunpack.c.h.b16 %v1525
        %v2212 = vunpack.c.l.b16 %v1526
        %v2213 = vunpack.c.h.b16 %v1526
        %v2214 = vunpack.c.l.b16 %v1527
        %v2215 = vunpack.c.h.b16 %v1527
        %v2216 = vunpack.c.l.b16 %v1528
        %v2217 = vunpack.c.h.b16 %v1528
        %v2218 = vunpack.c.l.b16 %v1529
        %v2219 = vunpack.c.h.b16 %v1529
        %v2220 = vunpack.c.l.b16 %v1530
        %v2221 = vunpack.c.h.b16 %v1530
        %v2222 = vunpack.c.l.b16 %v1531
        %v2223 = vunpack.c.h.b16 %v1531
        %v2224 = vunpack.c.l.b16 %v1532
        %v2225 = vunpack.c.h.b16 %v1532
        %v2226 = vunpack.c.l.b16 %v1533
        %v2227 = vunpack.c.h.b16 %v1533
        %v2228 = vunpack.c.l.b16 %v1534
        %v2229 = vunpack.c.h.b16 %v1534
        %v2230 = vunpack.c.l.b16 %v1535
        %v2231 = vunpack.c.h.b16 %v1535
        %v2232 = vunpack.c.l.b16 %v1536
        %v2233 = vunpack.c.h.b16 %v1536
        %v2234 = vunpack.c.l.b16 %v1537
        %v2235 = vunpack.c.h.b16 %v1537
        %v2236 = vunpack.c.l.b16 %v1538
        %v2237 = vunpack.c.h.b16 %v1538
        %v2238 = vunpack.c.l.b16 %v1539
        %v2239 = vunpack.c.h.b16 %v1539
        %v2240 = vunpack.c.l.b16 %v1540
        %v2241 = vunpack.c.h.b16 %v1540
        %v2242 = vunpack.c.l.b16 %v1541
        %v2243 = vunpack.c.h.b16 %v1541
        %v2244 = vunpack.c.l.b16 %v1542
        %v2245 = vunpack.c.h.b16 %v1542
        %v2246 = vunpack.c.l.b16 %v1543
        %v2247 = vunpack.c.h.b16 %v1543
        %v2248 = vunpack.c.l.b16 %v1544
        %v2249 = vunpack.c.h.b16 %v1544
        %v2250 = vunpack.c.l.b16 %v1545
        %v2251 = vunpack.c.h.b16 %v1545
        %v2252 = vunpack.c.l.b16 %v1546
        %v2253 = vunpack.c.h.b16 %v1546
        %v2254 = vunpack.c.l.b16 %v1547
        %v2255 = vunpack.c.h.b16 %v1547
        %v2256 = vunpack.c.l.b16 %v1548
        %v2257 = vunpack.c.h.b16 %v1548
        %v2258 = vunpack.c.l.b16 %v1549
        %v2259 = vunpack.c.h.b16 %v1549
        %v2260 = vunpack.c.l.b16 %v1550
        %v2261 = vunpack.c.h.b16 %v1550
        %v2262 = vunpack.c.l.b16 %v1551
        %v2263 = vunpack.c.h.b16 %v1551
        %v2264 = vunpack.c.l.b16 %v1552
        %v2265 = vunpack.c.h.b16 %v1552
        %v2266 = vunpack.c.l.b16 %v1553
        %v2267 = vunpack.c.h.b16 %v1553
        %v2268 = vunpack.c.l.b16 %v1554
        %v2269 = vunpack.c.h.b16 %v1554
        %v2270 = vunpack.c.l.b16 %v1555
        %v2271 = vunpack.c.h.b16 %v1555
        %v2272 = vunpack.c.l.b16 %v1556
        %v2273 = vunpack.c.h.b16 %v1556
        %v2274 = vunpack.c.l.b16 %v1557
        %v2275 = vunpack.c.h.b16 %v1557
        %v2276 = vunpack.c.l.b16 %v1558
        %v2277 = vunpack.c.h.b16 %v1558
        %v2278 = vunpack.c.l.b16 %v1559
        %v2279 = vunpack.c.h.b16 %v1559
        %v2280 = vunpack.c.l.b16 %v1560
        %v2281 = vunpack.c.h.b16 %v1560
        %v2282 = vunpack.c.l.b16 %v1561
        %v2283 = vunpack.c.h.b16 %v1561
        %v2284 = vunpack.c.l.b16 %v1562
        %v2285 = vunpack.c.h.b16 %v1562
        %v2286 = vunpack.c.l.b16 %v1563
        %v2287 = vunpack.c.h.b16 %v1563
        %v2288 = vunpack.c.l.b16 %v1564
        %v2289 = vunpack.c.h.b16 %v1564
        %v2290 = vunpack.c.l.b16 %v1565
        %v2291 = vunpack.c.h.b16 %v1565
        %v2292 = vunpack.c.l.b16 %v1566
        %v2293 = vunpack.c.h.b16 %v1566
        %v2294 = vunpack.c.l.b16 %v1567
        %v2295 = vunpack.c.h.b16 %v1567
        %v2296 = vunpack.c.l.b16 %v1568
        %v2297 = vunpack.c.h.b16 %v1568
        %v2298 = vunpack.c.l.b16 %v1569
        %v2299 = vunpack.c.h.b16 %v1569
        %v2300 = vunpack.c.l.b16 %v1570
        %v2301 = vunpack.c.h.b16 %v1570
        %v2302 = vunpack.c.l.b16 %v1571
        %v2303 = vunpack.c.h.b16 %v1571
        %v2304 = vunpack.c.l.b16 %v1572
        %v2305 = vunpack.c.h.b16 %v1572
        %v2306 = vunpack.c.l.b16 %v1573
        %v2307 = vunpack.c.h.b16 %v1573
        %v2308 = vunpack.c.l.b16 %v1574
        %v2309 = vunpack.c.h.b16 %v1574
        %v2310 = vunpack.c.l.b16 %v1575
        %v2311 = vunpack.c.h.b16 %v1575
        %v2312 = vunpack.c.l.b16 %v1576
        %v2313 = vunpack.c.h.b16 %v1576
        %v2314 = vunpack.c.l.b16 %v1577
        %v2315 = vunpack.c.h.b16 %v1577
        %v2316 = vunpack.c.l.b16 %v1578
        %v2317 = vunpack.c.h.b16 %v1578
        %v2318 = vunpack.c.l.b16 %v1579
        %v2319 = vunpack.c.h.b16 %v1579
        %v2320 = vunpack.c.l.b16 %v1580
        %v2321 = vunpack.c.h.b16 %v1580
        %v2322 = vunpack.c.l.b16 %v1581
        %v2323 = vunpack.c.h.b16 %v1581
        %v2324 = vunpack.c.l.b16 %v1582
        %v2325 = vunpack.c.h.b16 %v1582
        %v2326 = vunpack.c.l.b16 %v1583
        %v2327 = vunpack.c.h.b16 %v1583
        %v2328 = vunpack.c.l.b16 %v1584
        %v2329 = vunpack.c.h.b16 %v1584
        %v2330 = vunpack.c.l.b16 %v1585
        %v2331 = vunpack.c.h.b16 %v1585
        %v2332 = vunpack.c.l.b16 %v1586
        %v2333 = vunpack.c.h.b16 %v1586
        %v2334 = vunpack.c.l.b16 %v1587
        %v2335 = vunpack.c.h.b16 %v1587
        %v2336 = vunpack.c.l.b16 %v1588
        %v2337 = vunpack.c.h.b16 %v1588
        %v2338 = vunpack.c.l.b16 %v1589
        %v2339 = vunpack.c.h.b16 %v1589
        %v2340 = vunpack.c.l.b16 %v1590
        %v2341 = vunpack.c.h.b16 %v1590
        %v2342 = vunpack.c.l.b16 %v1591
        %v2343 = vunpack.c.h.b16 %v1591
        %v2344 = vunpack.c.l.b16 %v1592
        %v2345 = vunpack.c.h.b16 %v1592
        %v2346 = vunpack.c.l.b16 %v1593
        %v2347 = vunpack.c.h.b16 %v1593
        %v2348 = vunpack.c.l.b16 %v1594
        %v2349 = vunpack.c.h.b16 %v1594
        %v2350 = vunpack.c.l.b16 %v1595
        %v2351 = vunpack.c.h.b16 %v1595
        %v2352 = vunpack.c.l.b16 %v1596
        %v2353 = vunpack.c.h.b16 %v1596
        %v2354 = vunpack.c.l.b16 %v1597
        %v2355 = vunpack.c.h.b16 %v1597
        %v2356 = vunpack.c.l.b16 %v1598
        %v2357 = vunpack.c.h.b16 %v1598
        %v2358 = vunpack.c.l.b16 %v1599
        %v2359 = vunpack.c.h.b16 %v1599
        %v2360 = vunpack.c.l.b16 %v1600
        %v2361 = vunpack.c.h.b16 %v1600
        %v2362 = vunpack.c.l.b16 %v1601
        %v2363 = vunpack.c.h.b16 %v1601
        %v2364 = vunpack.c.l.b16 %v1602
        %v2365 = vunpack.c.h.b16 %v1602
        %v2366 = vunpack.c.l.b16 %v1603
        %v2367 = vunpack.c.h.b16 %v1603
        %v2368 = vunpack.c.l.b16 %v1604
        %v2369 = vunpack.c.h.b16 %v1604
        %v2370 = vunpack.c.l.b16 %v1605
        %v2371 = vunpack.c.h.b16 %v1605
        %v2372 = vunpack.c.l.b16 %v1606
        %v2373 = vunpack.c.h.b16 %v1606
        %v2374 = vunpack.c.l.b16 %v1607
        %v2375 = vunpack.c.h.b16 %v1607
        %v2376 = vunpack.c.l.b16 %v1608
        %v2377 = vunpack.c.h.b16 %v1608
        %v2378 = vunpack.c.l.b16 %v1609
        %v2379 = vunpack.c.h.b16 %v1609
        %v2380 = vunpack.c.l.b16 %v1610
        %v2381 = vunpack.c.h.b16 %v1610
        %v2382 = vunpack.c.l.b16 %v1611
        %v2383 = vunpack.c.h.b16 %v1611
        %v2384 = vunpack.c.l.b16 %v1612
        %v2385 = vunpack.c.h.b16 %v1612
        %v2386 = vunpack.c.l.b16 %v1613
        %v2387 = vunpack.c.h.b16 %v1613
        %v2388 = vunpack.c.l.b16 %v1614
        %v2389 = vunpack.c.h.b16 %v1614
        %v2390 = vunpack.c.l.b16 %v1615
        %v2391 = vunpack.c.h.b16 %v1615
        %v2392 = vunpack.c.l.b16 %v1616
        %v2393 = vunpack.c.h.b16 %v1616
        %v2394 = vunpack.c.l.b16 %v1617
        %v2395 = vunpack.c.h.b16 %v1617
        %v2396 = vunpack.c.l.b16 %v1618
        %v2397 = vunpack.c.h.b16 %v1618
        %v2398 = vunpack.c.l.b16 %v1619
        %v2399 = vunpack.c.h.b16 %v1619
        %v2400 = vunpack.c.l.b16 %v1620
        %v2401 = vunpack.c.h.b16 %v1620
        %v2402 = vunpack.c.l.b16 %v1621
        %v2403 = vunpack.c.h.b16 %v1621
        %v2404 = vunpack.c.l.b16 %v1622
        %v2405 = vunpack.c.h.b16 %v1622
        %v2406 = vunpack.c.l.b16 %v1623
        %v2407 = vunpack.c.h.b16 %v1623
        %v2408 = vunpack.c.l.b16 %v1624
        %v2409 = vunpack.c.h.b16 %v1624
        %v2410 = vunpack.c.l.b16 %v1625
        %v2411 = vunpack.c.h.b16 %v1625
        %v2412 = vunpack.c.l.b16 %v1626
        %v2413 = vunpack.c.h.b16 %v1626
        %v2414 = vunpack.c.l.b16 %v1627
        %v2415 = vunpack.c.h.b16 %v1627
        %v2416 = vunpack.c.l.b16 %v1628
        %v2417 = vunpack.c.h.b16 %v1628
        %v2418 = vunpack.c.l.b16 %v1629
        %v2419 = vunpack.c.h.b16 %v1629
        %v2420 = vpack.c.b16 %v1912, %v1908
        %v2421 = vpack.c.b16 %v1913, %v1909
        %v2422 = vpack.c.b16 %v1914, %v1910
        %v2423 = vpack.c.b16 %v1915, %v1911
        %v2424 = vpack.c.b16 %v1920, %v1916
        %v2425 = vpack.c.b16 %v1921, %v1917
        %v2426 = vpack.c.b16 %v1922, %v1918
        %v2427 = vpack.c.b16 %v1923, %v1919
        %v2428 = vpack.c.b16 %v1928, %v1924
        %v2429 = vpack.c.b16 %v1929, %v1925
        %v2430 = vpack.c.b16 %v1930, %v1926
        %v2431 = vpack.c.b16 %v1931, %v1927
        %v2432 = vpack.c.b16 %v1936, %v1932
        %v2433 = vpack.c.b16 %v1937, %v1933
        %v2434 = vpack.c.b16 %v1938, %v1934
        %v2435 = vpack.c.b16 %v1939, %v1935
        %v2436 = vpack.c.b16 %v1944, %v1940
        %v2437 = vpack.c.b16 %v1945, %v1941
        %v2438 = vpack.c.b16 %v1946, %v1942
        %v2439 = vpack.c.b16 %v1947, %v1943
        %v2440 = vpack.c.b16 %v1952, %v1948
        %v2441 = vpack.c.b16 %v1953, %v1949
        %v2442 = vpack.c.b16 %v1954, %v1950
        %v2443 = vpack.c.b16 %v1955, %v1951
        %v2444 = vpack.c.b16 %v1960, %v1956
        %v2445 = vpack.c.b16 %v1961, %v1957
        %v2446 = vpack.c.b16 %v1962, %v1958
        %v2447 = vpack.c.b16 %v1963, %v1959
        %v2448 = vpack.c.b16 %v1968, %v1964
        %v2449 = vpack.c.b16 %v1969, %v1965
        %v2450 = vpack.c.b16 %v1970, %v1966
        %v2451 = vpack.c.b16 %v1971, %v1967
        %v2452 = vpack.c.b16 %v1976, %v1972
        %v2453 = vpack.c.b16 %v1977, %v1973
        %v2454 = vpack.c.b16 %v1978, %v1974
        %v2455 = vpack.c.b16 %v1979, %v1975
        %v2456 = vpack.c.b16 %v1984, %v1980
        %v2457 = vpack.c.b16 %v1985, %v1981
        %v2458 = vpack.c.b16 %v1986, %v1982
        %v2459 = vpack.c.b16 %v1987, %v1983
        %v2460 = vpack.c.b16 %v1992, %v1988
        %v2461 = vpack.c.b16 %v1993, %v1989
        %v2462 = vpack.c.b16 %v1994, %v1990
        %v2463 = vpack.c.b16 %v1995, %v1991
        %v2464 = vpack.c.b16 %v2000, %v1996
        %v2465 = vpack.c.b16 %v2001, %v1997
        %v2466 = vpack.c.b16 %v2002, %v1998
        %v2467 = vpack.c.b16 %v2003, %v1999
        %v2468 = vpack.c.b16 %v2008, %v2004
        %v2469 = vpack.c.b16 %v2009, %v2005
        %v2470 = vpack.c.b16 %v2010, %v2006
        %v2471 = vpack.c.b16 %v2011, %v2007
        %v2472 = vpack.c.b16 %v2016, %v2012
        %v2473 = vpack.c.b16 %v2017, %v2013
        %v2474 = vpack.c.b16 %v2018, %v2014
        %v2475 = vpack.c.b16 %v2019, %v2015
        %v2476 = vpack.c.b16 %v2024, %v2020
        %v2477 = vpack.c.b16 %v2025, %v2021
        %v2478 = vpack.c.b16 %v2026, %v2022
        %v2479 = vpack.c.b16 %v2027, %v2023
        %v2480 = vpack.c.b16 %v2032, %v2028
        %v2481 = vpack.c.b16 %v2033, %v2029
        %v2482 = vpack.c.b16 %v2034, %v2030
        %v2483 = vpack.c.b16 %v2035, %v2031
        %v2484 = vpack.c.b16 %v2040, %v2036
        %v2485 = vpack.c.b16 %v2041, %v2037
        %v2486 = vpack.c.b16 %v2042, %v2038
        %v2487 = vpack.c.b16 %v2043, %v2039
        %v2488 = vpack.c.b16 %v2048, %v2044
        %v2489 = vpack.c.b16 %v2049, %v2045
        %v2490 = vpack.c.b16 %v2050, %v2046
        %v2491 = vpack.c.b16 %v2051, %v2047
        %v2492 = vpack.c.b16 %v2056, %v2052
        %v2493 = vpack.c.b16 %v2057, %v2053
        %v2494 = vpack.c.b16 %v2058, %v2054
        %v2495 = vpack.c.b16 %v2059, %v2055
        %v2496 = vpack.c.b16 %v2064, %v2060
        %v2497 = vpack.c.b16 %v2065, %v2061
        %v2498 = vpack.c.b16 %v2066, %v2062
        %v2499 = vpack.c.b16 %v2067, %v2063
        %v2500 = vpack.c.b16 %v2072, %v2068
        %v2501 = vpack.c.b16 %v2073, %v2069
        %v2502 = vpack.c.b16 %v2074, %v2070
        %v2503 = vpack.c.b16 %v2075, %v2071
        %v2504 = vpack.c.b16 %v2080, %v2076
        %v2505 = vpack.c.b16 %v2081, %v2077
        %v2506 = vpack.c.b16 %v2082, %v2078
        %v2507 = vpack.c.b16 %v2083, %v2079
        %v2508 = vpack.c.b16 %v2088, %v2084
        %v2509 = vpack.c.b16 %v2089, %v2085
        %v2510 = vpack.c.b16 %v2090, %v2086
        %v2511 = vpack.c.b16 %v2091, %v2087
        %v2512 = vpack.c.b16 %v2096, %v2092
        %v2513 = vpack.c.b16 %v2097, %v2093
        %v2514 = vpack.c.b16 %v2098, %v2094
        %v2515 = vpack.c.b16 %v2099, %v2095
        %v2516 = vpack.c.b16 %v2104, %v2100
        %v2517 = vpack.c.b16 %v2105, %v2101
        %v2518 = vpack.c.b16 %v2106, %v2102
        %v2519 = vpack.c.b16 %v2107, %v2103
        %v2520 = vpack.c.b16 %v2112, %v2108
        %v2521 = vpack.c.b16 %v2113, %v2109
        %v2522 = vpack.c.b16 %v2114, %v2110
        %v2523 = vpack.c.b16 %v2115, %v2111
        %v2524 = vpack.c.b16 %v2120, %v2116
        %v2525 = vpack.c.b16 %v2121, %v2117
        %v2526 = vpack.c.b16 %v2122, %v2118
        %v2527 = vpack.c.b16 %v2123, %v2119
        %v2528 = vpack.c.b16 %v2128, %v2124
        %v2529 = vpack.c.b16 %v2129, %v2125
        %v2530 = vpack.c.b16 %v2130, %v2126
        %v2531 = vpack.c.b16 %v2131, %v2127
        %v2532 = vpack.c.b16 %v2136, %v2132
        %v2533 = vpack.c.b16 %v2137, %v2133
        %v2534 = vpack.c.b16 %v2138, %v2134
        %v2535 = vpack.c.b16 %v2139, %v2135
        %v2536 = vpack.c.b16 %v2144, %v2140
        %v2537 = vpack.c.b16 %v2145, %v2141
        %v2538 = vpack.c.b16 %v2146, %v2142
        %v2539 = vpack.c.b16 %v2147, %v2143
        %v2540 = vpack.c.b16 %v2152, %v2148
        %v2541 = vpack.c.b16 %v2153, %v2149
        %v2542 = vpack.c.b16 %v2154, %v2150
        %v2543 = vpack.c.b16 %v2155, %v2151
        %v2544 = vpack.c.b16 %v2160, %v2156
        %v2545 = vpack.c.b16 %v2161, %v2157
        %v2546 = vpack.c.b16 %v2162, %v2158
        %v2547 = vpack.c.b16 %v2163, %v2159
        %v2548 = vpack.c.b16 %v2168, %v2164
        %v2549 = vpack.c.b16 %v2169, %v2165
        %v2550 = vpack.c.b16 %v2170, %v2166
        %v2551 = vpack.c.b16 %v2171, %v2167
        %v2552 = vpack.c.b16 %v2176, %v2172
        %v2553 = vpack.c.b16 %v2177, %v2173
        %v2554 = vpack.c.b16 %v2178, %v2174
        %v2555 = vpack.c.b16 %v2179, %v2175
        %v2556 = vpack.c.b16 %v2184, %v2180
        %v2557 = vpack.c.b16 %v2185, %v2181
        %v2558 = vpack.c.b16 %v2186, %v2182
        %v2559 = vpack.c.b16 %v2187, %v2183
        %v2560 = vpack.c.b16 %v2192, %v2188
        %v2561 = vpack.c.b16 %v2193, %v2189
        %v2562 = vpack.c.b16 %v2194, %v2190
        %v2563 = vpack.c.b16 %v2195, %v2191
        %v2564 = vpack.c.b16 %v2200, %v2196
        %v2565 = vpack.c.b16 %v2201, %v2197
        %v2566 = vpack.c.b16 %v2202, %v2198
        %v2567 = vpack.c.b16 %v2203, %v2199
        %v2568 = vpack.c.b16 %v2208, %v2204
        %v2569 = vpack.c.b16 %v2209, %v2205
        %v2570 = vpack.c.b16 %v2210, %v2206
        %v2571 = vpack.c.b16 %v2211, %v2207
        %v2572 = vpack.c.b16 %v2216, %v2212
        %v2573 = vpack.c.b16 %v2217, %v2213
        %v2574 = vpack.c.b16 %v2218, %v2214
        %v2575 = vpack.c.b16 %v2219, %v2215
        %v2576 = vpack.c.b16 %v2224, %v2220
        %v2577 = vpack.c.b16 %v2225, %v2221
        %v2578 = vpack.c.b16 %v2226, %v2222
        %v2579 = vpack.c.b16 %v2227, %v2223
        %v2580 = vpack.c.b16 %v2232, %v2228
        %v2581 = vpack.c.b16 %v2233, %v2229
        %v2582 = vpack.c.b16 %v2234, %v2230
        %v2583 = vpack.c.b16 %v2235, %v2231
        %v2584 = vpack.c.b16 %v2240, %v2236
        %v2585 = vpack.c.b16 %v2241, %v2237
        %v2586 = vpack.c.b16 %v2242, %v2238
        %v2587 = vpack.c.b16 %v2243, %v2239
        %v2588 = vpack.c.b16 %v2248, %v2244
        %v2589 = vpack.c.b16 %v2249, %v2245
        %v2590 = vpack.c.b16 %v2250, %v2246
        %v2591 = vpack.c.b16 %v2251, %v2247
        %v2592 = vpack.c.b16 %v2256, %v2252
        %v2593 = vpack.c.b16 %v2257, %v2253
        %v2594 = vpack.c.b16 %v2258, %v2254
        %v2595 = vpack.c.b16 %v2259, %v2255
        %v2596 = vpack.c.b16 %v2264, %v2260
        %v2597 = vpack.c.b16 %v2265, %v2261
        %v2598 = vpack.c.b16 %v2266, %v2262
        %v2599 = vpack.c.b16 %v2267, %v2263
        %v2600 = vpack.c.b16 %v2272, %v2268
        %v2601 = vpack.c.b16 %v2273, %v2269
        %v2602 = vpack.c.b16 %v2274, %v2270
        %v2603 = vpack.c.b16 %v2275, %v2271
        %v2604 = vpack.c.b16 %v2280, %v2276
        %v2605 = vpack.c.b16 %v2281, %v2277
        %v2606 = vpack.c.b16 %v2282, %v2278
        %v2607 = vpack.c.b16 %v2283, %v2279
        %v2608 = vpack.c.b16 %v2288, %v2284
        %v2609 = vpack.c.b16 %v2289, %v2285
        %v2610 = vpack.c.b16 %v2290, %v2286
        %v2611 = vpack.c.b16 %v2291, %v2287
        %v2612 = vpack.c.b16 %v2296, %v2292
        %v2613 = vpack.c.b16 %v2297, %v2293
        %v2614 = vpack.c.b16 %v2298, %v2294
        %v2615 = vpack.c.b16 %v2299, %v2295
        %v2616 = vpack.c.b16 %v2304, %v2300
        %v2617 = vpack.c.b16 %v2305, %v2301
        %v2618 = vpack.c.b16 %v2306, %v2302
        %v2619 = vpack.c.b16 %v2307, %v2303
        %v2620 = vpack.c.b16 %v2312, %v2308
        %v2621 = vpack.c.b16 %v2313, %v2309
        %v2622 = vpack.c.b16 %v2314, %v2310
        %v2623 = vpack.c.b16 %v2315, %v2311
        %v2624 = vpack.c.b16 %v2320, %v2316
        %v2625 = vpack.c.b16 %v2321, %v2317
        %v2626 = vpack.c.b16 %v2322, %v2318
        %v2627 = vpack.c.b16 %v2323, %v2319
        %v2628 = vpack.c.b16 %v2328, %v2324
        %v2629 = vpack.c.b16 %v2329, %v2325
        %v2630 = vpack.c.b16 %v2330, %v2326
        %v2631 = vpack.c.b16 %v2331, %v2327
        %v2632 = vpack.c.b16 %v2336, %v2332
        %v2633 = vpack.c.b16 %v2337, %v2333
        %v2634 = vpack.c.b16 %v2338, %v2334
        %v2635 = vpack.c.b16 %v2339, %v2335
        %v2636 = vpack.c.b16 %v2344, %v2340
        %v2637 = vpack.c.b16 %v2345, %v2341
        %v2638 = vpack.c.b16 %v2346, %v2342
        %v2639 = vpack.c.b16 %v2347, %v2343
        %v2640 = vpack.c.b16 %v2352, %v2348
        %v2641 = vpack.c.b16 %v2353, %v2349
        %v2642 = vpack.c.b16 %v2354, %v2350
        %v2643 = vpack.c.b16 %v2355, %v2351
        %v2644 = vpack.c.b16 %v2360, %v2356
        %v2645 = vpack.c.b16 %v2361, %v2357
        %v2646 = vpack.c.b16 %v2362, %v2358
        %v2647 = vpack.c.b16 %v2363, %v2359
        %v2648 = vpack.c.b16 %v2368, %v2364
        %v2649 = vpack.c.b16 %v2369, %v2365
        %v2650 = vpack.c.b16 %v2370, %v2366
        %v2651 = vpack.c.b16 %v2371, %v2367
        %v2652 = vpack.c.b16 %v2376, %v2372
        %v2653 = vpack.c.b16 %v2377, %v2373
        %v2654 = vpack.c.b16 %v2378, %v2374
        %v2655 = vpack.c.b16 %v2379, %v2375
        %v2656 = vpack.c.b16 %v2384, %v2380
        %v2657 = vpack.c.b16 %v2385, %v2381
        %v2658 = vpack.c.b16 %v2386, %v2382
        %v2659 = vpack.c.b16 %v2387, %v2383
        %v2660 = vpack.c.b16 %v2392, %v2388
        %v2661 = vpack.c.b16 %v2393, %v2389
        %v2662 = vpack.c.b16 %v2394, %v2390
        %v2663 = vpack.c.b16 %v2395, %v2391
        %v2664 = vpack.c.b16 %v2400, %v2396
        %v2665 = vpack.c.b16 %v2401, %v2397
        %v2666 = vpack.c.b16 %v2402, %v2398
        %v2667 = vpack.c.b16 %v2403, %v2399
        %v2668 = vpack.c.b16 %v2408, %v2404
        %v2669 = vpack.c.b16 %v2409, %v2405
        %v2670 = vpack.c.b16 %v2410, %v2406
        %v2671 = vpack.c.b16 %v2411, %v2407
        %v2672 = vpack.c.b16 %v2416, %v2412
        %v2673 = vpack.c.b16 %v2417, %v2413
        %v2674 = vpack.c.b16 %v2418, %v2414
        %v2675 = vpack.c.b16 %v2419, %v2415
        %2932 = vmatprep.subr.bf16.mxu0 %v2421
        %2933 = vmatpush1.bf16.msra.mxu0 %v2420
        %2934 = vmatprep.subr.bf16.mxu0 %v2425
        %2935 = vmatpush1.bf16.msra.mxu0 %v2424
        %2936 = vmatprep.subr.bf16.mxu0 %v2429
        %2937 = vmatpush1.bf16.msra.mxu0 %v2428
        %2938 = vmatprep.subr.bf16.mxu0 %v2433
        %2939 = vmatpush1.bf16.msra.mxu0 %v2432
        %2940 = vmatprep.subr.bf16.mxu0 %v2437
        %2941 = vmatpush1.bf16.msra.mxu0 %v2436
        %2942 = vmatprep.subr.bf16.mxu0 %v2441
        %2943 = vmatpush1.bf16.msra.mxu0 %v2440
        %2944 = vmatprep.subr.bf16.mxu0 %v2445
        %2945 = vmatpush1.bf16.msra.mxu0 %v2444
        %2946 = vmatprep.subr.bf16.mxu0 %v2449
        %2947 = vmatpush1.bf16.msra.mxu0 %v2448
        %2948 = vmatprep.subr.bf16.mxu0 %v2453
        %2949 = vmatpush1.bf16.msra.mxu0 %v2452
        %2950 = vmatprep.subr.bf16.mxu0 %v2457
        %2951 = vmatpush1.bf16.msra.mxu0 %v2456
        %2952 = vmatprep.subr.bf16.mxu0 %v2461
        %2953 = vmatpush1.bf16.msra.mxu0 %v2460
        %2954 = vmatprep.subr.bf16.mxu0 %v2465
        %2955 = vmatpush1.bf16.msra.mxu0 %v2464
        %2956 = vmatprep.subr.bf16.mxu0 %v2469
        %2957 = vmatpush1.bf16.msra.mxu0 %v2468
        %2958 = vmatprep.subr.bf16.mxu0 %v2473
        %2959 = vmatpush1.bf16.msra.mxu0 %v2472
        %2960 = vmatprep.subr.bf16.mxu0 %v2477
        %2961 = vmatpush1.bf16.msra.mxu0 %v2476
        %2962 = vmatprep.subr.bf16.mxu0 %v2481
        %2963 = vmatpush1.bf16.msra.mxu0 %v2480
        %2964 = vmatprep.mubr.bf16.mxu0 %v1367
        %2965 = vmatmul.mubr.bf16.gmra.mrb[0].mxu0 %v1366
        %v2966 = vpop.f32.mrb[0].mxu0
        %v2967 = vadd.f32 %v1635, %v2966
        %v2968 = vpop.f32.mrb[0].mxu0
        %v2969 = vadd.f32 %v1639, %v2968
        %v2970 = vpop.f32.mrb[0].mxu0
        %v2971 = vadd.f32 %v1635, %v2970
        %v2972 = vpop.f32.mrb[0].mxu0
        %v2973 = vadd.f32 %v1639, %v2972
        %2974 = vdwg.mxu0
        %2975 = vmatprep.subr.bf16.mxu0 %v2485
        %2976 = vmatpush1.bf16.msra.mxu0 %v2484
        %2977 = vmatprep.subr.bf16.mxu0 %v2489
        %2978 = vmatpush1.bf16.msra.mxu0 %v2488
        %2979 = vmatprep.subr.bf16.mxu0 %v2493
        %2980 = vmatpush1.bf16.msra.mxu0 %v2492
        %2981 = vmatprep.subr.bf16.mxu0 %v2497
        %2982 = vmatpush1.bf16.msra.mxu0 %v2496
        %2983 = vmatprep.subr.bf16.mxu0 %v2501
        %2984 = vmatpush1.bf16.msra.mxu0 %v2500
        %2985 = vmatprep.subr.bf16.mxu0 %v2505
        %2986 = vmatpush1.bf16.msra.mxu0 %v2504
        %2987 = vmatprep.subr.bf16.mxu0 %v2509
        %2988 = vmatpush1.bf16.msra.mxu0 %v2508
        %2989 = vmatprep.subr.bf16.mxu0 %v2513
        %2990 = vmatpush1.bf16.msra.mxu0 %v2512
        %2991 = vmatprep.subr.bf16.mxu0 %v2517
        %2992 = vmatpush1.bf16.msra.mxu0 %v2516
        %2993 = vmatprep.subr.bf16.mxu0 %v2521
        %2994 = vmatpush1.bf16.msra.mxu0 %v2520
        %2995 = vmatprep.subr.bf16.mxu0 %v2525
        %2996 = vmatpush1.bf16.msra.mxu0 %v2524
        %2997 = vmatprep.subr.bf16.mxu0 %v2529
        %2998 = vmatpush1.bf16.msra.mxu0 %v2528
        %2999 = vmatprep.subr.bf16.mxu0 %v2533
        %3000 = vmatpush1.bf16.msra.mxu0 %v2532
        %3001 = vmatprep.subr.bf16.mxu0 %v2537
        %3002 = vmatpush1.bf16.msra.mxu0 %v2536
        %3003 = vmatprep.subr.bf16.mxu0 %v2541
        %3004 = vmatpush1.bf16.msra.mxu0 %v2540
        %3005 = vmatprep.subr.bf16.mxu0 %v2545
        %3006 = vmatpush1.bf16.msra.mxu0 %v2544
        %3007 = vmatprep.mubr.bf16.mxu0 %v1369
        %3008 = vmatmul.mubr.bf16.gmra.mrb[0].mxu0 %v1368
        %v3009 = vpop.f32.mrb[0].mxu0
        %v3010 = vadd.f32 %v2967, %v3009
        %v3011 = vpop.f32.mrb[0].mxu0
        %v3012 = vadd.f32 %v2969, %v3011
        %v3013 = vpop.f32.mrb[0].mxu0
        %v3014 = vadd.f32 %v2971, %v3013
        %v3015 = vpop.f32.mrb[0].mxu0
        %v3016 = vadd.f32 %v2973, %v3015
        %3017 = vdwg.mxu0
        %3018 = vmatprep.subr.bf16.mxu0 %v2549
        %3019 = vmatpush1.bf16.msra.mxu0 %v2548
        %3020 = vmatprep.subr.bf16.mxu0 %v2553
        %3021 = vmatpush1.bf16.msra.mxu0 %v2552
        %3022 = vmatprep.subr.bf16.mxu0 %v2557
        %3023 = vmatpush1.bf16.msra.mxu0 %v2556
        %3024 = vmatprep.subr.bf16.mxu0 %v2561
        %3025 = vmatpush1.bf16.msra.mxu0 %v2560
        %3026 = vmatprep.subr.bf16.mxu0 %v2565
        %3027 = vmatpush1.bf16.msra.mxu0 %v2564
        %3028 = vmatprep.subr.bf16.mxu0 %v2569
        %3029 = vmatpush1.bf16.msra.mxu0 %v2568
        %3030 = vmatprep.subr.bf16.mxu0 %v2573
        %3031 = vmatpush1.bf16.msra.mxu0 %v2572
        %3032 = vmatprep.subr.bf16.mxu0 %v2577
        %3033 = vmatpush1.bf16.msra.mxu0 %v2576
        %3034 = vmatprep.subr.bf16.mxu0 %v2581
        %3035 = vmatpush1.bf16.msra.mxu0 %v2580
        %3036 = vmatprep.subr.bf16.mxu0 %v2585
        %3037 = vmatpush1.bf16.msra.mxu0 %v2584
        %3038 = vmatprep.subr.bf16.mxu0 %v2589
        %3039 = vmatpush1.bf16.msra.mxu0 %v2588
        %3040 = vmatprep.subr.bf16.mxu0 %v2593
        %3041 = vmatpush1.bf16.msra.mxu0 %v2592
        %3042 = vmatprep.subr.bf16.mxu0 %v2597
        %3043 = vmatpush1.bf16.msra.mxu0 %v2596
        %3044 = vmatprep.subr.bf16.mxu0 %v2601
        %3045 = vmatpush1.bf16.msra.mxu0 %v2600
        %3046 = vmatprep.subr.bf16.mxu0 %v2605
        %3047 = vmatpush1.bf16.msra.mxu0 %v2604
        %3048 = vmatprep.subr.bf16.mxu0 %v2609
        %3049 = vmatpush1.bf16.msra.mxu0 %v2608
        %3050 = vmatprep.mubr.bf16.mxu0 %v1371
        %3051 = vmatmul.mubr.bf16.gmra.mrb[0].mxu0 %v1370
        %v3052 = vpop.f32.mrb[0].mxu0
        %v3053 = vadd.f32 %v3010, %v3052
        %v3054 = vpop.f32.mrb[0].mxu0
        %v3055 = vadd.f32 %v3012, %v3054
        %v3056 = vpop.f32.mrb[0].mxu0
        %v3057 = vadd.f32 %v3014, %v3056
        %v3058 = vpop.f32.mrb[0].mxu0
        %v3059 = vadd.f32 %v3016, %v3058
        %3060 = vdwg.mxu0
        %3061 = vmatprep.subr.bf16.mxu0 %v2613
        %3062 = vmatpush1.bf16.msra.mxu0 %v2612
        %3063 = vmatprep.subr.bf16.mxu0 %v2617
        %3064 = vmatpush1.bf16.msra.mxu0 %v2616
        %3065 = vmatprep.subr.bf16.mxu0 %v2621
        %3066 = vmatpush1.bf16.msra.mxu0 %v2620
        %3067 = vmatprep.subr.bf16.mxu0 %v2625
        %3068 = vmatpush1.bf16.msra.mxu0 %v2624
        %3069 = vmatprep.subr.bf16.mxu0 %v2629
        %3070 = vmatpush1.bf16.msra.mxu0 %v2628
        %3071 = vmatprep.subr.bf16.mxu0 %v2633
        %3072 = vmatpush1.bf16.msra.mxu0 %v2632
        %3073 = vmatprep.subr.bf16.mxu0 %v2637
        %3074 = vmatpush1.bf16.msra.mxu0 %v2636
        %3075 = vmatprep.subr.bf16.mxu0 %v2641
        %3076 = vmatpush1.bf16.msra.mxu0 %v2640
        %3077 = vmatprep.subr.bf16.mxu0 %v2645
        %3078 = vmatpush1.bf16.msra.mxu0 %v2644
        %3079 = vmatprep.subr.bf16.mxu0 %v2649
        %3080 = vmatpush1.bf16.msra.mxu0 %v2648
        %3081 = vmatprep.subr.bf16.mxu0 %v2653
        %3082 = vmatpush1.bf16.msra.mxu0 %v2652
        %3083 = vmatprep.subr.bf16.mxu0 %v2657
        %3084 = vmatpush1.bf16.msra.mxu0 %v2656
        %3085 = vmatprep.subr.bf16.mxu0 %v2661
        %3086 = vmatpush1.bf16.msra.mxu0 %v2660
        %3087 = vmatprep.subr.bf16.mxu0 %v2665
        %3088 = vmatpush1.bf16.msra.mxu0 %v2664
        %3089 = vmatprep.subr.bf16.mxu0 %v2669
        %3090 = vmatpush1.bf16.msra.mxu0 %v2668
        %3091 = vmatprep.subr.bf16.mxu0 %v2673
        %3092 = vmatpush1.bf16.msra.mxu0 %v2672
        %3093 = vmatprep.mubr.bf16.mxu0 %v1373
        %3094 = vmatmul.mubr.bf16.gmra.mrb[0].mxu0 %v1372
        %v3095 = vpop.f32.mrb[0].mxu0
        %v3096 = vadd.f32 %v3053, %v3095
        %v3097 = vpop.f32.mrb[0].mxu0
        %v3098 = vadd.f32 %v3055, %v3097
        %v3099 = vpop.f32.mrb[0].mxu0
        %v3100 = vadd.f32 %v3057, %v3099
        %v3101 = vpop.f32.mrb[0].mxu0
        %v3102 = vadd.f32 %v3059, %v3101
        %3103 = vdwg.mxu0
        %3104 = vmatprep.subr.bf16.mxu0 %v2423
        %3105 = vmatpush1.bf16.msra.mxu0 %v2422
        %3106 = vmatprep.subr.bf16.mxu0 %v2427
        %3107 = vmatpush1.bf16.msra.mxu0 %v2426
        %3108 = vmatprep.subr.bf16.mxu0 %v2431
        %3109 = vmatpush1.bf16.msra.mxu0 %v2430
        %3110 = vmatprep.subr.bf16.mxu0 %v2435
        %3111 = vmatpush1.bf16.msra.mxu0 %v2434
        %3112 = vmatprep.subr.bf16.mxu0 %v2439
        %3113 = vmatpush1.bf16.msra.mxu0 %v2438
        %3114 = vmatprep.subr.bf16.mxu0 %v2443
        %3115 = vmatpush1.bf16.msra.mxu0 %v2442
        %3116 = vmatprep.subr.bf16.mxu0 %v2447
        %3117 = vmatpush1.bf16.msra.mxu0 %v2446
        %3118 = vmatprep.subr.bf16.mxu0 %v2451
        %3119 = vmatpush1.bf16.msra.mxu0 %v2450
        %3120 = vmatprep.subr.bf16.mxu0 %v2455
        %3121 = vmatpush1.bf16.msra.mxu0 %v2454
        %3122 = vmatprep.subr.bf16.mxu0 %v2459
        %3123 = vmatpush1.bf16.msra.mxu0 %v2458
        %3124 = vmatprep.subr.bf16.mxu0 %v2463
        %3125 = vmatpush1.bf16.msra.mxu0 %v2462
        %3126 = vmatprep.subr.bf16.mxu0 %v2467
        %3127 = vmatpush1.bf16.msra.mxu0 %v2466
        %3128 = vmatprep.subr.bf16.mxu0 %v2471
        %3129 = vmatpush1.bf16.msra.mxu0 %v2470
        %3130 = vmatprep.subr.bf16.mxu0 %v2475
        %3131 = vmatpush1.bf16.msra.mxu0 %v2474
        %3132 = vmatprep.subr.bf16.mxu0 %v2479
        %3133 = vmatpush1.bf16.msra.mxu0 %v2478
        %3134 = vmatprep.subr.bf16.mxu0 %v2483
        %3135 = vmatpush1.bf16.msra.mxu0 %v2482
        %3136 = vmatprep.mubr.bf16.mxu0 %v1367
        %3137 = vmatmul.mubr.bf16.gmra.mrb[0].mxu0 %v1366
        %v3138 = vpop.f32.mrb[0].mxu0
        %v3139 = vadd.f32 %v1643, %v3138
        %v3140 = vpop.f32.mrb[0].mxu0
        %v3141 = vadd.f32 %v1647, %v3140
        %v3142 = vpop.f32.mrb[0].mxu0
        %v3143 = vadd.f32 %v1643, %v3142
        %v3144 = vpop.f32.mrb[0].mxu0
        %v3145 = vadd.f32 %v1647, %v3144
        %3146 = vdwg.mxu0
        %3147 = vmatprep.subr.bf16.mxu0 %v2487
        %3148 = vmatpush1.bf16.msra.mxu0 %v2486
        %3149 = vmatprep.subr.bf16.mxu0 %v2491
        %3150 = vmatpush1.bf16.msra.mxu0 %v2490
        %3151 = vmatprep.subr.bf16.mxu0 %v2495
        %3152 = vmatpush1.bf16.msra.mxu0 %v2494
        %3153 = vmatprep.subr.bf16.mxu0 %v2499
        %3154 = vmatpush1.bf16.msra.mxu0 %v2498
        %3155 = vmatprep.subr.bf16.mxu0 %v2503
        %3156 = vmatpush1.bf16.msra.mxu0 %v2502
        %3157 = vmatprep.subr.bf16.mxu0 %v2507
        %3158 = vmatpush1.bf16.msra.mxu0 %v2506
        %3159 = vmatprep.subr.bf16.mxu0 %v2511
        %3160 = vmatpush1.bf16.msra.mxu0 %v2510
        %3161 = vmatprep.subr.bf16.mxu0 %v2515
        %3162 = vmatpush1.bf16.msra.mxu0 %v2514
        %3163 = vmatprep.subr.bf16.mxu0 %v2519
        %3164 = vmatpush1.bf16.msra.mxu0 %v2518
        %3165 = vmatprep.subr.bf16.mxu0 %v2523
        %3166 = vmatpush1.bf16.msra.mxu0 %v2522
        %3167 = vmatprep.subr.bf16.mxu0 %v2527
        %3168 = vmatpush1.bf16.msra.mxu0 %v2526
        %3169 = vmatprep.subr.bf16.mxu0 %v2531
        %3170 = vmatpush1.bf16.msra.mxu0 %v2530
        %3171 = vmatprep.subr.bf16.mxu0 %v2535
        %3172 = vmatpush1.bf16.msra.mxu0 %v2534
        %3173 = vmatprep.subr.bf16.mxu0 %v2539
        %3174 = vmatpush1.bf16.msra.mxu0 %v2538
        %3175 = vmatprep.subr.bf16.mxu0 %v2543
        %3176 = vmatpush1.bf16.msra.mxu0 %v2542
        %3177 = vmatprep.subr.bf16.mxu0 %v2547
        %3178 = vmatpush1.bf16.msra.mxu0 %v2546
        %3179 = vmatprep.mubr.bf16.mxu0 %v1369
        %3180 = vmatmul.mubr.bf16.gmra.mrb[0].mxu0 %v1368
        %v3181 = vpop.f32.mrb[0].mxu0
        %v3182 = vadd.f32 %v3139, %v3181
        %v3183 = vpop.f32.mrb[0].mxu0
        %v3184 = vadd.f32 %v3141, %v3183
        %v3185 = vpop.f32.mrb[0].mxu0
        %v3186 = vadd.f32 %v3143, %v3185
        %v3187 = vpop.f32.mrb[0].mxu0
        %v3188 = vadd.f32 %v3145, %v3187
        %3189 = vdwg.mxu0
        %3190 = vmatprep.subr.bf16.mxu0 %v2551
        %3191 = vmatpush1.bf16.msra.mxu0 %v2550
        %3192 = vmatprep.subr.bf16.mxu0 %v2555
        %3193 = vmatpush1.bf16.msra.mxu0 %v2554
        %3194 = vmatprep.subr.bf16.mxu0 %v2559
        %3195 = vmatpush1.bf16.msra.mxu0 %v2558
        %3196 = vmatprep.subr.bf16.mxu0 %v2563
        %3197 = vmatpush1.bf16.msra.mxu0 %v2562
        %3198 = vmatprep.subr.bf16.mxu0 %v2567
        %3199 = vmatpush1.bf16.msra.mxu0 %v2566
        %3200 = vmatprep.subr.bf16.mxu0 %v2571
        %3201 = vmatpush1.bf16.msra.mxu0 %v2570
        %3202 = vmatprep.subr.bf16.mxu0 %v2575
        %3203 = vmatpush1.bf16.msra.mxu0 %v2574
        %3204 = vmatprep.subr.bf16.mxu0 %v2579
        %3205 = vmatpush1.bf16.msra.mxu0 %v2578
        %3206 = vmatprep.subr.bf16.mxu0 %v2583
        %3207 = vmatpush1.bf16.msra.mxu0 %v2582
        %3208 = vmatprep.subr.bf16.mxu0 %v2587
        %3209 = vmatpush1.bf16.msra.mxu0 %v2586
        %3210 = vmatprep.subr.bf16.mxu0 %v2591
        %3211 = vmatpush1.bf16.msra.mxu0 %v2590
        %3212 = vmatprep.subr.bf16.mxu0 %v2595
        %3213 = vmatpush1.bf16.msra.mxu0 %v2594
        %3214 = vmatprep.subr.bf16.mxu0 %v2599
        %3215 = vmatpush1.bf16.msra.mxu0 %v2598
        %3216 = vmatprep.subr.bf16.mxu0 %v2603
        %3217 = vmatpush1.bf16.msra.mxu0 %v2602
        %3218 = vmatprep.subr.bf16.mxu0 %v2607
        %3219 = vmatpush1.bf16.msra.mxu0 %v2606
        %3220 = vmatprep.subr.bf16.mxu0 %v2611
        %3221 = vmatpush1.bf16.msra.mxu0 %v2610
        %3222 = vmatprep.mubr.bf16.mxu0 %v1371
        %3223 = vmatmul.mubr.bf16.gmra.mrb[0].mxu0 %v1370
        %v3224 = vpop.f32.mrb[0].mxu0
        %v3225 = vadd.f32 %v3182, %v3224
        %v3226 = vpop.f32.mrb[0].mxu0
        %v3227 = vadd.f32 %v3184, %v3226
        %v3228 = vpop.f32.mrb[0].mxu0
        %v3229 = vadd.f32 %v3186, %v3228
        %v3230 = vpop.f32.mrb[0].mxu0
        %v3231 = vadd.f32 %v3188, %v3230
        %3232 = vdwg.mxu0
        %3233 = vmatprep.subr.bf16.mxu0 %v2615
        %3234 = vmatpush1.bf16.msra.mxu0 %v2614
        %3235 = vmatprep.subr.bf16.mxu0 %v2619
        %3236 = vmatpush1.bf16.msra.mxu0 %v2618
        %3237 = vmatprep.subr.bf16.mxu0 %v2623
        %3238 = vmatpush1.bf16.msra.mxu0 %v2622
        %3239 = vmatprep.subr.bf16.mxu0 %v2627
        %3240 = vmatpush1.bf16.msra.mxu0 %v2626
        %3241 = vmatprep.subr.bf16.mxu0 %v2631
        %3242 = vmatpush1.bf16.msra.mxu0 %v2630
        %3243 = vmatprep.subr.bf16.mxu0 %v2635
        %3244 = vmatpush1.bf16.msra.mxu0 %v2634
        %3245 = vmatprep.subr.bf16.mxu0 %v2639
        %3246 = vmatpush1.bf16.msra.mxu0 %v2638
        %3247 = vmatprep.subr.bf16.mxu0 %v2643
        %3248 = vmatpush1.bf16.msra.mxu0 %v2642
        %3249 = vmatprep.subr.bf16.mxu0 %v2647
        %3250 = vmatpush1.bf16.msra.mxu0 %v2646
        %3251 = vmatprep.subr.bf16.mxu0 %v2651
        %3252 = vmatpush1.bf16.msra.mxu0 %v2650
        %3253 = vmatprep.subr.bf16.mxu0 %v2655
        %3254 = vmatpush1.bf16.msra.mxu0 %v2654
        %3255 = vmatprep.subr.bf16.mxu0 %v2659
        %3256 = vmatpush1.bf16.msra.mxu0 %v2658
        %3257 = vmatprep.subr.bf16.mxu0 %v2663
        %3258 = vmatpush1.bf16.msra.mxu0 %v2662
        %3259 = vmatprep.subr.bf16.mxu0 %v2667
        %3260 = vmatpush1.bf16.msra.mxu0 %v2666
        %3261 = vmatprep.subr.bf16.mxu0 %v2671
        %3262 = vmatpush1.bf16.msra.mxu0 %v2670
        %3263 = vmatprep.subr.bf16.mxu0 %v2675
        %3264 = vmatpush1.bf16.msra.mxu0 %v2674
        %3265 = vmatprep.mubr.bf16.mxu0 %v1373
        %3266 = vmatmul.mubr.bf16.gmra.mrb[0].mxu0 %v1372
        %v3267 = vpop.f32.mrb[0].mxu0
        %v3268 = vadd.f32 %v3225, %v3267
        %v3269 = vpop.f32.mrb[0].mxu0
        %v3270 = vadd.f32 %v3227, %v3269
        %v3271 = vpop.f32.mrb[0].mxu0
        %v3272 = vadd.f32 %v3229, %v3271
        %v3273 = vpop.f32.mrb[0].mxu0
        %v3274 = vadd.f32 %v3231, %v3273
        %3275 = vdwg.mxu0
        %v3276 = vtanh.pop %v3096
        %v3277 = vtanh.pop %v3098
        %v3278 = vtanh.pop %v3268
        %v3279 = vtanh.pop %v3270
        %v3280 = vtanh.pop %v3100
        %v3281 = vtanh.pop %v3102
        %v3282 = vtanh.pop %v3272
        %v3283 = vtanh.pop %v3274
        %v3284 = vpack.c.bf16 %v3280, %v3276
        %v3285 = vpack.c.bf16 %v3281, %v3277
        %v3286 = vpack.c.bf16 %v3282, %v3278
        %v3287 = vpack.c.bf16 %v3283, %v3279
        %v3288 = vld [vmem:[#allocation10] sm:$0xff]
        %v3289 = vld [vmem:[#allocation10 + $0x8] sm:$0xff]
        %v3290 = vld [vmem:[#allocation10 + $0x10] sm:$0xff]
        %v3291 = vld [vmem:[#allocation10 + $0x18] sm:$0xff]
        %v3292 = vld [vmem:[#allocation10 + $0x20] sm:$0xff]
        %v3293 = vld [vmem:[#allocation10 + $0x28] sm:$0xff]
        %v3294 = vld [vmem:[#allocation10 + $0x30] sm:$0xff]
        %v3295 = vld [vmem:[#allocation10 + $0x38] sm:$0xff]
        %v3296 = vld [vmem:[#allocation10 + $0x40] sm:$0xff]
        %v3297 = vld [vmem:[#allocation10 + $0x48] sm:$0xff]
        %v3298 = vld [vmem:[#allocation10 + $0x50] sm:$0xff]
        %v3299 = vld [vmem:[#allocation10 + $0x58] sm:$0xff]
        %v3300 = vld [vmem:[#allocation10 + $0x60] sm:$0xff]
        %v3301 = vld [vmem:[#allocation10 + $0x68] sm:$0xff]
        %v3302 = vld [vmem:[#allocation10 + $0x70] sm:$0xff]
        %v3303 = vld [vmem:[#allocation10 + $0x78] sm:$0xff]
        %v3304 = vld [vmem:[#allocation10 + $0x80] sm:$0xff]
        %v3305 = vld [vmem:[#allocation10 + $0x88] sm:$0xff]
        %v3306 = vld [vmem:[#allocation10 + $0x90] sm:$0xff]
        %v3307 = vld [vmem:[#allocation10 + $0x98] sm:$0xff]
        %v3308 = vld [vmem:[#allocation10 + $0xa0] sm:$0xff]
        %v3309 = vld [vmem:[#allocation10 + $0xa8] sm:$0xff]
        %v3310 = vld [vmem:[#allocation10 + $0xb0] sm:$0xff]
        %v3311 = vld [vmem:[#allocation10 + $0xb8] sm:$0xff]
        %v3312 = vld [vmem:[#allocation10 + $0xc0] sm:$0xff]
        %v3313 = vld [vmem:[#allocation10 + $0xc8] sm:$0xff]
        %v3314 = vld [vmem:[#allocation10 + $0xd0] sm:$0xff]
        %v3315 = vld [vmem:[#allocation10 + $0xd8] sm:$0xff]
        %v3316 = vld [vmem:[#allocation10 + $0xe0] sm:$0xff]
        %v3317 = vld [vmem:[#allocation10 + $0xe8] sm:$0xff]
        %v3318 = vld [vmem:[#allocation10 + $0xf0] sm:$0xff]
        %v3319 = vld [vmem:[#allocation10 + $0xf8] sm:$0xff]
        %v3320 = vld [vmem:[#allocation10 + $0x100] sm:$0xff]
        %v3321 = vld [vmem:[#allocation10 + $0x108] sm:$0xff]
        %v3322 = vld [vmem:[#allocation10 + $0x110] sm:$0xff]
        %v3323 = vld [vmem:[#allocation10 + $0x118] sm:$0xff]
        %v3324 = vld [vmem:[#allocation10 + $0x120] sm:$0xff]
        %v3325 = vld [vmem:[#allocation10 + $0x128] sm:$0xff]
        %v3326 = vld [vmem:[#allocation10 + $0x130] sm:$0xff]
        %v3327 = vld [vmem:[#allocation10 + $0x138] sm:$0xff]
        %v3328 = vld [vmem:[#allocation10 + $0x140] sm:$0xff]
        %v3329 = vld [vmem:[#allocation10 + $0x148] sm:$0xff]
        %v3330 = vld [vmem:[#allocation10 + $0x150] sm:$0xff]
        %v3331 = vld [vmem:[#allocation10 + $0x158] sm:$0xff]
        %v3332 = vld [vmem:[#allocation10 + $0x160] sm:$0xff]
        %v3333 = vld [vmem:[#allocation10 + $0x168] sm:$0xff]
        %v3334 = vld [vmem:[#allocation10 + $0x170] sm:$0xff]
        %v3335 = vld [vmem:[#allocation10 + $0x178] sm:$0xff]
        %v3336 = vld [vmem:[#allocation10 + $0x180] sm:$0xff]
        %v3337 = vld [vmem:[#allocation10 + $0x188] sm:$0xff]
        %v3338 = vld [vmem:[#allocation10 + $0x190] sm:$0xff]
        %v3339 = vld [vmem:[#allocation10 + $0x198] sm:$0xff]
        %v3340 = vld [vmem:[#allocation10 + $0x1a0] sm:$0xff]
        %v3341 = vld [vmem:[#allocation10 + $0x1a8] sm:$0xff]
        %v3342 = vld [vmem:[#allocation10 + $0x1b0] sm:$0xff]
        %v3343 = vld [vmem:[#allocation10 + $0x1b8] sm:$0xff]
        %v3344 = vld [vmem:[#allocation10 + $0x1c0] sm:$0xff]
        %v3345 = vld [vmem:[#allocation10 + $0x1c8] sm:$0xff]
        %v3346 = vld [vmem:[#allocation10 + $0x1d0] sm:$0xff]
        %v3347 = vld [vmem:[#allocation10 + $0x1d8] sm:$0xff]
        %v3348 = vld [vmem:[#allocation10 + $0x1e0] sm:$0xff]
        %v3349 = vld [vmem:[#allocation10 + $0x1e8] sm:$0xff]
        %v3350 = vld [vmem:[#allocation10 + $0x1f0] sm:$0xff]
        %v3351 = vld [vmem:[#allocation10 + $0x1f8] sm:$0xff]
        %v3352 = vld [vmem:[%s6] sm:$0x3]
        %v3354 = vlaneseq
        %v3355 = vshrl.u32 %v3354, 7
        %v3356 = vsub.s32 0, %v3355
        %v3357 = vrot.slane %v3352, %v3356
        %v3358 = vlaneseq
        %v3359 = vshrl.u32 %v3358, 7
        %v3360 = vsub.s32 1, %v3359
        %v3361 = vrot.slane %v3352, %v3360
        %v3428 = vunpack.c.l.b16 %v3288
        %v3429 = vunpack.c.h.b16 %v3288
        %v3430 = vunpack.c.l.b16 %v3289
        %v3431 = vunpack.c.h.b16 %v3289
        %v3432 = vunpack.c.l.b16 %v3290
        %v3433 = vunpack.c.h.b16 %v3290
        %v3434 = vunpack.c.l.b16 %v3291
        %v3435 = vunpack.c.h.b16 %v3291
        %v3436 = vunpack.c.l.b16 %v3292
        %v3437 = vunpack.c.h.b16 %v3292
        %v3438 = vunpack.c.l.b16 %v3293
        %v3439 = vunpack.c.h.b16 %v3293
        %v3440 = vunpack.c.l.b16 %v3294
        %v3441 = vunpack.c.h.b16 %v3294
        %v3442 = vunpack.c.l.b16 %v3295
        %v3443 = vunpack.c.h.b16 %v3295
        %v3444 = vunpack.c.l.b16 %v3296
        %v3445 = vunpack.c.h.b16 %v3296
        %v3446 = vunpack.c.l.b16 %v3297
        %v3447 = vunpack.c.h.b16 %v3297
        %v3448 = vunpack.c.l.b16 %v3298
        %v3449 = vunpack.c.h.b16 %v3298
        %v3450 = vunpack.c.l.b16 %v3299
        %v3451 = vunpack.c.h.b16 %v3299
        %v3452 = vunpack.c.l.b16 %v3300
        %v3453 = vunpack.c.h.b16 %v3300
        %v3454 = vunpack.c.l.b16 %v3301
        %v3455 = vunpack.c.h.b16 %v3301
        %v3456 = vunpack.c.l.b16 %v3302
        %v3457 = vunpack.c.h.b16 %v3302
        %v3458 = vunpack.c.l.b16 %v3303
        %v3459 = vunpack.c.h.b16 %v3303
        %v3460 = vunpack.c.l.b16 %v3304
        %v3461 = vunpack.c.h.b16 %v3304
        %v3462 = vunpack.c.l.b16 %v3305
        %v3463 = vunpack.c.h.b16 %v3305
        %v3464 = vunpack.c.l.b16 %v3306
        %v3465 = vunpack.c.h.b16 %v3306
        %v3466 = vunpack.c.l.b16 %v3307
        %v3467 = vunpack.c.h.b16 %v3307
        %v3468 = vunpack.c.l.b16 %v3308
        %v3469 = vunpack.c.h.b16 %v3308
        %v3470 = vunpack.c.l.b16 %v3309
        %v3471 = vunpack.c.h.b16 %v3309
        %v3472 = vunpack.c.l.b16 %v3310
        %v3473 = vunpack.c.h.b16 %v3310
        %v3474 = vunpack.c.l.b16 %v3311
        %v3475 = vunpack.c.h.b16 %v3311
        %v3476 = vunpack.c.l.b16 %v3312
        %v3477 = vunpack.c.h.b16 %v3312
        %v3478 = vunpack.c.l.b16 %v3313
        %v3479 = vunpack.c.h.b16 %v3313
        %v3480 = vunpack.c.l.b16 %v3314
        %v3481 = vunpack.c.h.b16 %v3314
        %v3482 = vunpack.c.l.b16 %v3315
        %v3483 = vunpack.c.h.b16 %v3315
        %v3484 = vunpack.c.l.b16 %v3316
        %v3485 = vunpack.c.h.b16 %v3316
        %v3486 = vunpack.c.l.b16 %v3317
        %v3487 = vunpack.c.h.b16 %v3317
        %v3488 = vunpack.c.l.b16 %v3318
        %v3489 = vunpack.c.h.b16 %v3318
        %v3490 = vunpack.c.l.b16 %v3319
        %v3491 = vunpack.c.h.b16 %v3319
        %v3492 = vunpack.c.l.b16 %v3320
        %v3493 = vunpack.c.h.b16 %v3320
        %v3494 = vunpack.c.l.b16 %v3321
        %v3495 = vunpack.c.h.b16 %v3321
        %v3496 = vunpack.c.l.b16 %v3322
        %v3497 = vunpack.c.h.b16 %v3322
        %v3498 = vunpack.c.l.b16 %v3323
        %v3499 = vunpack.c.h.b16 %v3323
        %v3500 = vunpack.c.l.b16 %v3324
        %v3501 = vunpack.c.h.b16 %v3324
        %v3502 = vunpack.c.l.b16 %v3325
        %v3503 = vunpack.c.h.b16 %v3325
        %v3504 = vunpack.c.l.b16 %v3326
        %v3505 = vunpack.c.h.b16 %v3326
        %v3506 = vunpack.c.l.b16 %v3327
        %v3507 = vunpack.c.h.b16 %v3327
        %v3508 = vunpack.c.l.b16 %v3328
        %v3509 = vunpack.c.h.b16 %v3328
        %v3510 = vunpack.c.l.b16 %v3329
        %v3511 = vunpack.c.h.b16 %v3329
        %v3512 = vunpack.c.l.b16 %v3330
        %v3513 = vunpack.c.h.b16 %v3330
        %v3514 = vunpack.c.l.b16 %v3331
        %v3515 = vunpack.c.h.b16 %v3331
        %v3516 = vunpack.c.l.b16 %v3332
        %v3517 = vunpack.c.h.b16 %v3332
        %v3518 = vunpack.c.l.b16 %v3333
        %v3519 = vunpack.c.h.b16 %v3333
        %v3520 = vunpack.c.l.b16 %v3334
        %v3521 = vunpack.c.h.b16 %v3334
        %v3522 = vunpack.c.l.b16 %v3335
        %v3523 = vunpack.c.h.b16 %v3335
        %v3524 = vunpack.c.l.b16 %v3336
        %v3525 = vunpack.c.h.b16 %v3336
        %v3526 = vunpack.c.l.b16 %v3337
        %v3527 = vunpack.c.h.b16 %v3337
        %v3528 = vunpack.c.l.b16 %v3338
        %v3529 = vunpack.c.h.b16 %v3338
        %v3530 = vunpack.c.l.b16 %v3339
        %v3531 = vunpack.c.h.b16 %v3339
        %v3532 = vunpack.c.l.b16 %v3340
        %v3533 = vunpack.c.h.b16 %v3340
        %v3534 = vunpack.c.l.b16 %v3341
        %v3535 = vunpack.c.h.b16 %v3341
        %v3536 = vunpack.c.l.b16 %v3342
        %v3537 = vunpack.c.h.b16 %v3342
        %v3538 = vunpack.c.l.b16 %v3343
        %v3539 = vunpack.c.h.b16 %v3343
        %v3540 = vunpack.c.l.b16 %v3344
        %v3541 = vunpack.c.h.b16 %v3344
        %v3542 = vunpack.c.l.b16 %v3345
        %v3543 = vunpack.c.h.b16 %v3345
        %v3544 = vunpack.c.l.b16 %v3346
        %v3545 = vunpack.c.h.b16 %v3346
        %v3546 = vunpack.c.l.b16 %v3347
        %v3547 = vunpack.c.h.b16 %v3347
        %v3548 = vunpack.c.l.b16 %v3348
        %v3549 = vunpack.c.h.b16 %v3348
        %v3550 = vunpack.c.l.b16 %v3349
        %v3551 = vunpack.c.h.b16 %v3349
        %v3552 = vunpack.c.l.b16 %v3350
        %v3553 = vunpack.c.h.b16 %v3350
        %v3554 = vunpack.c.l.b16 %v3351
        %v3555 = vunpack.c.h.b16 %v3351
        %v3556 = vpack.c.b16 %v3430, %v3428
        %v3557 = vpack.c.b16 %v3431, %v3429
        %v3558 = vpack.c.b16 %v3434, %v3432
        %v3559 = vpack.c.b16 %v3435, %v3433
        %v3560 = vpack.c.b16 %v3438, %v3436
        %v3561 = vpack.c.b16 %v3439, %v3437
        %v3562 = vpack.c.b16 %v3442, %v3440
        %v3563 = vpack.c.b16 %v3443, %v3441
        %v3564 = vpack.c.b16 %v3446, %v3444
        %v3565 = vpack.c.b16 %v3447, %v3445
        %v3566 = vpack.c.b16 %v3450, %v3448
        %v3567 = vpack.c.b16 %v3451, %v3449
        %v3568 = vpack.c.b16 %v3454, %v3452
        %v3569 = vpack.c.b16 %v3455, %v3453
        %v3570 = vpack.c.b16 %v3458, %v3456
        %v3571 = vpack.c.b16 %v3459, %v3457
        %v3572 = vpack.c.b16 %v3462, %v3460
        %v3573 = vpack.c.b16 %v3463, %v3461
        %v3574 = vpack.c.b16 %v3466, %v3464
        %v3575 = vpack.c.b16 %v3467, %v3465
        %v3576 = vpack.c.b16 %v3470, %v3468
        %v3577 = vpack.c.b16 %v3471, %v3469
        %v3578 = vpack.c.b16 %v3474, %v3472
        %v3579 = vpack.c.b16 %v3475, %v3473
        %v3580 = vpack.c.b16 %v3478, %v3476
        %v3581 = vpack.c.b16 %v3479, %v3477
        %v3582 = vpack.c.b16 %v3482, %v3480
        %v3583 = vpack.c.b16 %v3483, %v3481
        %v3584 = vpack.c.b16 %v3486, %v3484
        %v3585 = vpack.c.b16 %v3487, %v3485
        %v3586 = vpack.c.b16 %v3490, %v3488
        %v3587 = vpack.c.b16 %v3491, %v3489
        %v3588 = vpack.c.b16 %v3494, %v3492
        %v3589 = vpack.c.b16 %v3495, %v3493
        %v3590 = vpack.c.b16 %v3498, %v3496
        %v3591 = vpack.c.b16 %v3499, %v3497
        %v3592 = vpack.c.b16 %v3502, %v3500
        %v3593 = vpack.c.b16 %v3503, %v3501
        %v3594 = vpack.c.b16 %v3506, %v3504
        %v3595 = vpack.c.b16 %v3507, %v3505
        %v3596 = vpack.c.b16 %v3510, %v3508
        %v3597 = vpack.c.b16 %v3511, %v3509
        %v3598 = vpack.c.b16 %v3514, %v3512
        %v3599 = vpack.c.b16 %v3515, %v3513
        %v3600 = vpack.c.b16 %v3518, %v3516
        %v3601 = vpack.c.b16 %v3519, %v3517
        %v3602 = vpack.c.b16 %v3522, %v3520
        %v3603 = vpack.c.b16 %v3523, %v3521
        %v3604 = vpack.c.b16 %v3526, %v3524
        %v3605 = vpack.c.b16 %v3527, %v3525
        %v3606 = vpack.c.b16 %v3530, %v3528
        %v3607 = vpack.c.b16 %v3531, %v3529
        %v3608 = vpack.c.b16 %v3534, %v3532
        %v3609 = vpack.c.b16 %v3535, %v3533
        %v3610 = vpack.c.b16 %v3538, %v3536
        %v3611 = vpack.c.b16 %v3539, %v3537
        %v3612 = vpack.c.b16 %v3542, %v3540
        %v3613 = vpack.c.b16 %v3543, %v3541
        %v3614 = vpack.c.b16 %v3546, %v3544
        %v3615 = vpack.c.b16 %v3547, %v3545
        %v3616 = vpack.c.b16 %v3550, %v3548
        %v3617 = vpack.c.b16 %v3551, %v3549
        %v3618 = vpack.c.b16 %v3554, %v3552
        %v3619 = vpack.c.b16 %v3555, %v3553
        %3684 = vmatprep.subr.bf16.mxu0 %v3557
        %3685 = vmatpush1.bf16.msra.mxu0 %v3556
        %3686 = vmatprep.subr.bf16.mxu0 %v3559
        %3687 = vmatpush1.bf16.msra.mxu0 %v3558
        %3688 = vmatprep.subr.bf16.mxu0 %v3561
        %3689 = vmatpush1.bf16.msra.mxu0 %v3560
        %3690 = vmatprep.subr.bf16.mxu0 %v3563
        %3691 = vmatpush1.bf16.msra.mxu0 %v3562
        %3692 = vmatprep.subr.bf16.mxu0 %v3565
        %3693 = vmatpush1.bf16.msra.mxu0 %v3564
        %3694 = vmatprep.subr.bf16.mxu0 %v3567
        %3695 = vmatpush1.bf16.msra.mxu0 %v3566
        %3696 = vmatprep.subr.bf16.mxu0 %v3569
        %3697 = vmatpush1.bf16.msra.mxu0 %v3568
        %3698 = vmatprep.subr.bf16.mxu0 %v3571
        %3699 = vmatpush1.bf16.msra.mxu0 %v3570
        %3700 = vmatprep.subr.bf16.mxu0 %v3573
        %3701 = vmatpush1.bf16.msra.mxu0 %v3572
        %3702 = vmatprep.subr.bf16.mxu0 %v3575
        %3703 = vmatpush1.bf16.msra.mxu0 %v3574
        %3704 = vmatprep.subr.bf16.mxu0 %v3577
        %3705 = vmatpush1.bf16.msra.mxu0 %v3576
        %3706 = vmatprep.subr.bf16.mxu0 %v3579
        %3707 = vmatpush1.bf16.msra.mxu0 %v3578
        %3708 = vmatprep.subr.bf16.mxu0 %v3581
        %3709 = vmatpush1.bf16.msra.mxu0 %v3580
        %3710 = vmatprep.subr.bf16.mxu0 %v3583
        %3711 = vmatpush1.bf16.msra.mxu0 %v3582
        %3712 = vmatprep.subr.bf16.mxu0 %v3585
        %3713 = vmatpush1.bf16.msra.mxu0 %v3584
        %3714 = vmatprep.subr.bf16.mxu0 %v3587
        %3715 = vmatpush1.bf16.msra.mxu0 %v3586
        %3716 = vmatprep.mubr.bf16.mxu0 %v3285
        %3717 = vmatmul.mubr.bf16.gmra.mrb[0].mxu0 %v3284
        %v3718 = vpop.f32.mrb[0].mxu0
        %v3719 = vadd.f32 %v3357, %v3718
        %v3720 = vpop.f32.mrb[0].mxu0
        %v3721 = vadd.f32 %v3361, %v3720
        %v3722 = vpop.f32.mrb[0].mxu0
        %v3723 = vadd.f32 %v3357, %v3722
        %v3724 = vpop.f32.mrb[0].mxu0
        %v3725 = vadd.f32 %v3361, %v3724
        %3726 = vdwg.mxu0
        %3727 = vmatprep.subr.bf16.mxu0 %v3589
        %3728 = vmatpush1.bf16.msra.mxu0 %v3588
        %3729 = vmatprep.subr.bf16.mxu0 %v3591
        %3730 = vmatpush1.bf16.msra.mxu0 %v3590
        %3731 = vmatprep.subr.bf16.mxu0 %v3593
        %3732 = vmatpush1.bf16.msra.mxu0 %v3592
        %3733 = vmatprep.subr.bf16.mxu0 %v3595
        %3734 = vmatpush1.bf16.msra.mxu0 %v3594
        %3735 = vmatprep.subr.bf16.mxu0 %v3597
        %3736 = vmatpush1.bf16.msra.mxu0 %v3596
        %3737 = vmatprep.subr.bf16.mxu0 %v3599
        %3738 = vmatpush1.bf16.msra.mxu0 %v3598
        %3739 = vmatprep.subr.bf16.mxu0 %v3601
        %3740 = vmatpush1.bf16.msra.mxu0 %v3600
        %3741 = vmatprep.subr.bf16.mxu0 %v3603
        %3742 = vmatpush1.bf16.msra.mxu0 %v3602
        %3743 = vmatprep.subr.bf16.mxu0 %v3605
        %3744 = vmatpush1.bf16.msra.mxu0 %v3604
        %3745 = vmatprep.subr.bf16.mxu0 %v3607
        %3746 = vmatpush1.bf16.msra.mxu0 %v3606
        %3747 = vmatprep.subr.bf16.mxu0 %v3609
        %3748 = vmatpush1.bf16.msra.mxu0 %v3608
        %3749 = vmatprep.subr.bf16.mxu0 %v3611
        %3750 = vmatpush1.bf16.msra.mxu0 %v3610
        %3751 = vmatprep.subr.bf16.mxu0 %v3613
        %3752 = vmatpush1.bf16.msra.mxu0 %v3612
        %3753 = vmatprep.subr.bf16.mxu0 %v3615
        %3754 = vmatpush1.bf16.msra.mxu0 %v3614
        %3755 = vmatprep.subr.bf16.mxu0 %v3617
        %3756 = vmatpush1.bf16.msra.mxu0 %v3616
        %3757 = vmatprep.subr.bf16.mxu0 %v3619
        %3758 = vmatpush1.bf16.msra.mxu0 %v3618
        %3759 = vmatprep.mubr.bf16.mxu0 %v3287
        %3760 = vmatmul.mubr.bf16.gmra.mrb[0].mxu0 %v3286
        %v3761 = vpop.f32.mrb[0].mxu0
        %v3762 = vadd.f32 %v3719, %v3761
        %v3763 = vpop.f32.mrb[0].mxu0
        %v3764 = vadd.f32 %v3721, %v3763
        %v3765 = vpop.f32.mrb[0].mxu0
        %v3766 = vadd.f32 %v3723, %v3765
        %v3767 = vpop.f32.mrb[0].mxu0
        %v3768 = vadd.f32 %v3725, %v3767
        %3769 = vdwg.mxu0
        %3770 = vst [vmem:[%s353] sm:$0xff] %v3762
        %3771 = vst [vmem:[%s353 + $0x8] sm:$0xff] %v3764
        %3772 = vst [vmem:[%s353 + $0x10] sm:$0xff] %v3766
        %3773 = vst [vmem:[%s353 + $0x18] sm:$0xff] %v3768
        %s3774 = sand.u32 %s186, 1
        %s3775 = scalar_lea.sflag [#allocation4], %s3774
        %s3776 = sand.u32 %s186, 1
        %s3777 = smul.addr %s3776, 32
        %s3778 = scalar_lea.vmem [#allocation11], %s3777
        // Predicated region
        $region69: #{_forward_padded.1} parent=47 // pred_check
          %p3779 = pneg %p196
        $region70: #{_forward_padded.1} parent=47 // pred_check_branch
          %3781 = sbr.rel (%p3779) target = $region72
        $region71: #{_forward_padded.1} parent=47 // pred_region
          %s3782 = smul.u32 2, %s26
          %s3784 = ssub.s32 512, 512
          %3785 = vsyncadd %s3775, %s3784
          %s3786 = smul.addr %s3782, 2
          %s3787 = smul.addr %s3786, 128
          %s3788 = scalar_lea.hbm %s7, %s3787
          %s3789 = sshll.u32 %s3778, 4
          %s3790 = int_to_ptr.vmem [resolvable:$true] %s3789
          %3795 = dma.vmem_to_hbm [thread:$0]  %s3790, 512, %s3788, %s3775, 256, 256, 16
        $region72: #{_forward_padded.1} parent=47 // pred_fallthru
          _
      $region48: #{_forward_padded.1} parent=5 // pred_fallthru
        _
      %p3796 = scmp.le.s32.totalorder 2, %s21
      // Predicated region
      $region73: #{_forward_padded.1} parent=5 // pred_check
        %p3797 = pneg %p3796
      $region74: #{_forward_padded.1} parent=5 // pred_check_branch
        %3799 = sbr.rel (%p3797) target = $region76
      $region75: #{_forward_padded.1} parent=5 // pred_region
        %s3800 = ssub.s32 %s21, 2
        // Predicated region
        $region77: #{_forward_padded.1} parent=75 // pred_check
          %p3801 = pneg %p202
        $region78: #{_forward_padded.1} parent=75 // pred_check_branch
          %3803 = sbr.rel (%p3801) target = $region80
        $region79: #{_forward_padded.1} parent=75 // pred_region
          %s3804 = sand.u32 %s187, 1
          %s3805 = scalar_lea.sflag [#allocation4], %s3804
          %s3806 = sand.u32 %s187, 1
          %s3807 = smul.addr %s3806, 32
          %s3808 = scalar_lea.vmem [#allocation11], %s3807
          %3809 = dma.done %s3805, 512
        $region80: #{_forward_padded.1} parent=75 // pred_fallthru
          _
      $region76: #{_forward_padded.1} parent=5 // pred_fallthru
        _
    $region6: #{_forward_padded.1} parent=1 // loop_footer
      %s25 = sadd.s32 1, %s21
    $region7: #{_forward_padded.1} parent=1 // loop_footer_branch
      %20 = sbr.rel target = $region3
    $region8: #{_forward_padded.1} parent=1 // loop_exit
      _
    %3810 = vsyncpa [#allocation3], 1
    %s3811 = scalar_lea.sflag [#allocation3], 1
    %3812 = vsyncpa %s3811, 1
    %3813 = vsyncpa [#allocation6], 1
    %3814 = vsyncpa [#allocation9], 1
    %3815 = vsyncpa [#allocation4], 1
    %s3816 = scalar_lea.sflag [#allocation4], 1
    %3817 = vsyncpa %s3816, 1

</llo_original>
